<compile_context>
chip_gen: v7x
topology: tpu7x:2x2x1
jax: 0.10.0
libtpu: 0.0.40
codegen_flags: <defaults>
</compile_context>

<pallas_src>
import functools

import jax
import jax.numpy as jnp
from jax.experimental import pallas as pl
from jax.experimental.pallas import tpu as pltpu


# 3x3 stride-1 taps (di, dj) and 2x2 taps for the space-to-depth stride-2 path.
TAPS_3x3 = tuple((di, dj) for di in (-1, 0, 1) for dj in (-1, 0, 1))
TAPS_2x2 = tuple((di, dj) for di in (-1, 0) for dj in (-1, 0))


# ---------------------------------------------------------------------------
# Pallas kernels
# ---------------------------------------------------------------------------

def _make_fused_conv_kernel(n_inputs, tap_offsets, halo, eps, slope):
    """Fused conv + InstanceNorm2d(affine=False) + LeakyReLU for one sample.

    refs = (x_0, ..., x_{n-1}, mask, w, out)
      x_i  : (1, Ci, L)  bf16   activation, flat spatial L on lanes
      mask : (T, L)      bf16   0/1 validity of tap t at each output pixel
      w    : (Cout, K)   bf16   K = T * sum(Ci), packed tap-major per input
      out  : (1, Cout, L)
    """
    taps = tuple(int(o) for o in tap_offsets)

    def kernel(*refs):
        x_refs = refs[:n_inputs]
        mask_ref = refs[n_inputs]
        w_ref = refs[n_inputs + 1]
        o_ref = refs[n_inputs + 2]
        L = o_ref.shape[2]

        masks = mask_ref[...]                                   # (T, L) bf16
        slabs = []
        for x_ref in x_refs:
            x = x_ref[0]                                        # (Ci, L) bf16
            ci = x.shape[0]
            zpad = jnp.zeros((ci, halo), x.dtype)
            x_ext = jnp.concatenate([zpad, x, zpad], axis=1)    # in-VMEM halo
            for t, off in enumerate(taps):
                slab = x_ext[:, halo + off: halo + off + L]     # (Ci, L)
                slabs.append(slab * masks[t:t + 1, :])          # exact 0/1 mask
        # In-VMEM "im2col": one K-wide matmul instead of T per-tap MXU pushes.
        k_mat = slabs[0] if len(slabs) == 1 else jnp.concatenate(slabs, axis=0)
        acc = jnp.dot(w_ref[...], k_mat,
                      preferred_element_type=jnp.float32)       # (Cout, L) f32

        # InstanceNorm over the (all-valid) spatial lanes, then LeakyReLU (f32).
        mean = jnp.mean(acc, axis=1, keepdims=True)
        cen = acc - mean
        var = jnp.mean(cen * cen, axis=1, keepdims=True)
        y = cen * jax.lax.rsqrt(var + eps)
        o_ref[0] = jnp.where(y >= 0.0, y, slope * y).astype(o_ref.dtype)

    return kernel


def fused_conv_in_lrelu(xs, w_pack, masks, tap_offsets, halo, cout, *,
                        eps=1e-5, slope=0.01, out_dtype=jnp.bfloat16):
    """Conv (taps given) + InstanceNorm + LeakyReLU, fully fused, per sample.

    xs       : list of (N, Ci, L) bf16 activations (same N, L; decoder passes
               [up, skip] here so the channel-concat never hits HBM).
    w_pack   : (cout, T * sum(Ci)) bf16
    masks    : (T, L) bf16
    returns  : (N, cout, L)
    """
    n_inputs = len(xs)
    N, _, L = xs[0].shape
    assert all(int(x.shape[0]) == N and int(x.shape[2]) == L for x in xs)
    T = int(masks.shape[0])
    K = int(w_pack.shape[1])
    assert K == T * sum(int(x.shape[1]) for x in xs), (K, T, [x.shape for x in xs])

    kernel = _make_fused_conv_kernel(n_inputs, tap_offsets, halo, eps, slope)

    in_specs = ([pl.BlockSpec((1, int(x.shape[1]), L), lambda n: (n, 0, 0))
                 for x in xs]
                + [pl.BlockSpec((T, L), lambda n: (0, 0)),
                   pl.BlockSpec((cout, K), lambda n: (0, 0))])

    out_isize = 2 if out_dtype == jnp.bfloat16 else 4
    flops = 2 * N * cout * K * L + 8 * N * cout * L
    bytes_accessed = (sum(N * int(x.shape[1]) * L * 2 for x in xs)
                      + T * L * 2 + cout * K * 2 + N * cout * L * out_isize)

    return pl.pallas_call(
        kernel,
        out_shape=jax.ShapeDtypeStruct((N, cout, L), out_dtype),
        grid=(N,),
        in_specs=in_specs,
        out_specs=pl.BlockSpec((1, cout, L), lambda n: (n, 0, 0)),
        compiler_params=pltpu.CompilerParams(dimension_semantics=("parallel",)),
        cost_estimate=pl.CostEstimate(flops=int(flops),
                                      transcendentals=int(N * cout),
                                      bytes_accessed=int(bytes_accessed)),
    )(*xs, masks, w_pack)


def _chan_matmul_kernel(x_ref, w_ref, o_ref):
    o_ref[0] = jnp.dot(w_ref[...], x_ref[0],
                       preferred_element_type=jnp.float32).astype(o_ref.dtype)


def _chan_matmul_bias_kernel(x_ref, w_ref, b_ref, o_ref):
    acc = jnp.dot(w_ref[...], x_ref[0], preferred_element_type=jnp.float32)
    o_ref[0] = (acc + b_ref[...]).astype(o_ref.dtype)


def chan_matmul(x, w, bias=None, *, out_dtype=jnp.bfloat16):
    """Per-sample channel matmul: out[n] = w @ x[n] (+ bias).

    x: (N, Cin, L), w: (Mo, Cin), bias: (Mo, 1) f32.  Output (N, Mo, L) is
    lane-dense (L minor); no host-side M-tail padding needed.
    """
    N, Cin, L = (int(s) for s in x.shape)
    Mo = int(w.shape[0])
    in_specs = [pl.BlockSpec((1, Cin, L), lambda n: (n, 0, 0)),
                pl.BlockSpec((Mo, Cin), lambda n: (0, 0))]
    args = [x, w]
    kernel = _chan_matmul_kernel
    if bias is not None:
        in_specs.append(pl.BlockSpec((Mo, 1), lambda n: (0, 0)))
        args.append(bias)
        kernel = _chan_matmul_bias_kernel

    out_isize = 2 if out_dtype == jnp.bfloat16 else 4
    return pl.pallas_call(
        kernel,
        out_shape=jax.ShapeDtypeStruct((N, Mo, L), out_dtype),
        grid=(N,),
        in_specs=in_specs,
        out_specs=pl.BlockSpec((1, Mo, L), lambda n: (n, 0, 0)),
        compiler_params=pltpu.CompilerParams(dimension_semantics=("parallel",)),
        cost_estimate=pl.CostEstimate(
            flops=int(2 * N * Mo * Cin * L), transcendentals=0,
            bytes_accessed=int(N * Cin * L * 2 + Mo * Cin * 2
                               + (Mo * 4 if bias is not None else 0)
                               + N * Mo * L * out_isize)),
    )(*args)


# ---------------------------------------------------------------------------
# Geometry helpers & layer wrappers (channel-then-spatial layout end-to-end)
# ---------------------------------------------------------------------------

def _conv_geom(h, w, taps):
    """Flat-lane tap offsets, halo width, and per-tap boundary masks."""
    L = h * w
    offs = tuple(di * w + dj for (di, dj) in taps)
    halo = max(abs(o) for o in offs)
    rr = jnp.arange(L, dtype=jnp.int32) // w
    cc = jnp.arange(L, dtype=jnp.int32) % w
    ms = [((rr + di >= 0) & (rr + di < h) & (cc + dj >= 0) & (cc + dj < w)
           ).astype(jnp.bfloat16) for (di, dj) in taps]
    return offs, halo, jnp.stack(ms, axis=0)                    # (T, L)


def _space_to_depth2(x, h, w):
    """(N, C, h*w) -> (N, 4C, (h/2)*(w/2)); channel index = (p*2+q)*C + c."""
    N, C, _ = x.shape
    xs = x.reshape(N, C, h // 2, 2, w // 2, 2)
    xs = xs.transpose(0, 3, 5, 1, 2, 4)                          # (N,p,q,C,h/2,w/2)
    return xs.reshape(N, 4 * C, (h // 2) * (w // 2))


def conv_transpose(x, wt_pack, cout, s, h, w):
    """ConvTranspose2d(k=s, stride=s, bias=False): channel matmul + pixel shuffle."""
    N = x.shape[0]
    y = chan_matmul(x, wt_pack)                                  # (N, s*s*cout, h*w)
    y = y.reshape(N, s, s, cout, h, w).transpose(0, 3, 4, 1, 5, 2)
    return y.reshape(N, cout, (h * s) * (w * s))


# ---------------------------------------------------------------------------
# Parameters (PyTorch layouts pre-packed into the kernels' matmul layouts)
# ---------------------------------------------------------------------------

class _KeyGen:
    def __init__(self, seed):
        self.key = jax.random.PRNGKey(seed)

    def __call__(self):
        self.key, sub = jax.random.split(self.key)
        return sub


def _round_up(v, m):
    return ((v + m - 1) // m) * m


def _pack_conv_s1(w, cin_slices, taps):
    """PyTorch (Cout, Cin_total, 3, 3) -> (Cout, T*sum(sizes)), input-major,
    tap-next, cin-minor -- matches the kernel's slab stacking order."""
    blocks = []
    for (start, size) in cin_slices:
        for (di, dj) in taps:
            blocks.append(w[:, start:start + size, di + 1, dj + 1])
    return jnp.concatenate(blocks, axis=1).astype(jnp.bfloat16)


def _pack_conv_s2(w, cin, taps2):
    """Stride-2 3x3 conv rewritten as a 2x2 conv over space-to-depth(2) input.
    s2d channel (p, q, c) -> original kernel tap (i, j) = (2*(dI+1)+p-1, ...)."""
    cout = w.shape[0]
    blocks = []
    for (dI, dJ) in taps2:
        blk = jnp.zeros((cout, 4 * cin), jnp.float32)
        for p in range(2):
            for q in range(2):
                i = 2 * (dI + 1) + p - 1
                j = 2 * (dJ + 1) + q - 1
                if 0 <= i < 3 and 0 <= j < 3:
                    blk = blk.at[:, (p * 2 + q) * cin:(p * 2 + q + 1) * cin
                                 ].set(w[:, :, i, j])
        blocks.append(blk)
    return jnp.concatenate(blocks, axis=1).astype(jnp.bfloat16)


def _pack_convT(wt, s):
    """PyTorch ConvTranspose2d (Cin, Cout, s, s) -> (s*s*Cout, Cin),
    row index = (di*s + dj)*Cout + co."""
    cin, cout = int(wt.shape[0]), int(wt.shape[1])
    return jnp.transpose(wt, (2, 3, 1, 0)).reshape(s * s * cout, cin
                                                   ).astype(jnp.bfloat16)


def make_unet_params(input_channels, num_classes, num_features_per_stage, strides,
                     num_conv_enc, num_conv_dec, kernel_size=3, seed=0):
    assert kernel_size == 3
    kg = _KeyGen(seed)
    num_stages = len(num_features_per_stage)
    cin_pad = _round_up(input_channels, 8)      # sublane-align the first conv's K
    params = {"cin_pad": cin_pad, "enc": [], "dec": []}

    # Encoder
    cin = cin_pad
    for s in range(num_stages):
        cout = num_features_per_stage[s]
        stage = []
        for c in range(num_conv_enc):
            stride = strides[s] if c == 0 else 1
            ci = cin if c == 0 else cout
            ci_raw = input_channels if (s == 0 and c == 0) else ci
            w = 0.1 * jax.random.normal(kg(), (cout, ci_raw, 3, 3), jnp.float32)
            if ci_raw != ci:
                w = jnp.pad(w, ((0, 0), (0, ci - ci_raw), (0, 0), (0, 0)))
            if stride == 1:
                stage.append({"kind": "s1", "cout": cout,
                              "w": _pack_conv_s1(w, [(0, ci)], TAPS_3x3)})
            elif stride == 2:
                stage.append({"kind": "s2", "cout": cout,
                              "w": _pack_conv_s2(w, ci, TAPS_2x2)})
            else:
                # TODO(synk): strides > 2 would need a generalized space-to-depth.
                raise NotImplementedError("only conv strides 1 and 2 supported")
        params["enc"].append(stage)
        cin = cout

    # Decoder
    for i in range(1, num_stages):
        feat_below = num_features_per_stage[-i]
        feat_skip = num_features_per_stage[-(i + 1)]
        st = strides[-i]
        wt = 0.1 * jax.random.normal(kg(), (feat_below, feat_skip, st, st),
                                     jnp.float32)
        convs = []
        for c in range(num_conv_dec):
            if c == 0:
                w = 0.1 * jax.random.normal(kg(), (feat_skip, 2 * feat_skip, 3, 3),
                                            jnp.float32)
                # first decoder conv takes (up, skip) as two fused-kernel inputs
                convs.append(_pack_conv_s1(w, [(0, feat_skip),
                                               (feat_skip, feat_skip)], TAPS_3x3))
            else:
                w = 0.1 * jax.random.normal(kg(), (feat_skip, feat_skip, 3, 3),
                                            jnp.float32)
                convs.append(_pack_conv_s1(w, [(0, feat_skip)], TAPS_3x3))
        params["dec"].append({"wt": _pack_convT(wt, st), "s": st,
                              "feat": feat_skip, "convs": convs})

    # Segmentation head (deep_supervision=False -> only the last one is used).
    feat_last = num_features_per_stage[0]
    seg_w = (0.1 * jax.random.normal(kg(), (num_classes, feat_last, 1, 1),
                                     jnp.float32)
             ).reshape(num_classes, feat_last).astype(jnp.bfloat16)
    seg_b = 0.1 * jax.random.normal(kg(), (num_classes, 1), jnp.float32)
    params["seg"] = (seg_w, seg_b)
    return params


# ---------------------------------------------------------------------------
# UNet forward (deep_supervision=False)
# ---------------------------------------------------------------------------

def unet_forward(x, params):
    """x: [N, Cin, H, W] f32 (NCHW) -> [N, num_classes, H, W] f32."""
    N, C0, H, W = x.shape
    cin_pad = params["cin_pad"]
    h = x.reshape(N, C0, H * W).astype(jnp.bfloat16)      # NCHW is already C-then-L
    if cin_pad > C0:
        h = jnp.pad(h, ((0, 0), (0, cin_pad - C0), (0, 0)))

    # Encoder (return_skips=True)
    skips = []
    ch, cw = H, W
    for stage in params["enc"]:
        for layer in stage:
            if layer["kind"] == "s2":
                assert ch % 2 == 0 and cw % 2 == 0, \
                    "stride-2 path requires even spatial dims"
                xs = _space_to_depth2(h, ch, cw)
                ch, cw = ch // 2, cw // 2
                offs, halo, masks = _conv_geom(ch, cw, TAPS_2x2)
                h = fused_conv_in_lrelu([xs], layer["w"], masks, offs, halo,
                                        layer["cout"])
            else:
                offs, halo, masks = _conv_geom(ch, cw, TAPS_3x3)
                h = fused_conv_in_lrelu([h], layer["w"], masks, offs, halo,
                                        layer["cout"])
        skips.append((h, ch, cw))

    # Decoder (skip-concat fused into the first conv of each stage)
    low, lh, lw = skips[-1]
    for i, dec in enumerate(params["dec"]):
        skip, sh, sw = skips[-(i + 2)]
        up = conv_transpose(low, dec["wt"], dec["feat"], dec["s"], lh, lw)
        offs, halo, masks = _conv_geom(sh, sw, TAPS_3x3)
        hcur = fused_conv_in_lrelu([up, skip], dec["convs"][0], masks, offs, halo,
                                   dec["feat"])
        for wpk in dec["convs"][1:]:
            hcur = fused_conv_in_lrelu([hcur], wpk, masks, offs, halo, dec["feat"])
        low, lh, lw = hcur, sh, sw

    # deep_supervision=False -> only the last stage's seg layer is used.
    seg_w, seg_b = params["seg"]
    y = chan_matmul(low, seg_w, seg_b, out_dtype=jnp.float32)    # (N, nc, H*W)
    return y.reshape(N, seg_w.shape[0], H, W)


# ---------------------------------------------------------------------------
# Main
# ---------------------------------------------------------------------------

if __name__ == "__main__":
    # Small UNet: 3 stages, features [8, 16, 32], strides [1, 2, 2],
    # 2 convs per encoder/decoder stage, kernel 3x3, num_classes=3.
    input_channels = 4
    num_classes = 3
    num_features_per_stage = [8, 16, 32]
    strides = [1, 2, 2]

    params = make_unet_params(
        input_channels=input_channels,
        num_classes=num_classes,
        num_features_per_stage=num_features_per_stage,
        strides=strides,
        num_conv_enc=2,
        num_conv_dec=2,
        kernel_size=3,
        seed=0,
    )

    x = jax.random.normal(jax.random.PRNGKey(0),
                          (2, input_channels, 16, 16), jnp.float32)

    fwd = jax.jit(lambda xx: unet_forward(xx, params))
    out = fwd(x)
    jax.block_until_ready(out)

    assert out.shape == (2, num_classes, 16, 16), out.shape
    assert out.dtype == jnp.float32
    assert bool(jnp.all(jnp.isfinite(out)))
    print("KERNEL_OK")
</pallas_src>

<mosaic_0001>
module attributes {stable_mosaic.version = 11 : i64} {
  func.func @kernel(%arg0: i32, %arg1: memref<1x8x256xbf16, #tpu.memory_space<vmem>>, %arg2: memref<9x256xbf16, #tpu.memory_space<vmem>>, %arg3: memref<8x72xbf16, #tpu.memory_space<vmem>>, %arg4: memref<1x8x256xbf16, #tpu.memory_space<vmem>>) attributes {dimension_semantics = [#tpu.dimension_semantics<parallel>], iteration_bounds = array<i64: 2>, scalar_prefetch = 0 : i64, scratch_operands = 0 : i64, tpu.core_type = #tpu.core_type<tc>, window_params = [{transform_indices = @transform_0, window_bounds = array<i64: 1, 8, 256>}, {pipeline_mode = #tpu.pipeline_mode<synchronous>, transform_indices = @transform_1, window_bounds = array<i64: 9, 256>}, {pipeline_mode = #tpu.pipeline_mode<synchronous>, transform_indices = @transform_2, window_bounds = array<i64: 8, 72>}, {transform_indices = @transform_3, window_bounds = array<i64: 1, 8, 256>}]} {
    %c0 = arith.constant 0 : index
    %c0_0 = arith.constant 0 : index
    %0 = vector.load %arg2[%c0, %c0_0] : memref<9x256xbf16, #tpu.memory_space<vmem>>, vector<9x256xbf16>
    %c0_1 = arith.constant 0 : index
    %c0_2 = arith.constant 0 : index
    %c0_3 = arith.constant 0 : index
    %1 = vector.load %arg1[%c0_1, %c0_2, %c0_3] : memref<1x8x256xbf16, #tpu.memory_space<vmem>>, vector<1x8x256xbf16>
    %2 = vector.shape_cast %1 : vector<1x8x256xbf16> to vector<8x256xbf16>
    %cst = arith.constant 0.000000e+00 : bf16
    %3 = vector.broadcast %cst : bf16 to vector<8x17xbf16>
    %4 = tpu.concatenate %3, %2, %3 in 1 : vector<8x17xbf16>, vector<8x256xbf16>, vector<8x17xbf16> -> vector<8x290xbf16>
    %5 = vector.extract_strided_slice %4 {offsets = [0, 0], sizes = [8, 256], strides = [1, 1]} : vector<8x290xbf16> to vector<8x256xbf16>
    %6 = vector.extract_strided_slice %0 {offsets = [0, 0], sizes = [1, 256], strides = [1, 1]} : vector<9x256xbf16> to vector<1x256xbf16>
    %7 = vector.broadcast %6 : vector<1x256xbf16> to vector<8x256xbf16>
    %8 = arith.mulf %5, %7 : vector<8x256xbf16>
    %9 = vector.extract_strided_slice %4 {offsets = [0, 1], sizes = [8, 256], strides = [1, 1]} : vector<8x290xbf16> to vector<8x256xbf16>
    %10 = vector.extract_strided_slice %0 {offsets = [1, 0], sizes = [1, 256], strides = [1, 1]} : vector<9x256xbf16> to vector<1x256xbf16>
    %11 = vector.broadcast %10 : vector<1x256xbf16> to vector<8x256xbf16>
    %12 = arith.mulf %9, %11 : vector<8x256xbf16>
    %13 = vector.extract_strided_slice %4 {offsets = [0, 2], sizes = [8, 256], strides = [1, 1]} : vector<8x290xbf16> to vector<8x256xbf16>
    %14 = vector.extract_strided_slice %0 {offsets = [2, 0], sizes = [1, 256], strides = [1, 1]} : vector<9x256xbf16> to vector<1x256xbf16>
    %15 = vector.broadcast %14 : vector<1x256xbf16> to vector<8x256xbf16>
    %16 = arith.mulf %13, %15 : vector<8x256xbf16>
    %17 = vector.extract_strided_slice %4 {offsets = [0, 16], sizes = [8, 256], strides = [1, 1]} : vector<8x290xbf16> to vector<8x256xbf16>
    %18 = vector.extract_strided_slice %0 {offsets = [3, 0], sizes = [1, 256], strides = [1, 1]} : vector<9x256xbf16> to vector<1x256xbf16>
    %19 = vector.broadcast %18 : vector<1x256xbf16> to vector<8x256xbf16>
    %20 = arith.mulf %17, %19 : vector<8x256xbf16>
    %21 = vector.extract_strided_slice %4 {offsets = [0, 17], sizes = [8, 256], strides = [1, 1]} : vector<8x290xbf16> to vector<8x256xbf16>
    %22 = vector.extract_strided_slice %0 {offsets = [4, 0], sizes = [1, 256], strides = [1, 1]} : vector<9x256xbf16> to vector<1x256xbf16>
    %23 = vector.broadcast %22 : vector<1x256xbf16> to vector<8x256xbf16>
    %24 = arith.mulf %21, %23 : vector<8x256xbf16>
    %25 = vector.extract_strided_slice %4 {offsets = [0, 18], sizes = [8, 256], strides = [1, 1]} : vector<8x290xbf16> to vector<8x256xbf16>
    %26 = vector.extract_strided_slice %0 {offsets = [5, 0], sizes = [1, 256], strides = [1, 1]} : vector<9x256xbf16> to vector<1x256xbf16>
    %27 = vector.broadcast %26 : vector<1x256xbf16> to vector<8x256xbf16>
    %28 = arith.mulf %25, %27 : vector<8x256xbf16>
    %29 = vector.extract_strided_slice %4 {offsets = [0, 32], sizes = [8, 256], strides = [1, 1]} : vector<8x290xbf16> to vector<8x256xbf16>
    %30 = vector.extract_strided_slice %0 {offsets = [6, 0], sizes = [1, 256], strides = [1, 1]} : vector<9x256xbf16> to vector<1x256xbf16>
    %31 = vector.broadcast %30 : vector<1x256xbf16> to vector<8x256xbf16>
    %32 = arith.mulf %29, %31 : vector<8x256xbf16>
    %33 = vector.extract_strided_slice %4 {offsets = [0, 33], sizes = [8, 256], strides = [1, 1]} : vector<8x290xbf16> to vector<8x256xbf16>
    %34 = vector.extract_strided_slice %0 {offsets = [7, 0], sizes = [1, 256], strides = [1, 1]} : vector<9x256xbf16> to vector<1x256xbf16>
    %35 = vector.broadcast %34 : vector<1x256xbf16> to vector<8x256xbf16>
    %36 = arith.mulf %33, %35 : vector<8x256xbf16>
    %37 = vector.extract_strided_slice %4 {offsets = [0, 34], sizes = [8, 256], strides = [1, 1]} : vector<8x290xbf16> to vector<8x256xbf16>
    %38 = vector.extract_strided_slice %0 {offsets = [8, 0], sizes = [1, 256], strides = [1, 1]} : vector<9x256xbf16> to vector<1x256xbf16>
    %39 = vector.broadcast %38 : vector<1x256xbf16> to vector<8x256xbf16>
    %40 = arith.mulf %37, %39 : vector<8x256xbf16>
    %41 = tpu.concatenate %8, %12, %16, %20, %24, %28, %32, %36, %40 in 0 : vector<8x256xbf16>, vector<8x256xbf16>, vector<8x256xbf16>, vector<8x256xbf16>, vector<8x256xbf16>, vector<8x256xbf16>, vector<8x256xbf16>, vector<8x256xbf16>, vector<8x256xbf16> -> vector<72x256xbf16>
    %c0_4 = arith.constant 0 : index
    %c0_5 = arith.constant 0 : index
    %42 = vector.load %arg3[%c0_4, %c0_5] : memref<8x72xbf16, #tpu.memory_space<vmem>>, vector<8x72xbf16>
    %cst_6 = arith.constant dense<0.000000e+00> : vector<8x256xf32>
    %43 = tpu.matmul %42, %41, %cst_6 {dimension_numbers = #tpu.dot_dimension_numbers<[1], [0], [0], [1], [0, 0, 1, 1], [], []>} : vector<8x72xbf16>, vector<72x256xbf16>, vector<8x256xf32> -> vector<8x256xf32>
    %cst_7 = arith.constant dense<0.000000e+00> : vector<8xf32>
    %44 = vector.multi_reduction <add>, %43, %cst_7 [1] : vector<8x256xf32> to vector<8xf32>
    %45 = vector.shape_cast %44 : vector<8xf32> to vector<8x1xf32>
    %cst_8 = arith.constant 2.560000e+02 : f32
    %46 = vector.broadcast %cst_8 : f32 to vector<8x1xf32>
    %47 = arith.divf %45, %46 : vector<8x1xf32>
    %48 = vector.broadcast %47 : vector<8x1xf32> to vector<8x256xf32>
    %49 = arith.subf %43, %48 : vector<8x256xf32>
    %50 = arith.mulf %49, %49 : vector<8x256xf32>
    %cst_9 = arith.constant dense<0.000000e+00> : vector<8xf32>
    %51 = vector.multi_reduction <add>, %50, %cst_9 [1] : vector<8x256xf32> to vector<8xf32>
    %52 = vector.shape_cast %51 : vector<8xf32> to vector<8x1xf32>
    %cst_10 = arith.constant 2.560000e+02 : f32
    %53 = vector.broadcast %cst_10 : f32 to vector<8x1xf32>
    %54 = arith.divf %52, %53 : vector<8x1xf32>
    %cst_11 = arith.constant 9.99999974E-6 : f32
    %55 = vector.broadcast %cst_11 : f32 to vector<8x1xf32>
    %56 = arith.addf %54, %55 : vector<8x1xf32>
    %57 = math.rsqrt %56 : vector<8x1xf32>
    %58 = vector.broadcast %57 : vector<8x1xf32> to vector<8x256xf32>
    %59 = arith.mulf %49, %58 : vector<8x256xf32>
    %cst_12 = arith.constant 0.000000e+00 : f32
    %60 = vector.broadcast %cst_12 : f32 to vector<8x256xf32>
    %61 = arith.cmpf oge, %59, %60 : vector<8x256xf32>
    %cst_13 = arith.constant 0.00999999977 : f32
    %62 = vector.broadcast %cst_13 : f32 to vector<8x256xf32>
    %63 = arith.mulf %62, %59 : vector<8x256xf32>
    %64 = arith.select %61, %59, %63 : vector<8x256xi1>, vector<8x256xf32>
    %65 = arith.truncf %64 : vector<8x256xf32> to vector<8x256xbf16>
    %c0_14 = arith.constant 0 : index
    %c0_15 = arith.constant 0 : index
    %c0_16 = arith.constant 0 : index
    %66 = vector.load %arg4[%c0_14, %c0_15, %c0_16] : memref<1x8x256xbf16, #tpu.memory_space<vmem>>, vector<1x8x256xbf16>
    %67 = vector.shape_cast %66 : vector<1x8x256xbf16> to vector<8x256xbf16>
    %68 = vector.shape_cast %65 : vector<8x256xbf16> to vector<1x8x256xbf16>
    tpu.vector_store %arg4[%c0_14, %c0_15, %c0_16], %68 {strides = array<i32>} : memref<1x8x256xbf16, #tpu.memory_space<vmem>>, vector<1x8x256xbf16>,
    return
  }
  func.func @transform_0(%arg0: i32) -> (i32, i32, i32) {
    %c0_i32 = arith.constant 0 : i32
    %c0_i32_0 = arith.constant 0 : i32
    %c0_i32_1 = arith.constant 0 : i32
    return %arg0, %c0_i32, %c0_i32_0 : i32, i32, i32
  }
  func.func @transform_1(%arg0: i32) -> (i32, i32) {
    %c0_i32 = arith.constant 0 : i32
    %c0_i32_0 = arith.constant 0 : i32
    %c0_i32_1 = arith.constant 0 : i32
    return %c0_i32, %c0_i32_0 : i32, i32
  }
  func.func @transform_2(%arg0: i32) -> (i32, i32) {
    %c0_i32 = arith.constant 0 : i32
    %c0_i32_0 = arith.constant 0 : i32
    %c0_i32_1 = arith.constant 0 : i32
    return %c0_i32, %c0_i32_0 : i32, i32
  }
  func.func @transform_3(%arg0: i32) -> (i32, i32, i32) {
    %c0_i32 = arith.constant 0 : i32
    %c0_i32_0 = arith.constant 0 : i32
    %c0_i32_1 = arith.constant 0 : i32
    return %arg0, %c0_i32, %c0_i32_0 : i32, i32, i32
  }
}

module attributes {stable_mosaic.version = 11 : i64} {
  func.func @kernel(%arg0: i32, %arg1: memref<1x32x64xbf16, #tpu.memory_space<vmem>>, %arg2: memref<4x64xbf16, #tpu.memory_space<vmem>>, %arg3: memref<16x128xbf16, #tpu.memory_space<vmem>>, %arg4: memref<1x16x64xbf16, #tpu.memory_space<vmem>>) attributes {dimension_semantics = [#tpu.dimension_semantics<parallel>], iteration_bounds = array<i64: 2>, scalar_prefetch = 0 : i64, scratch_operands = 0 : i64, tpu.core_type = #tpu.core_type<tc>, window_params = [{transform_indices = @transform_0, window_bounds = array<i64: 1, 32, 64>}, {pipeline_mode = #tpu.pipeline_mode<synchronous>, transform_indices = @transform_1, window_bounds = array<i64: 4, 64>}, {pipeline_mode = #tpu.pipeline_mode<synchronous>, transform_indices = @transform_2, window_bounds = array<i64: 16, 128>}, {transform_indices = @transform_3, window_bounds = array<i64: 1, 16, 64>}]} {
    %c0 = arith.constant 0 : index
    %c0_0 = arith.constant 0 : index
    %0 = vector.load %arg2[%c0, %c0_0] : memref<4x64xbf16, #tpu.memory_space<vmem>>, vector<4x64xbf16>
    %c0_1 = arith.constant 0 : index
    %c0_2 = arith.constant 0 : index
    %c0_3 = arith.constant 0 : index
    %1 = vector.load %arg1[%c0_1, %c0_2, %c0_3] : memref<1x32x64xbf16, #tpu.memory_space<vmem>>, vector<1x32x64xbf16>
    %2 = vector.shape_cast %1 : vector<1x32x64xbf16> to vector<32x64xbf16>
    %cst = arith.constant 0.000000e+00 : bf16
    %3 = vector.broadcast %cst : bf16 to vector<32x9xbf16>
    %4 = tpu.concatenate %3, %2, %3 in 1 : vector<32x9xbf16>, vector<32x64xbf16>, vector<32x9xbf16> -> vector<32x82xbf16>
    %5 = vector.extract_strided_slice %4 {offsets = [0, 0], sizes = [32, 64], strides = [1, 1]} : vector<32x82xbf16> to vector<32x64xbf16>
    %6 = vector.extract_strided_slice %0 {offsets = [0, 0], sizes = [1, 64], strides = [1, 1]} : vector<4x64xbf16> to vector<1x64xbf16>
    %7 = vector.broadcast %6 : vector<1x64xbf16> to vector<32x64xbf16>
    %8 = arith.mulf %5, %7 : vector<32x64xbf16>
    %9 = vector.extract_strided_slice %4 {offsets = [0, 1], sizes = [32, 64], strides = [1, 1]} : vector<32x82xbf16> to vector<32x64xbf16>
    %10 = vector.extract_strided_slice %0 {offsets = [1, 0], sizes = [1, 64], strides = [1, 1]} : vector<4x64xbf16> to vector<1x64xbf16>
    %11 = vector.broadcast %10 : vector<1x64xbf16> to vector<32x64xbf16>
    %12 = arith.mulf %9, %11 : vector<32x64xbf16>
    %13 = vector.extract_strided_slice %4 {offsets = [0, 8], sizes = [32, 64], strides = [1, 1]} : vector<32x82xbf16> to vector<32x64xbf16>
    %14 = vector.extract_strided_slice %0 {offsets = [2, 0], sizes = [1, 64], strides = [1, 1]} : vector<4x64xbf16> to vector<1x64xbf16>
    %15 = vector.broadcast %14 : vector<1x64xbf16> to vector<32x64xbf16>
    %16 = arith.mulf %13, %15 : vector<32x64xbf16>
    %17 = vector.extract_strided_slice %4 {offsets = [0, 9], sizes = [32, 64], strides = [1, 1]} : vector<32x82xbf16> to vector<32x64xbf16>
    %18 = vector.extract_strided_slice %0 {offsets = [3, 0], sizes = [1, 64], strides = [1, 1]} : vector<4x64xbf16> to vector<1x64xbf16>
    %19 = vector.broadcast %18 : vector<1x64xbf16> to vector<32x64xbf16>
    %20 = arith.mulf %17, %19 : vector<32x64xbf16>
    %21 = tpu.concatenate %8, %12, %16, %20 in 0 : vector<32x64xbf16>, vector<32x64xbf16>, vector<32x64xbf16>, vector<32x64xbf16> -> vector<128x64xbf16>
    %c0_4 = arith.constant 0 : index
    %c0_5 = arith.constant 0 : index
    %22 = vector.load %arg3[%c0_4, %c0_5] : memref<16x128xbf16, #tpu.memory_space<vmem>>, vector<16x128xbf16>
    %cst_6 = arith.constant dense<0.000000e+00> : vector<16x64xf32>
    %23 = tpu.matmul %22, %21, %cst_6 {dimension_numbers = #tpu.dot_dimension_numbers<[1], [0], [0], [1], [0, 0, 1, 1], [], []>} : vector<16x128xbf16>, vector<128x64xbf16>, vector<16x64xf32> -> vector<16x64xf32>
    %cst_7 = arith.constant dense<0.000000e+00> : vector<16xf32>
    %24 = vector.multi_reduction <add>, %23, %cst_7 [1] : vector<16x64xf32> to vector<16xf32>
    %25 = vector.shape_cast %24 : vector<16xf32> to vector<16x1xf32>
    %cst_8 = arith.constant 6.400000e+01 : f32
    %26 = vector.broadcast %cst_8 : f32 to vector<16x1xf32>
    %27 = arith.divf %25, %26 : vector<16x1xf32>
    %28 = vector.broadcast %27 : vector<16x1xf32> to vector<16x64xf32>
    %29 = arith.subf %23, %28 : vector<16x64xf32>
    %30 = arith.mulf %29, %29 : vector<16x64xf32>
    %cst_9 = arith.constant dense<0.000000e+00> : vector<16xf32>
    %31 = vector.multi_reduction <add>, %30, %cst_9 [1] : vector<16x64xf32> to vector<16xf32>
    %32 = vector.shape_cast %31 : vector<16xf32> to vector<16x1xf32>
    %cst_10 = arith.constant 6.400000e+01 : f32
    %33 = vector.broadcast %cst_10 : f32 to vector<16x1xf32>
    %34 = arith.divf %32, %33 : vector<16x1xf32>
    %cst_11 = arith.constant 9.99999974E-6 : f32
    %35 = vector.broadcast %cst_11 : f32 to vector<16x1xf32>
    %36 = arith.addf %34, %35 : vector<16x1xf32>
    %37 = math.rsqrt %36 : vector<16x1xf32>
    %38 = vector.broadcast %37 : vector<16x1xf32> to vector<16x64xf32>
    %39 = arith.mulf %29, %38 : vector<16x64xf32>
    %cst_12 = arith.constant 0.000000e+00 : f32
    %40 = vector.broadcast %cst_12 : f32 to vector<16x64xf32>
    %41 = arith.cmpf oge, %39, %40 : vector<16x64xf32>
    %cst_13 = arith.constant 0.00999999977 : f32
    %42 = vector.broadcast %cst_13 : f32 to vector<16x64xf32>
    %43 = arith.mulf %42, %39 : vector<16x64xf32>
    %44 = arith.select %41, %39, %43 : vector<16x64xi1>, vector<16x64xf32>
    %45 = arith.truncf %44 : vector<16x64xf32> to vector<16x64xbf16>
    %c0_14 = arith.constant 0 : index
    %c0_15 = arith.constant 0 : index
    %c0_16 = arith.constant 0 : index
    %46 = vector.load %arg4[%c0_14, %c0_15, %c0_16] : memref<1x16x64xbf16, #tpu.memory_space<vmem>>, vector<1x16x64xbf16>
    %47 = vector.shape_cast %46 : vector<1x16x64xbf16> to vector<16x64xbf16>
    %48 = vector.shape_cast %45 : vector<16x64xbf16> to vector<1x16x64xbf16>
    tpu.vector_store %arg4[%c0_14, %c0_15, %c0_16], %48 {strides = array<i32>} : memref<1x16x64xbf16, #tpu.memory_space<vmem>>, vector<1x16x64xbf16>,
    return
  }
  func.func @transform_0(%arg0: i32) -> (i32, i32, i32) {
    %c0_i32 = arith.constant 0 : i32
    %c0_i32_0 = arith.constant 0 : i32
    %c0_i32_1 = arith.constant 0 : i32
    return %arg0, %c0_i32, %c0_i32_0 : i32, i32, i32
  }
  func.func @transform_1(%arg0: i32) -> (i32, i32) {
    %c0_i32 = arith.constant 0 : i32
    %c0_i32_0 = arith.constant 0 : i32
    %c0_i32_1 = arith.constant 0 : i32
    return %c0_i32, %c0_i32_0 : i32, i32
  }
  func.func @transform_2(%arg0: i32) -> (i32, i32) {
    %c0_i32 = arith.constant 0 : i32
    %c0_i32_0 = arith.constant 0 : i32
    %c0_i32_1 = arith.constant 0 : i32
    return %c0_i32, %c0_i32_0 : i32, i32
  }
  func.func @transform_3(%arg0: i32) -> (i32, i32, i32) {
    %c0_i32 = arith.constant 0 : i32
    %c0_i32_0 = arith.constant 0 : i32
    %c0_i32_1 = arith.constant 0 : i32
    return %arg0, %c0_i32, %c0_i32_0 : i32, i32, i32
  }
}

module attributes {stable_mosaic.version = 11 : i64} {
  func.func @kernel(%arg0: i32, %arg1: memref<1x16x64xbf16, #tpu.memory_space<vmem>>, %arg2: memref<9x64xbf16, #tpu.memory_space<vmem>>, %arg3: memref<16x144xbf16, #tpu.memory_space<vmem>>, %arg4: memref<1x16x64xbf16, #tpu.memory_space<vmem>>) attributes {dimension_semantics = [#tpu.dimension_semantics<parallel>], iteration_bounds = array<i64: 2>, scalar_prefetch = 0 : i64, scratch_operands = 0 : i64, tpu.core_type = #tpu.core_type<tc>, window_params = [{transform_indices = @transform_0, window_bounds = array<i64: 1, 16, 64>}, {pipeline_mode = #tpu.pipeline_mode<synchronous>, transform_indices = @transform_1, window_bounds = array<i64: 9, 64>}, {pipeline_mode = #tpu.pipeline_mode<synchronous>, transform_indices = @transform_2, window_bounds = array<i64: 16, 144>}, {transform_indices = @transform_3, window_bounds = array<i64: 1, 16, 64>}]} {
    %c0 = arith.constant 0 : index
    %c0_0 = arith.constant 0 : index
    %0 = vector.load %arg2[%c0, %c0_0] : memref<9x64xbf16, #tpu.memory_space<vmem>>, vector<9x64xbf16>
    %c0_1 = arith.constant 0 : index
    %c0_2 = arith.constant 0 : index
    %c0_3 = arith.constant 0 : index
    %1 = vector.load %arg1[%c0_1, %c0_2, %c0_3] : memref<1x16x64xbf16, #tpu.memory_space<vmem>>, vector<1x16x64xbf16>
    %2 = vector.shape_cast %1 : vector<1x16x64xbf16> to vector<16x64xbf16>
    %cst = arith.constant 0.000000e+00 : bf16
    %3 = vector.broadcast %cst : bf16 to vector<16x9xbf16>
    %4 = tpu.concatenate %3, %2, %3 in 1 : vector<16x9xbf16>, vector<16x64xbf16>, vector<16x9xbf16> -> vector<16x82xbf16>
    %5 = vector.extract_strided_slice %4 {offsets = [0, 0], sizes = [16, 64], strides = [1, 1]} : vector<16x82xbf16> to vector<16x64xbf16>
    %6 = vector.extract_strided_slice %0 {offsets = [0, 0], sizes = [1, 64], strides = [1, 1]} : vector<9x64xbf16> to vector<1x64xbf16>
    %7 = vector.broadcast %6 : vector<1x64xbf16> to vector<16x64xbf16>
    %8 = arith.mulf %5, %7 : vector<16x64xbf16>
    %9 = vector.extract_strided_slice %4 {offsets = [0, 1], sizes = [16, 64], strides = [1, 1]} : vector<16x82xbf16> to vector<16x64xbf16>
    %10 = vector.extract_strided_slice %0 {offsets = [1, 0], sizes = [1, 64], strides = [1, 1]} : vector<9x64xbf16> to vector<1x64xbf16>
    %11 = vector.broadcast %10 : vector<1x64xbf16> to vector<16x64xbf16>
    %12 = arith.mulf %9, %11 : vector<16x64xbf16>
    %13 = vector.extract_strided_slice %4 {offsets = [0, 2], sizes = [16, 64], strides = [1, 1]} : vector<16x82xbf16> to vector<16x64xbf16>
    %14 = vector.extract_strided_slice %0 {offsets = [2, 0], sizes = [1, 64], strides = [1, 1]} : vector<9x64xbf16> to vector<1x64xbf16>
    %15 = vector.broadcast %14 : vector<1x64xbf16> to vector<16x64xbf16>
    %16 = arith.mulf %13, %15 : vector<16x64xbf16>
    %17 = vector.extract_strided_slice %4 {offsets = [0, 8], sizes = [16, 64], strides = [1, 1]} : vector<16x82xbf16> to vector<16x64xbf16>
    %18 = vector.extract_strided_slice %0 {offsets = [3, 0], sizes = [1, 64], strides = [1, 1]} : vector<9x64xbf16> to vector<1x64xbf16>
    %19 = vector.broadcast %18 : vector<1x64xbf16> to vector<16x64xbf16>
    %20 = arith.mulf %17, %19 : vector<16x64xbf16>
    %21 = vector.extract_strided_slice %4 {offsets = [0, 9], sizes = [16, 64], strides = [1, 1]} : vector<16x82xbf16> to vector<16x64xbf16>
    %22 = vector.extract_strided_slice %0 {offsets = [4, 0], sizes = [1, 64], strides = [1, 1]} : vector<9x64xbf16> to vector<1x64xbf16>
    %23 = vector.broadcast %22 : vector<1x64xbf16> to vector<16x64xbf16>
    %24 = arith.mulf %21, %23 : vector<16x64xbf16>
    %25 = vector.extract_strided_slice %4 {offsets = [0, 10], sizes = [16, 64], strides = [1, 1]} : vector<16x82xbf16> to vector<16x64xbf16>
    %26 = vector.extract_strided_slice %0 {offsets = [5, 0], sizes = [1, 64], strides = [1, 1]} : vector<9x64xbf16> to vector<1x64xbf16>
    %27 = vector.broadcast %26 : vector<1x64xbf16> to vector<16x64xbf16>
    %28 = arith.mulf %25, %27 : vector<16x64xbf16>
    %29 = vector.extract_strided_slice %4 {offsets = [0, 16], sizes = [16, 64], strides = [1, 1]} : vector<16x82xbf16> to vector<16x64xbf16>
    %30 = vector.extract_strided_slice %0 {offsets = [6, 0], sizes = [1, 64], strides = [1, 1]} : vector<9x64xbf16> to vector<1x64xbf16>
    %31 = vector.broadcast %30 : vector<1x64xbf16> to vector<16x64xbf16>
    %32 = arith.mulf %29, %31 : vector<16x64xbf16>
    %33 = vector.extract_strided_slice %4 {offsets = [0, 17], sizes = [16, 64], strides = [1, 1]} : vector<16x82xbf16> to vector<16x64xbf16>
    %34 = vector.extract_strided_slice %0 {offsets = [7, 0], sizes = [1, 64], strides = [1, 1]} : vector<9x64xbf16> to vector<1x64xbf16>
    %35 = vector.broadcast %34 : vector<1x64xbf16> to vector<16x64xbf16>
    %36 = arith.mulf %33, %35 : vector<16x64xbf16>
    %37 = vector.extract_strided_slice %4 {offsets = [0, 18], sizes = [16, 64], strides = [1, 1]} : vector<16x82xbf16> to vector<16x64xbf16>
    %38 = vector.extract_strided_slice %0 {offsets = [8, 0], sizes = [1, 64], strides = [1, 1]} : vector<9x64xbf16> to vector<1x64xbf16>
    %39 = vector.broadcast %38 : vector<1x64xbf16> to vector<16x64xbf16>
    %40 = arith.mulf %37, %39 : vector<16x64xbf16>
    %41 = tpu.concatenate %8, %12, %16, %20, %24, %28, %32, %36, %40 in 0 : vector<16x64xbf16>, vector<16x64xbf16>, vector<16x64xbf16>, vector<16x64xbf16>, vector<16x64xbf16>, vector<16x64xbf16>, vector<16x64xbf16>, vector<16x64xbf16>, vector<16x64xbf16> -> vector<144x64xbf16>
    %c0_4 = arith.constant 0 : index
    %c0_5 = arith.constant 0 : index
    %42 = vector.load %arg3[%c0_4, %c0_5] : memref<16x144xbf16, #tpu.memory_space<vmem>>, vector<16x144xbf16>
    %cst_6 = arith.constant dense<0.000000e+00> : vector<16x64xf32>
    %43 = tpu.matmul %42, %41, %cst_6 {dimension_numbers = #tpu.dot_dimension_numbers<[1], [0], [0], [1], [0, 0, 1, 1], [], []>} : vector<16x144xbf16>, vector<144x64xbf16>, vector<16x64xf32> -> vector<16x64xf32>
    %cst_7 = arith.constant dense<0.000000e+00> : vector<16xf32>
    %44 = vector.multi_reduction <add>, %43, %cst_7 [1] : vector<16x64xf32> to vector<16xf32>
    %45 = vector.shape_cast %44 : vector<16xf32> to vector<16x1xf32>
    %cst_8 = arith.constant 6.400000e+01 : f32
    %46 = vector.broadcast %cst_8 : f32 to vector<16x1xf32>
    %47 = arith.divf %45, %46 : vector<16x1xf32>
    %48 = vector.broadcast %47 : vector<16x1xf32> to vector<16x64xf32>
    %49 = arith.subf %43, %48 : vector<16x64xf32>
    %50 = arith.mulf %49, %49 : vector<16x64xf32>
    %cst_9 = arith.constant dense<0.000000e+00> : vector<16xf32>
    %51 = vector.multi_reduction <add>, %50, %cst_9 [1] : vector<16x64xf32> to vector<16xf32>
    %52 = vector.shape_cast %51 : vector<16xf32> to vector<16x1xf32>
    %cst_10 = arith.constant 6.400000e+01 : f32
    %53 = vector.broadcast %cst_10 : f32 to vector<16x1xf32>
    %54 = arith.divf %52, %53 : vector<16x1xf32>
    %cst_11 = arith.constant 9.99999974E-6 : f32
    %55 = vector.broadcast %cst_11 : f32 to vector<16x1xf32>
    %56 = arith.addf %54, %55 : vector<16x1xf32>
    %57 = math.rsqrt %56 : vector<16x1xf32>
    %58 = vector.broadcast %57 : vector<16x1xf32> to vector<16x64xf32>
    %59 = arith.mulf %49, %58 : vector<16x64xf32>
    %cst_12 = arith.constant 0.000000e+00 : f32
    %60 = vector.broadcast %cst_12 : f32 to vector<16x64xf32>
    %61 = arith.cmpf oge, %59, %60 : vector<16x64xf32>
    %cst_13 = arith.constant 0.00999999977 : f32
    %62 = vector.broadcast %cst_13 : f32 to vector<16x64xf32>
    %63 = arith.mulf %62, %59 : vector<16x64xf32>
    %64 = arith.select %61, %59, %63 : vector<16x64xi1>, vector<16x64xf32>
    %65 = arith.truncf %64 : vector<16x64xf32> to vector<16x64xbf16>
    %c0_14 = arith.constant 0 : index
    %c0_15 = arith.constant 0 : index
    %c0_16 = arith.constant 0 : index
    %66 = vector.load %arg4[%c0_14, %c0_15, %c0_16] : memref<1x16x64xbf16, #tpu.memory_space<vmem>>, vector<1x16x64xbf16>
    %67 = vector.shape_cast %66 : vector<1x16x64xbf16> to vector<16x64xbf16>
    %68 = vector.shape_cast %65 : vector<16x64xbf16> to vector<1x16x64xbf16>
    tpu.vector_store %arg4[%c0_14, %c0_15, %c0_16], %68 {strides = array<i32>} : memref<1x16x64xbf16, #tpu.memory_space<vmem>>, vector<1x16x64xbf16>,
    return
  }
  func.func @transform_0(%arg0: i32) -> (i32, i32, i32) {
    %c0_i32 = arith.constant 0 : i32
    %c0_i32_0 = arith.constant 0 : i32
    %c0_i32_1 = arith.constant 0 : i32
    return %arg0, %c0_i32, %c0_i32_0 : i32, i32, i32
  }
  func.func @transform_1(%arg0: i32) -> (i32, i32) {
    %c0_i32 = arith.constant 0 : i32
    %c0_i32_0 = arith.constant 0 : i32
    %c0_i32_1 = arith.constant 0 : i32
    return %c0_i32, %c0_i32_0 : i32, i32
  }
  func.func @transform_2(%arg0: i32) -> (i32, i32) {
    %c0_i32 = arith.constant 0 : i32
    %c0_i32_0 = arith.constant 0 : i32
    %c0_i32_1 = arith.constant 0 : i32
    return %c0_i32, %c0_i32_0 : i32, i32
  }
  func.func @transform_3(%arg0: i32) -> (i32, i32, i32) {
    %c0_i32 = arith.constant 0 : i32
    %c0_i32_0 = arith.constant 0 : i32
    %c0_i32_1 = arith.constant 0 : i32
    return %arg0, %c0_i32, %c0_i32_0 : i32, i32, i32
  }
}

module attributes {stable_mosaic.version = 11 : i64} {
  func.func @kernel(%arg0: i32, %arg1: memref<1x64x16xbf16, #tpu.memory_space<vmem>>, %arg2: memref<4x16xbf16, #tpu.memory_space<vmem>>, %arg3: memref<32x256xbf16, #tpu.memory_space<vmem>>, %arg4: memref<1x32x16xbf16, #tpu.memory_space<vmem>>) attributes {dimension_semantics = [#tpu.dimension_semantics<parallel>], iteration_bounds = array<i64: 2>, scalar_prefetch = 0 : i64, scratch_operands = 0 : i64, tpu.core_type = #tpu.core_type<tc>, window_params = [{transform_indices = @transform_0, window_bounds = array<i64: 1, 64, 16>}, {pipeline_mode = #tpu.pipeline_mode<synchronous>, transform_indices = @transform_1, window_bounds = array<i64: 4, 16>}, {pipeline_mode = #tpu.pipeline_mode<synchronous>, transform_indices = @transform_2, window_bounds = array<i64: 32, 256>}, {transform_indices = @transform_3, window_bounds = array<i64: 1, 32, 16>}]} {
    %c0 = arith.constant 0 : index
    %c0_0 = arith.constant 0 : index
    %0 = vector.load %arg2[%c0, %c0_0] : memref<4x16xbf16, #tpu.memory_space<vmem>>, vector<4x16xbf16>
    %c0_1 = arith.constant 0 : index
    %c0_2 = arith.constant 0 : index
    %c0_3 = arith.constant 0 : index
    %1 = vector.load %arg1[%c0_1, %c0_2, %c0_3] : memref<1x64x16xbf16, #tpu.memory_space<vmem>>, vector<1x64x16xbf16>
    %2 = vector.shape_cast %1 : vector<1x64x16xbf16> to vector<64x16xbf16>
    %cst = arith.constant 0.000000e+00 : bf16
    %3 = vector.broadcast %cst : bf16 to vector<64x5xbf16>
    %4 = tpu.concatenate %3, %2, %3 in 1 : vector<64x5xbf16>, vector<64x16xbf16>, vector<64x5xbf16> -> vector<64x26xbf16>
    %5 = vector.extract_strided_slice %4 {offsets = [0, 0], sizes = [64, 16], strides = [1, 1]} : vector<64x26xbf16> to vector<64x16xbf16>
    %6 = vector.extract_strided_slice %0 {offsets = [0, 0], sizes = [1, 16], strides = [1, 1]} : vector<4x16xbf16> to vector<1x16xbf16>
    %7 = vector.broadcast %6 : vector<1x16xbf16> to vector<64x16xbf16>
    %8 = arith.mulf %5, %7 : vector<64x16xbf16>
    %9 = vector.extract_strided_slice %4 {offsets = [0, 1], sizes = [64, 16], strides = [1, 1]} : vector<64x26xbf16> to vector<64x16xbf16>
    %10 = vector.extract_strided_slice %0 {offsets = [1, 0], sizes = [1, 16], strides = [1, 1]} : vector<4x16xbf16> to vector<1x16xbf16>
    %11 = vector.broadcast %10 : vector<1x16xbf16> to vector<64x16xbf16>
    %12 = arith.mulf %9, %11 : vector<64x16xbf16>
    %13 = vector.extract_strided_slice %4 {offsets = [0, 4], sizes = [64, 16], strides = [1, 1]} : vector<64x26xbf16> to vector<64x16xbf16>
    %14 = vector.extract_strided_slice %0 {offsets = [2, 0], sizes = [1, 16], strides = [1, 1]} : vector<4x16xbf16> to vector<1x16xbf16>
    %15 = vector.broadcast %14 : vector<1x16xbf16> to vector<64x16xbf16>
    %16 = arith.mulf %13, %15 : vector<64x16xbf16>
    %17 = vector.extract_strided_slice %4 {offsets = [0, 5], sizes = [64, 16], strides = [1, 1]} : vector<64x26xbf16> to vector<64x16xbf16>
    %18 = vector.extract_strided_slice %0 {offsets = [3, 0], sizes = [1, 16], strides = [1, 1]} : vector<4x16xbf16> to vector<1x16xbf16>
    %19 = vector.broadcast %18 : vector<1x16xbf16> to vector<64x16xbf16>
    %20 = arith.mulf %17, %19 : vector<64x16xbf16>
    %21 = tpu.concatenate %8, %12, %16, %20 in 0 : vector<64x16xbf16>, vector<64x16xbf16>, vector<64x16xbf16>, vector<64x16xbf16> -> vector<256x16xbf16>
    %c0_4 = arith.constant 0 : index
    %c0_5 = arith.constant 0 : index
    %22 = vector.load %arg3[%c0_4, %c0_5] : memref<32x256xbf16, #tpu.memory_space<vmem>>, vector<32x256xbf16>
    %cst_6 = arith.constant dense<0.000000e+00> : vector<32x16xf32>
    %23 = tpu.matmul %22, %21, %cst_6 {dimension_numbers = #tpu.dot_dimension_numbers<[1], [0], [0], [1], [0, 0, 1, 1], [], []>} : vector<32x256xbf16>, vector<256x16xbf16>, vector<32x16xf32> -> vector<32x16xf32>
    %cst_7 = arith.constant dense<0.000000e+00> : vector<32xf32>
    %24 = vector.multi_reduction <add>, %23, %cst_7 [1] : vector<32x16xf32> to vector<32xf32>
    %25 = vector.shape_cast %24 : vector<32xf32> to vector<32x1xf32>
    %cst_8 = arith.constant 1.600000e+01 : f32
    %26 = vector.broadcast %cst_8 : f32 to vector<32x1xf32>
    %27 = arith.divf %25, %26 : vector<32x1xf32>
    %28 = vector.broadcast %27 : vector<32x1xf32> to vector<32x16xf32>
    %29 = arith.subf %23, %28 : vector<32x16xf32>
    %30 = arith.mulf %29, %29 : vector<32x16xf32>
    %cst_9 = arith.constant dense<0.000000e+00> : vector<32xf32>
    %31 = vector.multi_reduction <add>, %30, %cst_9 [1] : vector<32x16xf32> to vector<32xf32>
    %32 = vector.shape_cast %31 : vector<32xf32> to vector<32x1xf32>
    %cst_10 = arith.constant 1.600000e+01 : f32
    %33 = vector.broadcast %cst_10 : f32 to vector<32x1xf32>
    %34 = arith.divf %32, %33 : vector<32x1xf32>
    %cst_11 = arith.constant 9.99999974E-6 : f32
    %35 = vector.broadcast %cst_11 : f32 to vector<32x1xf32>
    %36 = arith.addf %34, %35 : vector<32x1xf32>
    %37 = math.rsqrt %36 : vector<32x1xf32>
    %38 = vector.broadcast %37 : vector<32x1xf32> to vector<32x16xf32>
    %39 = arith.mulf %29, %38 : vector<32x16xf32>
    %cst_12 = arith.constant 0.000000e+00 : f32
    %40 = vector.broadcast %cst_12 : f32 to vector<32x16xf32>
    %41 = arith.cmpf oge, %39, %40 : vector<32x16xf32>
    %cst_13 = arith.constant 0.00999999977 : f32
    %42 = vector.broadcast %cst_13 : f32 to vector<32x16xf32>
    %43 = arith.mulf %42, %39 : vector<32x16xf32>
    %44 = arith.select %41, %39, %43 : vector<32x16xi1>, vector<32x16xf32>
    %45 = arith.truncf %44 : vector<32x16xf32> to vector<32x16xbf16>
    %c0_14 = arith.constant 0 : index
    %c0_15 = arith.constant 0 : index
    %c0_16 = arith.constant 0 : index
    %46 = vector.load %arg4[%c0_14, %c0_15, %c0_16] : memref<1x32x16xbf16, #tpu.memory_space<vmem>>, vector<1x32x16xbf16>
    %47 = vector.shape_cast %46 : vector<1x32x16xbf16> to vector<32x16xbf16>
    %48 = vector.shape_cast %45 : vector<32x16xbf16> to vector<1x32x16xbf16>
    tpu.vector_store %arg4[%c0_14, %c0_15, %c0_16], %48 {strides = array<i32>} : memref<1x32x16xbf16, #tpu.memory_space<vmem>>, vector<1x32x16xbf16>,
    return
  }
  func.func @transform_0(%arg0: i32) -> (i32, i32, i32) {
    %c0_i32 = arith.constant 0 : i32
    %c0_i32_0 = arith.constant 0 : i32
    %c0_i32_1 = arith.constant 0 : i32
    return %arg0, %c0_i32, %c0_i32_0 : i32, i32, i32
  }
  func.func @transform_1(%arg0: i32) -> (i32, i32) {
    %c0_i32 = arith.constant 0 : i32
    %c0_i32_0 = arith.constant 0 : i32
    %c0_i32_1 = arith.constant 0 : i32
    return %c0_i32, %c0_i32_0 : i32, i32
  }
  func.func @transform_2(%arg0: i32) -> (i32, i32) {
    %c0_i32 = arith.constant 0 : i32
    %c0_i32_0 = arith.constant 0 : i32
    %c0_i32_1 = arith.constant 0 : i32
    return %c0_i32, %c0_i32_0 : i32, i32
  }
  func.func @transform_3(%arg0: i32) -> (i32, i32, i32) {
    %c0_i32 = arith.constant 0 : i32
    %c0_i32_0 = arith.constant 0 : i32
    %c0_i32_1 = arith.constant 0 : i32
    return %arg0, %c0_i32, %c0_i32_0 : i32, i32, i32
  }
}

module attributes {stable_mosaic.version = 11 : i64} {
  func.func @_chan_matmul_kernel(%arg0: i32, %arg1: memref<1x32x16xbf16, #tpu.memory_space<vmem>>, %arg2: memref<64x32xbf16, #tpu.memory_space<vmem>>, %arg3: memref<1x64x16xbf16, #tpu.memory_space<vmem>>) attributes {dimension_semantics = [#tpu.dimension_semantics<parallel>], iteration_bounds = array<i64: 2>, scalar_prefetch = 0 : i64, scratch_operands = 0 : i64, tpu.core_type = #tpu.core_type<tc>, window_params = [{transform_indices = @transform_0, window_bounds = array<i64: 1, 32, 16>}, {pipeline_mode = #tpu.pipeline_mode<synchronous>, transform_indices = @transform_1, window_bounds = array<i64: 64, 32>}, {transform_indices = @transform_2, window_bounds = array<i64: 1, 64, 16>}]} {
    %c0 = arith.constant 0 : index
    %c0_0 = arith.constant 0 : index
    %0 = vector.load %arg2[%c0, %c0_0] : memref<64x32xbf16, #tpu.memory_space<vmem>>, vector<64x32xbf16>
    %c0_1 = arith.constant 0 : index
    %c0_2 = arith.constant 0 : index
    %c0_3 = arith.constant 0 : index
    %1 = vector.load %arg1[%c0_1, %c0_2, %c0_3] : memref<1x32x16xbf16, #tpu.memory_space<vmem>>, vector<1x32x16xbf16>
    %2 = vector.shape_cast %1 : vector<1x32x16xbf16> to vector<32x16xbf16>
    %cst = arith.constant dense<0.000000e+00> : vector<64x16xf32>
    %3 = tpu.matmul %0, %2, %cst {dimension_numbers = #tpu.dot_dimension_numbers<[1], [0], [0], [1], [0, 0, 1, 1], [], []>} : vector<64x32xbf16>, vector<32x16xbf16>, vector<64x16xf32> -> vector<64x16xf32>
    %4 = arith.truncf %3 : vector<64x16xf32> to vector<64x16xbf16>
    %c0_4 = arith.constant 0 : index
    %c0_5 = arith.constant 0 : index
    %c0_6 = arith.constant 0 : index
    %5 = vector.load %arg3[%c0_4, %c0_5, %c0_6] : memref<1x64x16xbf16, #tpu.memory_space<vmem>>, vector<1x64x16xbf16>
    %6 = vector.shape_cast %5 : vector<1x64x16xbf16> to vector<64x16xbf16>
    %7 = vector.shape_cast %4 : vector<64x16xbf16> to vector<1x64x16xbf16>
    tpu.vector_store %arg3[%c0_4, %c0_5, %c0_6], %7 {strides = array<i32>} : memref<1x64x16xbf16, #tpu.memory_space<vmem>>, vector<1x64x16xbf16>,
    return
  }
  func.func @transform_0(%arg0: i32) -> (i32, i32, i32) {
    %c0_i32 = arith.constant 0 : i32
    %c0_i32_0 = arith.constant 0 : i32
    %c0_i32_1 = arith.constant 0 : i32
    return %arg0, %c0_i32, %c0_i32_0 : i32, i32, i32
  }
  func.func @transform_1(%arg0: i32) -> (i32, i32) {
    %c0_i32 = arith.constant 0 : i32
    %c0_i32_0 = arith.constant 0 : i32
    %c0_i32_1 = arith.constant 0 : i32
    return %c0_i32, %c0_i32_0 : i32, i32
  }
  func.func @transform_2(%arg0: i32) -> (i32, i32, i32) {
    %c0_i32 = arith.constant 0 : i32
    %c0_i32_0 = arith.constant 0 : i32
    %c0_i32_1 = arith.constant 0 : i32
    return %arg0, %c0_i32, %c0_i32_0 : i32, i32, i32
  }
}

module attributes {stable_mosaic.version = 11 : i64} {
  func.func @kernel(%arg0: i32, %arg1: memref<1x32x16xbf16, #tpu.memory_space<vmem>>, %arg2: memref<9x16xbf16, #tpu.memory_space<vmem>>, %arg3: memref<32x288xbf16, #tpu.memory_space<vmem>>, %arg4: memref<1x32x16xbf16, #tpu.memory_space<vmem>>) attributes {dimension_semantics = [#tpu.dimension_semantics<parallel>], iteration_bounds = array<i64: 2>, scalar_prefetch = 0 : i64, scratch_operands = 0 : i64, tpu.core_type = #tpu.core_type<tc>, window_params = [{transform_indices = @transform_0, window_bounds = array<i64: 1, 32, 16>}, {pipeline_mode = #tpu.pipeline_mode<synchronous>, transform_indices = @transform_1, window_bounds = array<i64: 9, 16>}, {pipeline_mode = #tpu.pipeline_mode<synchronous>, transform_indices = @transform_2, window_bounds = array<i64: 32, 288>}, {transform_indices = @transform_3, window_bounds = array<i64: 1, 32, 16>}]} {
    %c0 = arith.constant 0 : index
    %c0_0 = arith.constant 0 : index
    %0 = vector.load %arg2[%c0, %c0_0] : memref<9x16xbf16, #tpu.memory_space<vmem>>, vector<9x16xbf16>
    %c0_1 = arith.constant 0 : index
    %c0_2 = arith.constant 0 : index
    %c0_3 = arith.constant 0 : index
    %1 = vector.load %arg1[%c0_1, %c0_2, %c0_3] : memref<1x32x16xbf16, #tpu.memory_space<vmem>>, vector<1x32x16xbf16>
    %2 = vector.shape_cast %1 : vector<1x32x16xbf16> to vector<32x16xbf16>
    %cst = arith.constant 0.000000e+00 : bf16
    %3 = vector.broadcast %cst : bf16 to vector<32x5xbf16>
    %4 = tpu.concatenate %3, %2, %3 in 1 : vector<32x5xbf16>, vector<32x16xbf16>, vector<32x5xbf16> -> vector<32x26xbf16>
    %5 = vector.extract_strided_slice %4 {offsets = [0, 0], sizes = [32, 16], strides = [1, 1]} : vector<32x26xbf16> to vector<32x16xbf16>
    %6 = vector.extract_strided_slice %0 {offsets = [0, 0], sizes = [1, 16], strides = [1, 1]} : vector<9x16xbf16> to vector<1x16xbf16>
    %7 = vector.broadcast %6 : vector<1x16xbf16> to vector<32x16xbf16>
    %8 = arith.mulf %5, %7 : vector<32x16xbf16>
    %9 = vector.extract_strided_slice %4 {offsets = [0, 1], sizes = [32, 16], strides = [1, 1]} : vector<32x26xbf16> to vector<32x16xbf16>
    %10 = vector.extract_strided_slice %0 {offsets = [1, 0], sizes = [1, 16], strides = [1, 1]} : vector<9x16xbf16> to vector<1x16xbf16>
    %11 = vector.broadcast %10 : vector<1x16xbf16> to vector<32x16xbf16>
    %12 = arith.mulf %9, %11 : vector<32x16xbf16>
    %13 = vector.extract_strided_slice %4 {offsets = [0, 2], sizes = [32, 16], strides = [1, 1]} : vector<32x26xbf16> to vector<32x16xbf16>
    %14 = vector.extract_strided_slice %0 {offsets = [2, 0], sizes = [1, 16], strides = [1, 1]} : vector<9x16xbf16> to vector<1x16xbf16>
    %15 = vector.broadcast %14 : vector<1x16xbf16> to vector<32x16xbf16>
    %16 = arith.mulf %13, %15 : vector<32x16xbf16>
    %17 = vector.extract_strided_slice %4 {offsets = [0, 4], sizes = [32, 16], strides = [1, 1]} : vector<32x26xbf16> to vector<32x16xbf16>
    %18 = vector.extract_strided_slice %0 {offsets = [3, 0], sizes = [1, 16], strides = [1, 1]} : vector<9x16xbf16> to vector<1x16xbf16>
    %19 = vector.broadcast %18 : vector<1x16xbf16> to vector<32x16xbf16>
    %20 = arith.mulf %17, %19 : vector<32x16xbf16>
    %21 = vector.extract_strided_slice %4 {offsets = [0, 5], sizes = [32, 16], strides = [1, 1]} : vector<32x26xbf16> to vector<32x16xbf16>
    %22 = vector.extract_strided_slice %0 {offsets = [4, 0], sizes = [1, 16], strides = [1, 1]} : vector<9x16xbf16> to vector<1x16xbf16>
    %23 = vector.broadcast %22 : vector<1x16xbf16> to vector<32x16xbf16>
    %24 = arith.mulf %21, %23 : vector<32x16xbf16>
    %25 = vector.extract_strided_slice %4 {offsets = [0, 6], sizes = [32, 16], strides = [1, 1]} : vector<32x26xbf16> to vector<32x16xbf16>
    %26 = vector.extract_strided_slice %0 {offsets = [5, 0], sizes = [1, 16], strides = [1, 1]} : vector<9x16xbf16> to vector<1x16xbf16>
    %27 = vector.broadcast %26 : vector<1x16xbf16> to vector<32x16xbf16>
    %28 = arith.mulf %25, %27 : vector<32x16xbf16>
    %29 = vector.extract_strided_slice %4 {offsets = [0, 8], sizes = [32, 16], strides = [1, 1]} : vector<32x26xbf16> to vector<32x16xbf16>
    %30 = vector.extract_strided_slice %0 {offsets = [6, 0], sizes = [1, 16], strides = [1, 1]} : vector<9x16xbf16> to vector<1x16xbf16>
    %31 = vector.broadcast %30 : vector<1x16xbf16> to vector<32x16xbf16>
    %32 = arith.mulf %29, %31 : vector<32x16xbf16>
    %33 = vector.extract_strided_slice %4 {offsets = [0, 9], sizes = [32, 16], strides = [1, 1]} : vector<32x26xbf16> to vector<32x16xbf16>
    %34 = vector.extract_strided_slice %0 {offsets = [7, 0], sizes = [1, 16], strides = [1, 1]} : vector<9x16xbf16> to vector<1x16xbf16>
    %35 = vector.broadcast %34 : vector<1x16xbf16> to vector<32x16xbf16>
    %36 = arith.mulf %33, %35 : vector<32x16xbf16>
    %37 = vector.extract_strided_slice %4 {offsets = [0, 10], sizes = [32, 16], strides = [1, 1]} : vector<32x26xbf16> to vector<32x16xbf16>
    %38 = vector.extract_strided_slice %0 {offsets = [8, 0], sizes = [1, 16], strides = [1, 1]} : vector<9x16xbf16> to vector<1x16xbf16>
    %39 = vector.broadcast %38 : vector<1x16xbf16> to vector<32x16xbf16>
    %40 = arith.mulf %37, %39 : vector<32x16xbf16>
    %41 = tpu.concatenate %8, %12, %16, %20, %24, %28, %32, %36, %40 in 0 : vector<32x16xbf16>, vector<32x16xbf16>, vector<32x16xbf16>, vector<32x16xbf16>, vector<32x16xbf16>, vector<32x16xbf16>, vector<32x16xbf16>, vector<32x16xbf16>, vector<32x16xbf16> -> vector<288x16xbf16>
    %c0_4 = arith.constant 0 : index
    %c0_5 = arith.constant 0 : index
    %42 = vector.load %arg3[%c0_4, %c0_5] : memref<32x288xbf16, #tpu.memory_space<vmem>>, vector<32x288xbf16>
    %cst_6 = arith.constant dense<0.000000e+00> : vector<32x16xf32>
    %43 = tpu.matmul %42, %41, %cst_6 {dimension_numbers = #tpu.dot_dimension_numbers<[1], [0], [0], [1], [0, 0, 1, 1], [], []>} : vector<32x288xbf16>, vector<288x16xbf16>, vector<32x16xf32> -> vector<32x16xf32>
    %cst_7 = arith.constant dense<0.000000e+00> : vector<32xf32>
    %44 = vector.multi_reduction <add>, %43, %cst_7 [1] : vector<32x16xf32> to vector<32xf32>
    %45 = vector.shape_cast %44 : vector<32xf32> to vector<32x1xf32>
    %cst_8 = arith.constant 1.600000e+01 : f32
    %46 = vector.broadcast %cst_8 : f32 to vector<32x1xf32>
    %47 = arith.divf %45, %46 : vector<32x1xf32>
    %48 = vector.broadcast %47 : vector<32x1xf32> to vector<32x16xf32>
    %49 = arith.subf %43, %48 : vector<32x16xf32>
    %50 = arith.mulf %49, %49 : vector<32x16xf32>
    %cst_9 = arith.constant dense<0.000000e+00> : vector<32xf32>
    %51 = vector.multi_reduction <add>, %50, %cst_9 [1] : vector<32x16xf32> to vector<32xf32>
    %52 = vector.shape_cast %51 : vector<32xf32> to vector<32x1xf32>
    %cst_10 = arith.constant 1.600000e+01 : f32
    %53 = vector.broadcast %cst_10 : f32 to vector<32x1xf32>
    %54 = arith.divf %52, %53 : vector<32x1xf32>
    %cst_11 = arith.constant 9.99999974E-6 : f32
    %55 = vector.broadcast %cst_11 : f32 to vector<32x1xf32>
    %56 = arith.addf %54, %55 : vector<32x1xf32>
    %57 = math.rsqrt %56 : vector<32x1xf32>
    %58 = vector.broadcast %57 : vector<32x1xf32> to vector<32x16xf32>
    %59 = arith.mulf %49, %58 : vector<32x16xf32>
    %cst_12 = arith.constant 0.000000e+00 : f32
    %60 = vector.broadcast %cst_12 : f32 to vector<32x16xf32>
    %61 = arith.cmpf oge, %59, %60 : vector<32x16xf32>
    %cst_13 = arith.constant 0.00999999977 : f32
    %62 = vector.broadcast %cst_13 : f32 to vector<32x16xf32>
    %63 = arith.mulf %62, %59 : vector<32x16xf32>
    %64 = arith.select %61, %59, %63 : vector<32x16xi1>, vector<32x16xf32>
    %65 = arith.truncf %64 : vector<32x16xf32> to vector<32x16xbf16>
    %c0_14 = arith.constant 0 : index
    %c0_15 = arith.constant 0 : index
    %c0_16 = arith.constant 0 : index
    %66 = vector.load %arg4[%c0_14, %c0_15, %c0_16] : memref<1x32x16xbf16, #tpu.memory_space<vmem>>, vector<1x32x16xbf16>
    %67 = vector.shape_cast %66 : vector<1x32x16xbf16> to vector<32x16xbf16>
    %68 = vector.shape_cast %65 : vector<32x16xbf16> to vector<1x32x16xbf16>
    tpu.vector_store %arg4[%c0_14, %c0_15, %c0_16], %68 {strides = array<i32>} : memref<1x32x16xbf16, #tpu.memory_space<vmem>>, vector<1x32x16xbf16>,
    return
  }
  func.func @transform_0(%arg0: i32) -> (i32, i32, i32) {
    %c0_i32 = arith.constant 0 : i32
    %c0_i32_0 = arith.constant 0 : i32
    %c0_i32_1 = arith.constant 0 : i32
    return %arg0, %c0_i32, %c0_i32_0 : i32, i32, i32
  }
  func.func @transform_1(%arg0: i32) -> (i32, i32) {
    %c0_i32 = arith.constant 0 : i32
    %c0_i32_0 = arith.constant 0 : i32
    %c0_i32_1 = arith.constant 0 : i32
    return %c0_i32, %c0_i32_0 : i32, i32
  }
  func.func @transform_2(%arg0: i32) -> (i32, i32) {
    %c0_i32 = arith.constant 0 : i32
    %c0_i32_0 = arith.constant 0 : i32
    %c0_i32_1 = arith.constant 0 : i32
    return %c0_i32, %c0_i32_0 : i32, i32
  }
  func.func @transform_3(%arg0: i32) -> (i32, i32, i32) {
    %c0_i32 = arith.constant 0 : i32
    %c0_i32_0 = arith.constant 0 : i32
    %c0_i32_1 = arith.constant 0 : i32
    return %arg0, %c0_i32, %c0_i32_0 : i32, i32, i32
  }
}

module attributes {stable_mosaic.version = 11 : i64} {
  func.func @_chan_matmul_kernel(%arg0: i32, %arg1: memref<1x16x64xbf16, #tpu.memory_space<vmem>>, %arg2: memref<32x16xbf16, #tpu.memory_space<vmem>>, %arg3: memref<1x32x64xbf16, #tpu.memory_space<vmem>>) attributes {dimension_semantics = [#tpu.dimension_semantics<parallel>], iteration_bounds = array<i64: 2>, scalar_prefetch = 0 : i64, scratch_operands = 0 : i64, tpu.core_type = #tpu.core_type<tc>, window_params = [{transform_indices = @transform_0, window_bounds = array<i64: 1, 16, 64>}, {pipeline_mode = #tpu.pipeline_mode<synchronous>, transform_indices = @transform_1, window_bounds = array<i64: 32, 16>}, {transform_indices = @transform_2, window_bounds = array<i64: 1, 32, 64>}]} {
    %c0 = arith.constant 0 : index
    %c0_0 = arith.constant 0 : index
    %0 = vector.load %arg2[%c0, %c0_0] : memref<32x16xbf16, #tpu.memory_space<vmem>>, vector<32x16xbf16>
    %c0_1 = arith.constant 0 : index
    %c0_2 = arith.constant 0 : index
    %c0_3 = arith.constant 0 : index
    %1 = vector.load %arg1[%c0_1, %c0_2, %c0_3] : memref<1x16x64xbf16, #tpu.memory_space<vmem>>, vector<1x16x64xbf16>
    %2 = vector.shape_cast %1 : vector<1x16x64xbf16> to vector<16x64xbf16>
    %cst = arith.constant dense<0.000000e+00> : vector<32x64xf32>
    %3 = tpu.matmul %0, %2, %cst {dimension_numbers = #tpu.dot_dimension_numbers<[1], [0], [0], [1], [0, 0, 1, 1], [], []>} : vector<32x16xbf16>, vector<16x64xbf16>, vector<32x64xf32> -> vector<32x64xf32>
    %4 = arith.truncf %3 : vector<32x64xf32> to vector<32x64xbf16>
    %c0_4 = arith.constant 0 : index
    %c0_5 = arith.constant 0 : index
    %c0_6 = arith.constant 0 : index
    %5 = vector.load %arg3[%c0_4, %c0_5, %c0_6] : memref<1x32x64xbf16, #tpu.memory_space<vmem>>, vector<1x32x64xbf16>
    %6 = vector.shape_cast %5 : vector<1x32x64xbf16> to vector<32x64xbf16>
    %7 = vector.shape_cast %4 : vector<32x64xbf16> to vector<1x32x64xbf16>
    tpu.vector_store %arg3[%c0_4, %c0_5, %c0_6], %7 {strides = array<i32>} : memref<1x32x64xbf16, #tpu.memory_space<vmem>>, vector<1x32x64xbf16>,
    return
  }
  func.func @transform_0(%arg0: i32) -> (i32, i32, i32) {
    %c0_i32 = arith.constant 0 : i32
    %c0_i32_0 = arith.constant 0 : i32
    %c0_i32_1 = arith.constant 0 : i32
    return %arg0, %c0_i32, %c0_i32_0 : i32, i32, i32
  }
  func.func @transform_1(%arg0: i32) -> (i32, i32) {
    %c0_i32 = arith.constant 0 : i32
    %c0_i32_0 = arith.constant 0 : i32
    %c0_i32_1 = arith.constant 0 : i32
    return %c0_i32, %c0_i32_0 : i32, i32
  }
  func.func @transform_2(%arg0: i32) -> (i32, i32, i32) {
    %c0_i32 = arith.constant 0 : i32
    %c0_i32_0 = arith.constant 0 : i32
    %c0_i32_1 = arith.constant 0 : i32
    return %arg0, %c0_i32, %c0_i32_0 : i32, i32, i32
  }
}

module attributes {stable_mosaic.version = 11 : i64} {
  func.func @kernel(%arg0: i32, %arg1: memref<1x16x64xbf16, #tpu.memory_space<vmem>>, %arg2: memref<1x16x64xbf16, #tpu.memory_space<vmem>>, %arg3: memref<9x64xbf16, #tpu.memory_space<vmem>>, %arg4: memref<16x288xbf16, #tpu.memory_space<vmem>>, %arg5: memref<1x16x64xbf16, #tpu.memory_space<vmem>>) attributes {dimension_semantics = [#tpu.dimension_semantics<parallel>], iteration_bounds = array<i64: 2>, scalar_prefetch = 0 : i64, scratch_operands = 0 : i64, tpu.core_type = #tpu.core_type<tc>, window_params = [{transform_indices = @transform_0, window_bounds = array<i64: 1, 16, 64>}, {transform_indices = @transform_1, window_bounds = array<i64: 1, 16, 64>}, {pipeline_mode = #tpu.pipeline_mode<synchronous>, transform_indices = @transform_2, window_bounds = array<i64: 9, 64>}, {pipeline_mode = #tpu.pipeline_mode<synchronous>, transform_indices = @transform_3, window_bounds = array<i64: 16, 288>}, {transform_indices = @transform_4, window_bounds = array<i64: 1, 16, 64>}]} {
    %c0 = arith.constant 0 : index
    %c0_0 = arith.constant 0 : index
    %0 = vector.load %arg3[%c0, %c0_0] : memref<9x64xbf16, #tpu.memory_space<vmem>>, vector<9x64xbf16>
    %c0_1 = arith.constant 0 : index
    %c0_2 = arith.constant 0 : index
    %c0_3 = arith.constant 0 : index
    %1 = vector.load %arg1[%c0_1, %c0_2, %c0_3] : memref<1x16x64xbf16, #tpu.memory_space<vmem>>, vector<1x16x64xbf16>
    %2 = vector.shape_cast %1 : vector<1x16x64xbf16> to vector<16x64xbf16>
    %cst = arith.constant 0.000000e+00 : bf16
    %3 = vector.broadcast %cst : bf16 to vector<16x9xbf16>
    %4 = tpu.concatenate %3, %2, %3 in 1 : vector<16x9xbf16>, vector<16x64xbf16>, vector<16x9xbf16> -> vector<16x82xbf16>
    %5 = vector.extract_strided_slice %4 {offsets = [0, 0], sizes = [16, 64], strides = [1, 1]} : vector<16x82xbf16> to vector<16x64xbf16>
    %6 = vector.extract_strided_slice %0 {offsets = [0, 0], sizes = [1, 64], strides = [1, 1]} : vector<9x64xbf16> to vector<1x64xbf16>
    %7 = vector.broadcast %6 : vector<1x64xbf16> to vector<16x64xbf16>
    %8 = arith.mulf %5, %7 : vector<16x64xbf16>
    %9 = vector.extract_strided_slice %4 {offsets = [0, 1], sizes = [16, 64], strides = [1, 1]} : vector<16x82xbf16> to vector<16x64xbf16>
    %10 = vector.extract_strided_slice %0 {offsets = [1, 0], sizes = [1, 64], strides = [1, 1]} : vector<9x64xbf16> to vector<1x64xbf16>
    %11 = vector.broadcast %10 : vector<1x64xbf16> to vector<16x64xbf16>
    %12 = arith.mulf %9, %11 : vector<16x64xbf16>
    %13 = vector.extract_strided_slice %4 {offsets = [0, 2], sizes = [16, 64], strides = [1, 1]} : vector<16x82xbf16> to vector<16x64xbf16>
    %14 = vector.extract_strided_slice %0 {offsets = [2, 0], sizes = [1, 64], strides = [1, 1]} : vector<9x64xbf16> to vector<1x64xbf16>
    %15 = vector.broadcast %14 : vector<1x64xbf16> to vector<16x64xbf16>
    %16 = arith.mulf %13, %15 : vector<16x64xbf16>
    %17 = vector.extract_strided_slice %4 {offsets = [0, 8], sizes = [16, 64], strides = [1, 1]} : vector<16x82xbf16> to vector<16x64xbf16>
    %18 = vector.extract_strided_slice %0 {offsets = [3, 0], sizes = [1, 64], strides = [1, 1]} : vector<9x64xbf16> to vector<1x64xbf16>
    %19 = vector.broadcast %18 : vector<1x64xbf16> to vector<16x64xbf16>
    %20 = arith.mulf %17, %19 : vector<16x64xbf16>
    %21 = vector.extract_strided_slice %4 {offsets = [0, 9], sizes = [16, 64], strides = [1, 1]} : vector<16x82xbf16> to vector<16x64xbf16>
    %22 = vector.extract_strided_slice %0 {offsets = [4, 0], sizes = [1, 64], strides = [1, 1]} : vector<9x64xbf16> to vector<1x64xbf16>
    %23 = vector.broadcast %22 : vector<1x64xbf16> to vector<16x64xbf16>
    %24 = arith.mulf %21, %23 : vector<16x64xbf16>
    %25 = vector.extract_strided_slice %4 {offsets = [0, 10], sizes = [16, 64], strides = [1, 1]} : vector<16x82xbf16> to vector<16x64xbf16>
    %26 = vector.extract_strided_slice %0 {offsets = [5, 0], sizes = [1, 64], strides = [1, 1]} : vector<9x64xbf16> to vector<1x64xbf16>
    %27 = vector.broadcast %26 : vector<1x64xbf16> to vector<16x64xbf16>
    %28 = arith.mulf %25, %27 : vector<16x64xbf16>
    %29 = vector.extract_strided_slice %4 {offsets = [0, 16], sizes = [16, 64], strides = [1, 1]} : vector<16x82xbf16> to vector<16x64xbf16>
    %30 = vector.extract_strided_slice %0 {offsets = [6, 0], sizes = [1, 64], strides = [1, 1]} : vector<9x64xbf16> to vector<1x64xbf16>
    %31 = vector.broadcast %30 : vector<1x64xbf16> to vector<16x64xbf16>
    %32 = arith.mulf %29, %31 : vector<16x64xbf16>
    %33 = vector.extract_strided_slice %4 {offsets = [0, 17], sizes = [16, 64], strides = [1, 1]} : vector<16x82xbf16> to vector<16x64xbf16>
    %34 = vector.extract_strided_slice %0 {offsets = [7, 0], sizes = [1, 64], strides = [1, 1]} : vector<9x64xbf16> to vector<1x64xbf16>
    %35 = vector.broadcast %34 : vector<1x64xbf16> to vector<16x64xbf16>
    %36 = arith.mulf %33, %35 : vector<16x64xbf16>
    %37 = vector.extract_strided_slice %4 {offsets = [0, 18], sizes = [16, 64], strides = [1, 1]} : vector<16x82xbf16> to vector<16x64xbf16>
    %38 = vector.extract_strided_slice %0 {offsets = [8, 0], sizes = [1, 64], strides = [1, 1]} : vector<9x64xbf16> to vector<1x64xbf16>
    %39 = vector.broadcast %38 : vector<1x64xbf16> to vector<16x64xbf16>
    %40 = arith.mulf %37, %39 : vector<16x64xbf16>
    %c0_4 = arith.constant 0 : index
    %c0_5 = arith.constant 0 : index
    %c0_6 = arith.constant 0 : index
    %41 = vector.load %arg2[%c0_4, %c0_5, %c0_6] : memref<1x16x64xbf16, #tpu.memory_space<vmem>>, vector<1x16x64xbf16>
    %42 = vector.shape_cast %41 : vector<1x16x64xbf16> to vector<16x64xbf16>
    %cst_7 = arith.constant 0.000000e+00 : bf16
    %43 = vector.broadcast %cst_7 : bf16 to vector<16x9xbf16>
    %44 = tpu.concatenate %43, %42, %43 in 1 : vector<16x9xbf16>, vector<16x64xbf16>, vector<16x9xbf16> -> vector<16x82xbf16>
    %45 = vector.extract_strided_slice %44 {offsets = [0, 0], sizes = [16, 64], strides = [1, 1]} : vector<16x82xbf16> to vector<16x64xbf16>
    %46 = vector.extract_strided_slice %0 {offsets = [0, 0], sizes = [1, 64], strides = [1, 1]} : vector<9x64xbf16> to vector<1x64xbf16>
    %47 = vector.broadcast %46 : vector<1x64xbf16> to vector<16x64xbf16>
    %48 = arith.mulf %45, %47 : vector<16x64xbf16>
    %49 = vector.extract_strided_slice %44 {offsets = [0, 1], sizes = [16, 64], strides = [1, 1]} : vector<16x82xbf16> to vector<16x64xbf16>
    %50 = vector.extract_strided_slice %0 {offsets = [1, 0], sizes = [1, 64], strides = [1, 1]} : vector<9x64xbf16> to vector<1x64xbf16>
    %51 = vector.broadcast %50 : vector<1x64xbf16> to vector<16x64xbf16>
    %52 = arith.mulf %49, %51 : vector<16x64xbf16>
    %53 = vector.extract_strided_slice %44 {offsets = [0, 2], sizes = [16, 64], strides = [1, 1]} : vector<16x82xbf16> to vector<16x64xbf16>
    %54 = vector.extract_strided_slice %0 {offsets = [2, 0], sizes = [1, 64], strides = [1, 1]} : vector<9x64xbf16> to vector<1x64xbf16>
    %55 = vector.broadcast %54 : vector<1x64xbf16> to vector<16x64xbf16>
    %56 = arith.mulf %53, %55 : vector<16x64xbf16>
    %57 = vector.extract_strided_slice %44 {offsets = [0, 8], sizes = [16, 64], strides = [1, 1]} : vector<16x82xbf16> to vector<16x64xbf16>
    %58 = vector.extract_strided_slice %0 {offsets = [3, 0], sizes = [1, 64], strides = [1, 1]} : vector<9x64xbf16> to vector<1x64xbf16>
    %59 = vector.broadcast %58 : vector<1x64xbf16> to vector<16x64xbf16>
    %60 = arith.mulf %57, %59 : vector<16x64xbf16>
    %61 = vector.extract_strided_slice %44 {offsets = [0, 9], sizes = [16, 64], strides = [1, 1]} : vector<16x82xbf16> to vector<16x64xbf16>
    %62 = vector.extract_strided_slice %0 {offsets = [4, 0], sizes = [1, 64], strides = [1, 1]} : vector<9x64xbf16> to vector<1x64xbf16>
    %63 = vector.broadcast %62 : vector<1x64xbf16> to vector<16x64xbf16>
    %64 = arith.mulf %61, %63 : vector<16x64xbf16>
    %65 = vector.extract_strided_slice %44 {offsets = [0, 10], sizes = [16, 64], strides = [1, 1]} : vector<16x82xbf16> to vector<16x64xbf16>
    %66 = vector.extract_strided_slice %0 {offsets = [5, 0], sizes = [1, 64], strides = [1, 1]} : vector<9x64xbf16> to vector<1x64xbf16>
    %67 = vector.broadcast %66 : vector<1x64xbf16> to vector<16x64xbf16>
    %68 = arith.mulf %65, %67 : vector<16x64xbf16>
    %69 = vector.extract_strided_slice %44 {offsets = [0, 16], sizes = [16, 64], strides = [1, 1]} : vector<16x82xbf16> to vector<16x64xbf16>
    %70 = vector.extract_strided_slice %0 {offsets = [6, 0], sizes = [1, 64], strides = [1, 1]} : vector<9x64xbf16> to vector<1x64xbf16>
    %71 = vector.broadcast %70 : vector<1x64xbf16> to vector<16x64xbf16>
    %72 = arith.mulf %69, %71 : vector<16x64xbf16>
    %73 = vector.extract_strided_slice %44 {offsets = [0, 17], sizes = [16, 64], strides = [1, 1]} : vector<16x82xbf16> to vector<16x64xbf16>
    %74 = vector.extract_strided_slice %0 {offsets = [7, 0], sizes = [1, 64], strides = [1, 1]} : vector<9x64xbf16> to vector<1x64xbf16>
    %75 = vector.broadcast %74 : vector<1x64xbf16> to vector<16x64xbf16>
    %76 = arith.mulf %73, %75 : vector<16x64xbf16>
    %77 = vector.extract_strided_slice %44 {offsets = [0, 18], sizes = [16, 64], strides = [1, 1]} : vector<16x82xbf16> to vector<16x64xbf16>
    %78 = vector.extract_strided_slice %0 {offsets = [8, 0], sizes = [1, 64], strides = [1, 1]} : vector<9x64xbf16> to vector<1x64xbf16>
    %79 = vector.broadcast %78 : vector<1x64xbf16> to vector<16x64xbf16>
    %80 = arith.mulf %77, %79 : vector<16x64xbf16>
    %81 = tpu.concatenate %8, %12, %16, %20, %24, %28, %32, %36, %40, %48, %52, %56, %60, %64, %68, %72 in 0 : vector<16x64xbf16>, vector<16x64xbf16>, vector<16x64xbf16>, vector<16x64xbf16>, vector<16x64xbf16>, vector<16x64xbf16>, vector<16x64xbf16>, vector<16x64xbf16>, vector<16x64xbf16>, vector<16x64xbf16>, vector<16x64xbf16>, vector<16x64xbf16>, vector<16x64xbf16>, vector<16x64xbf16>, vector<16x64xbf16>, vector<16x64xbf16> -> vector<256x64xbf16>
    %82 = tpu.concatenate %76, %80 in 0 : vector<16x64xbf16>, vector<16x64xbf16> -> vector<32x64xbf16>
    %83 = tpu.concatenate %81, %82 in 0 : vector<256x64xbf16>, vector<32x64xbf16> -> vector<288x64xbf16>
    %c0_8 = arith.constant 0 : index
    %c0_9 = arith.constant 0 : index
    %84 = vector.load %arg4[%c0_8, %c0_9] : memref<16x288xbf16, #tpu.memory_space<vmem>>, vector<16x288xbf16>
    %cst_10 = arith.constant dense<0.000000e+00> : vector<16x64xf32>
    %85 = tpu.matmul %84, %83, %cst_10 {dimension_numbers = #tpu.dot_dimension_numbers<[1], [0], [0], [1], [0, 0, 1, 1], [], []>} : vector<16x288xbf16>, vector<288x64xbf16>, vector<16x64xf32> -> vector<16x64xf32>
    %cst_11 = arith.constant dense<0.000000e+00> : vector<16xf32>
    %86 = vector.multi_reduction <add>, %85, %cst_11 [1] : vector<16x64xf32> to vector<16xf32>
    %87 = vector.shape_cast %86 : vector<16xf32> to vector<16x1xf32>
    %cst_12 = arith.constant 6.400000e+01 : f32
    %88 = vector.broadcast %cst_12 : f32 to vector<16x1xf32>
    %89 = arith.divf %87, %88 : vector<16x1xf32>
    %90 = vector.broadcast %89 : vector<16x1xf32> to vector<16x64xf32>
    %91 = arith.subf %85, %90 : vector<16x64xf32>
    %92 = arith.mulf %91, %91 : vector<16x64xf32>
    %cst_13 = arith.constant dense<0.000000e+00> : vector<16xf32>
    %93 = vector.multi_reduction <add>, %92, %cst_13 [1] : vector<16x64xf32> to vector<16xf32>
    %94 = vector.shape_cast %93 : vector<16xf32> to vector<16x1xf32>
    %cst_14 = arith.constant 6.400000e+01 : f32
    %95 = vector.broadcast %cst_14 : f32 to vector<16x1xf32>
    %96 = arith.divf %94, %95 : vector<16x1xf32>
    %cst_15 = arith.constant 9.99999974E-6 : f32
    %97 = vector.broadcast %cst_15 : f32 to vector<16x1xf32>
    %98 = arith.addf %96, %97 : vector<16x1xf32>
    %99 = math.rsqrt %98 : vector<16x1xf32>
    %100 = vector.broadcast %99 : vector<16x1xf32> to vector<16x64xf32>
    %101 = arith.mulf %91, %100 : vector<16x64xf32>
    %cst_16 = arith.constant 0.000000e+00 : f32
    %102 = vector.broadcast %cst_16 : f32 to vector<16x64xf32>
    %103 = arith.cmpf oge, %101, %102 : vector<16x64xf32>
    %cst_17 = arith.constant 0.00999999977 : f32
    %104 = vector.broadcast %cst_17 : f32 to vector<16x64xf32>
    %105 = arith.mulf %104, %101 : vector<16x64xf32>
    %106 = arith.select %103, %101, %105 : vector<16x64xi1>, vector<16x64xf32>
    %107 = arith.truncf %106 : vector<16x64xf32> to vector<16x64xbf16>
    %c0_18 = arith.constant 0 : index
    %c0_19 = arith.constant 0 : index
    %c0_20 = arith.constant 0 : index
    %108 = vector.load %arg5[%c0_18, %c0_19, %c0_20] : memref<1x16x64xbf16, #tpu.memory_space<vmem>>, vector<1x16x64xbf16>
    %109 = vector.shape_cast %108 : vector<1x16x64xbf16> to vector<16x64xbf16>
    %110 = vector.shape_cast %107 : vector<16x64xbf16> to vector<1x16x64xbf16>
    tpu.vector_store %arg5[%c0_18, %c0_19, %c0_20], %110 {strides = array<i32>} : memref<1x16x64xbf16, #tpu.memory_space<vmem>>, vector<1x16x64xbf16>,
    return
  }
  func.func @transform_0(%arg0: i32) -> (i32, i32, i32) {
    %c0_i32 = arith.constant 0 : i32
    %c0_i32_0 = arith.constant 0 : i32
    %c0_i32_1 = arith.constant 0 : i32
    return %arg0, %c0_i32, %c0_i32_0 : i32, i32, i32
  }
  func.func @transform_1(%arg0: i32) -> (i32, i32, i32) {
    %c0_i32 = arith.constant 0 : i32
    %c0_i32_0 = arith.constant 0 : i32
    %c0_i32_1 = arith.constant 0 : i32
    return %arg0, %c0_i32, %c0_i32_0 : i32, i32, i32
  }
  func.func @transform_2(%arg0: i32) -> (i32, i32) {
    %c0_i32 = arith.constant 0 : i32
    %c0_i32_0 = arith.constant 0 : i32
    %c0_i32_1 = arith.constant 0 : i32
    return %c0_i32, %c0_i32_0 : i32, i32
  }
  func.func @transform_3(%arg0: i32) -> (i32, i32) {
    %c0_i32 = arith.constant 0 : i32
    %c0_i32_0 = arith.constant 0 : i32
    %c0_i32_1 = arith.constant 0 : i32
    return %c0_i32, %c0_i32_0 : i32, i32
  }
  func.func @transform_4(%arg0: i32) -> (i32, i32, i32) {
    %c0_i32 = arith.constant 0 : i32
    %c0_i32_0 = arith.constant 0 : i32
    %c0_i32_1 = arith.constant 0 : i32
    return %arg0, %c0_i32, %c0_i32_0 : i32, i32, i32
  }
}

module attributes {stable_mosaic.version = 11 : i64} {
  func.func @kernel(%arg0: i32, %arg1: memref<1x8x256xbf16, #tpu.memory_space<vmem>>, %arg2: memref<1x8x256xbf16, #tpu.memory_space<vmem>>, %arg3: memref<9x256xbf16, #tpu.memory_space<vmem>>, %arg4: memref<8x144xbf16, #tpu.memory_space<vmem>>, %arg5: memref<1x8x256xbf16, #tpu.memory_space<vmem>>) attributes {dimension_semantics = [#tpu.dimension_semantics<parallel>], iteration_bounds = array<i64: 2>, scalar_prefetch = 0 : i64, scratch_operands = 0 : i64, tpu.core_type = #tpu.core_type<tc>, window_params = [{transform_indices = @transform_0, window_bounds = array<i64: 1, 8, 256>}, {transform_indices = @transform_1, window_bounds = array<i64: 1, 8, 256>}, {pipeline_mode = #tpu.pipeline_mode<synchronous>, transform_indices = @transform_2, window_bounds = array<i64: 9, 256>}, {pipeline_mode = #tpu.pipeline_mode<synchronous>, transform_indices = @transform_3, window_bounds = array<i64: 8, 144>}, {transform_indices = @transform_4, window_bounds = array<i64: 1, 8, 256>}]} {
    %c0 = arith.constant 0 : index
    %c0_0 = arith.constant 0 : index
    %0 = vector.load %arg3[%c0, %c0_0] : memref<9x256xbf16, #tpu.memory_space<vmem>>, vector<9x256xbf16>
    %c0_1 = arith.constant 0 : index
    %c0_2 = arith.constant 0 : index
    %c0_3 = arith.constant 0 : index
    %1 = vector.load %arg1[%c0_1, %c0_2, %c0_3] : memref<1x8x256xbf16, #tpu.memory_space<vmem>>, vector<1x8x256xbf16>
    %2 = vector.shape_cast %1 : vector<1x8x256xbf16> to vector<8x256xbf16>
    %cst = arith.constant 0.000000e+00 : bf16
    %3 = vector.broadcast %cst : bf16 to vector<8x17xbf16>
    %4 = tpu.concatenate %3, %2, %3 in 1 : vector<8x17xbf16>, vector<8x256xbf16>, vector<8x17xbf16> -> vector<8x290xbf16>
    %5 = vector.extract_strided_slice %4 {offsets = [0, 0], sizes = [8, 256], strides = [1, 1]} : vector<8x290xbf16> to vector<8x256xbf16>
    %6 = vector.extract_strided_slice %0 {offsets = [0, 0], sizes = [1, 256], strides = [1, 1]} : vector<9x256xbf16> to vector<1x256xbf16>
    %7 = vector.broadcast %6 : vector<1x256xbf16> to vector<8x256xbf16>
    %8 = arith.mulf %5, %7 : vector<8x256xbf16>
    %9 = vector.extract_strided_slice %4 {offsets = [0, 1], sizes = [8, 256], strides = [1, 1]} : vector<8x290xbf16> to vector<8x256xbf16>
    %10 = vector.extract_strided_slice %0 {offsets = [1, 0], sizes = [1, 256], strides = [1, 1]} : vector<9x256xbf16> to vector<1x256xbf16>
    %11 = vector.broadcast %10 : vector<1x256xbf16> to vector<8x256xbf16>
    %12 = arith.mulf %9, %11 : vector<8x256xbf16>
    %13 = vector.extract_strided_slice %4 {offsets = [0, 2], sizes = [8, 256], strides = [1, 1]} : vector<8x290xbf16> to vector<8x256xbf16>
    %14 = vector.extract_strided_slice %0 {offsets = [2, 0], sizes = [1, 256], strides = [1, 1]} : vector<9x256xbf16> to vector<1x256xbf16>
    %15 = vector.broadcast %14 : vector<1x256xbf16> to vector<8x256xbf16>
    %16 = arith.mulf %13, %15 : vector<8x256xbf16>
    %17 = vector.extract_strided_slice %4 {offsets = [0, 16], sizes = [8, 256], strides = [1, 1]} : vector<8x290xbf16> to vector<8x256xbf16>
    %18 = vector.extract_strided_slice %0 {offsets = [3, 0], sizes = [1, 256], strides = [1, 1]} : vector<9x256xbf16> to vector<1x256xbf16>
    %19 = vector.broadcast %18 : vector<1x256xbf16> to vector<8x256xbf16>
    %20 = arith.mulf %17, %19 : vector<8x256xbf16>
    %21 = vector.extract_strided_slice %4 {offsets = [0, 17], sizes = [8, 256], strides = [1, 1]} : vector<8x290xbf16> to vector<8x256xbf16>
    %22 = vector.extract_strided_slice %0 {offsets = [4, 0], sizes = [1, 256], strides = [1, 1]} : vector<9x256xbf16> to vector<1x256xbf16>
    %23 = vector.broadcast %22 : vector<1x256xbf16> to vector<8x256xbf16>
    %24 = arith.mulf %21, %23 : vector<8x256xbf16>
    %25 = vector.extract_strided_slice %4 {offsets = [0, 18], sizes = [8, 256], strides = [1, 1]} : vector<8x290xbf16> to vector<8x256xbf16>
    %26 = vector.extract_strided_slice %0 {offsets = [5, 0], sizes = [1, 256], strides = [1, 1]} : vector<9x256xbf16> to vector<1x256xbf16>
    %27 = vector.broadcast %26 : vector<1x256xbf16> to vector<8x256xbf16>
    %28 = arith.mulf %25, %27 : vector<8x256xbf16>
    %29 = vector.extract_strided_slice %4 {offsets = [0, 32], sizes = [8, 256], strides = [1, 1]} : vector<8x290xbf16> to vector<8x256xbf16>
    %30 = vector.extract_strided_slice %0 {offsets = [6, 0], sizes = [1, 256], strides = [1, 1]} : vector<9x256xbf16> to vector<1x256xbf16>
    %31 = vector.broadcast %30 : vector<1x256xbf16> to vector<8x256xbf16>
    %32 = arith.mulf %29, %31 : vector<8x256xbf16>
    %33 = vector.extract_strided_slice %4 {offsets = [0, 33], sizes = [8, 256], strides = [1, 1]} : vector<8x290xbf16> to vector<8x256xbf16>
    %34 = vector.extract_strided_slice %0 {offsets = [7, 0], sizes = [1, 256], strides = [1, 1]} : vector<9x256xbf16> to vector<1x256xbf16>
    %35 = vector.broadcast %34 : vector<1x256xbf16> to vector<8x256xbf16>
    %36 = arith.mulf %33, %35 : vector<8x256xbf16>
    %37 = vector.extract_strided_slice %4 {offsets = [0, 34], sizes = [8, 256], strides = [1, 1]} : vector<8x290xbf16> to vector<8x256xbf16>
    %38 = vector.extract_strided_slice %0 {offsets = [8, 0], sizes = [1, 256], strides = [1, 1]} : vector<9x256xbf16> to vector<1x256xbf16>
    %39 = vector.broadcast %38 : vector<1x256xbf16> to vector<8x256xbf16>
    %40 = arith.mulf %37, %39 : vector<8x256xbf16>
    %c0_4 = arith.constant 0 : index
    %c0_5 = arith.constant 0 : index
    %c0_6 = arith.constant 0 : index
    %41 = vector.load %arg2[%c0_4, %c0_5, %c0_6] : memref<1x8x256xbf16, #tpu.memory_space<vmem>>, vector<1x8x256xbf16>
    %42 = vector.shape_cast %41 : vector<1x8x256xbf16> to vector<8x256xbf16>
    %cst_7 = arith.constant 0.000000e+00 : bf16
    %43 = vector.broadcast %cst_7 : bf16 to vector<8x17xbf16>
    %44 = tpu.concatenate %43, %42, %43 in 1 : vector<8x17xbf16>, vector<8x256xbf16>, vector<8x17xbf16> -> vector<8x290xbf16>
    %45 = vector.extract_strided_slice %44 {offsets = [0, 0], sizes = [8, 256], strides = [1, 1]} : vector<8x290xbf16> to vector<8x256xbf16>
    %46 = vector.extract_strided_slice %0 {offsets = [0, 0], sizes = [1, 256], strides = [1, 1]} : vector<9x256xbf16> to vector<1x256xbf16>
    %47 = vector.broadcast %46 : vector<1x256xbf16> to vector<8x256xbf16>
    %48 = arith.mulf %45, %47 : vector<8x256xbf16>
    %49 = vector.extract_strided_slice %44 {offsets = [0, 1], sizes = [8, 256], strides = [1, 1]} : vector<8x290xbf16> to vector<8x256xbf16>
    %50 = vector.extract_strided_slice %0 {offsets = [1, 0], sizes = [1, 256], strides = [1, 1]} : vector<9x256xbf16> to vector<1x256xbf16>
    %51 = vector.broadcast %50 : vector<1x256xbf16> to vector<8x256xbf16>
    %52 = arith.mulf %49, %51 : vector<8x256xbf16>
    %53 = vector.extract_strided_slice %44 {offsets = [0, 2], sizes = [8, 256], strides = [1, 1]} : vector<8x290xbf16> to vector<8x256xbf16>
    %54 = vector.extract_strided_slice %0 {offsets = [2, 0], sizes = [1, 256], strides = [1, 1]} : vector<9x256xbf16> to vector<1x256xbf16>
    %55 = vector.broadcast %54 : vector<1x256xbf16> to vector<8x256xbf16>
    %56 = arith.mulf %53, %55 : vector<8x256xbf16>
    %57 = vector.extract_strided_slice %44 {offsets = [0, 16], sizes = [8, 256], strides = [1, 1]} : vector<8x290xbf16> to vector<8x256xbf16>
    %58 = vector.extract_strided_slice %0 {offsets = [3, 0], sizes = [1, 256], strides = [1, 1]} : vector<9x256xbf16> to vector<1x256xbf16>
    %59 = vector.broadcast %58 : vector<1x256xbf16> to vector<8x256xbf16>
    %60 = arith.mulf %57, %59 : vector<8x256xbf16>
    %61 = vector.extract_strided_slice %44 {offsets = [0, 17], sizes = [8, 256], strides = [1, 1]} : vector<8x290xbf16> to vector<8x256xbf16>
    %62 = vector.extract_strided_slice %0 {offsets = [4, 0], sizes = [1, 256], strides = [1, 1]} : vector<9x256xbf16> to vector<1x256xbf16>
    %63 = vector.broadcast %62 : vector<1x256xbf16> to vector<8x256xbf16>
    %64 = arith.mulf %61, %63 : vector<8x256xbf16>
    %65 = vector.extract_strided_slice %44 {offsets = [0, 18], sizes = [8, 256], strides = [1, 1]} : vector<8x290xbf16> to vector<8x256xbf16>
    %66 = vector.extract_strided_slice %0 {offsets = [5, 0], sizes = [1, 256], strides = [1, 1]} : vector<9x256xbf16> to vector<1x256xbf16>
    %67 = vector.broadcast %66 : vector<1x256xbf16> to vector<8x256xbf16>
    %68 = arith.mulf %65, %67 : vector<8x256xbf16>
    %69 = vector.extract_strided_slice %44 {offsets = [0, 32], sizes = [8, 256], strides = [1, 1]} : vector<8x290xbf16> to vector<8x256xbf16>
    %70 = vector.extract_strided_slice %0 {offsets = [6, 0], sizes = [1, 256], strides = [1, 1]} : vector<9x256xbf16> to vector<1x256xbf16>
    %71 = vector.broadcast %70 : vector<1x256xbf16> to vector<8x256xbf16>
    %72 = arith.mulf %69, %71 : vector<8x256xbf16>
    %73 = vector.extract_strided_slice %44 {offsets = [0, 33], sizes = [8, 256], strides = [1, 1]} : vector<8x290xbf16> to vector<8x256xbf16>
    %74 = vector.extract_strided_slice %0 {offsets = [7, 0], sizes = [1, 256], strides = [1, 1]} : vector<9x256xbf16> to vector<1x256xbf16>
    %75 = vector.broadcast %74 : vector<1x256xbf16> to vector<8x256xbf16>
    %76 = arith.mulf %73, %75 : vector<8x256xbf16>
    %77 = vector.extract_strided_slice %44 {offsets = [0, 34], sizes = [8, 256], strides = [1, 1]} : vector<8x290xbf16> to vector<8x256xbf16>
    %78 = vector.extract_strided_slice %0 {offsets = [8, 0], sizes = [1, 256], strides = [1, 1]} : vector<9x256xbf16> to vector<1x256xbf16>
    %79 = vector.broadcast %78 : vector<1x256xbf16> to vector<8x256xbf16>
    %80 = arith.mulf %77, %79 : vector<8x256xbf16>
    %81 = tpu.concatenate %8, %12, %16, %20, %24, %28, %32, %36, %40, %48, %52, %56, %60, %64, %68, %72 in 0 : vector<8x256xbf16>, vector<8x256xbf16>, vector<8x256xbf16>, vector<8x256xbf16>, vector<8x256xbf16>, vector<8x256xbf16>, vector<8x256xbf16>, vector<8x256xbf16>, vector<8x256xbf16>, vector<8x256xbf16>, vector<8x256xbf16>, vector<8x256xbf16>, vector<8x256xbf16>, vector<8x256xbf16>, vector<8x256xbf16>, vector<8x256xbf16> -> vector<128x256xbf16>
    %82 = tpu.concatenate %76, %80 in 0 : vector<8x256xbf16>, vector<8x256xbf16> -> vector<16x256xbf16>
    %83 = tpu.concatenate %81, %82 in 0 : vector<128x256xbf16>, vector<16x256xbf16> -> vector<144x256xbf16>
    %c0_8 = arith.constant 0 : index
    %c0_9 = arith.constant 0 : index
    %84 = vector.load %arg4[%c0_8, %c0_9] : memref<8x144xbf16, #tpu.memory_space<vmem>>, vector<8x144xbf16>
    %cst_10 = arith.constant dense<0.000000e+00> : vector<8x256xf32>
    %85 = tpu.matmul %84, %83, %cst_10 {dimension_numbers = #tpu.dot_dimension_numbers<[1], [0], [0], [1], [0, 0, 1, 1], [], []>} : vector<8x144xbf16>, vector<144x256xbf16>, vector<8x256xf32> -> vector<8x256xf32>
    %cst_11 = arith.constant dense<0.000000e+00> : vector<8xf32>
    %86 = vector.multi_reduction <add>, %85, %cst_11 [1] : vector<8x256xf32> to vector<8xf32>
    %87 = vector.shape_cast %86 : vector<8xf32> to vector<8x1xf32>
    %cst_12 = arith.constant 2.560000e+02 : f32
    %88 = vector.broadcast %cst_12 : f32 to vector<8x1xf32>
    %89 = arith.divf %87, %88 : vector<8x1xf32>
    %90 = vector.broadcast %89 : vector<8x1xf32> to vector<8x256xf32>
    %91 = arith.subf %85, %90 : vector<8x256xf32>
    %92 = arith.mulf %91, %91 : vector<8x256xf32>
    %cst_13 = arith.constant dense<0.000000e+00> : vector<8xf32>
    %93 = vector.multi_reduction <add>, %92, %cst_13 [1] : vector<8x256xf32> to vector<8xf32>
    %94 = vector.shape_cast %93 : vector<8xf32> to vector<8x1xf32>
    %cst_14 = arith.constant 2.560000e+02 : f32
    %95 = vector.broadcast %cst_14 : f32 to vector<8x1xf32>
    %96 = arith.divf %94, %95 : vector<8x1xf32>
    %cst_15 = arith.constant 9.99999974E-6 : f32
    %97 = vector.broadcast %cst_15 : f32 to vector<8x1xf32>
    %98 = arith.addf %96, %97 : vector<8x1xf32>
    %99 = math.rsqrt %98 : vector<8x1xf32>
    %100 = vector.broadcast %99 : vector<8x1xf32> to vector<8x256xf32>
    %101 = arith.mulf %91, %100 : vector<8x256xf32>
    %cst_16 = arith.constant 0.000000e+00 : f32
    %102 = vector.broadcast %cst_16 : f32 to vector<8x256xf32>
    %103 = arith.cmpf oge, %101, %102 : vector<8x256xf32>
    %cst_17 = arith.constant 0.00999999977 : f32
    %104 = vector.broadcast %cst_17 : f32 to vector<8x256xf32>
    %105 = arith.mulf %104, %101 : vector<8x256xf32>
    %106 = arith.select %103, %101, %105 : vector<8x256xi1>, vector<8x256xf32>
    %107 = arith.truncf %106 : vector<8x256xf32> to vector<8x256xbf16>
    %c0_18 = arith.constant 0 : index
    %c0_19 = arith.constant 0 : index
    %c0_20 = arith.constant 0 : index
    %108 = vector.load %arg5[%c0_18, %c0_19, %c0_20] : memref<1x8x256xbf16, #tpu.memory_space<vmem>>, vector<1x8x256xbf16>
    %109 = vector.shape_cast %108 : vector<1x8x256xbf16> to vector<8x256xbf16>
    %110 = vector.shape_cast %107 : vector<8x256xbf16> to vector<1x8x256xbf16>
    tpu.vector_store %arg5[%c0_18, %c0_19, %c0_20], %110 {strides = array<i32>} : memref<1x8x256xbf16, #tpu.memory_space<vmem>>, vector<1x8x256xbf16>,
    return
  }
  func.func @transform_0(%arg0: i32) -> (i32, i32, i32) {
    %c0_i32 = arith.constant 0 : i32
    %c0_i32_0 = arith.constant 0 : i32
    %c0_i32_1 = arith.constant 0 : i32
    return %arg0, %c0_i32, %c0_i32_0 : i32, i32, i32
  }
  func.func @transform_1(%arg0: i32) -> (i32, i32, i32) {
    %c0_i32 = arith.constant 0 : i32
    %c0_i32_0 = arith.constant 0 : i32
    %c0_i32_1 = arith.constant 0 : i32
    return %arg0, %c0_i32, %c0_i32_0 : i32, i32, i32
  }
  func.func @transform_2(%arg0: i32) -> (i32, i32) {
    %c0_i32 = arith.constant 0 : i32
    %c0_i32_0 = arith.constant 0 : i32
    %c0_i32_1 = arith.constant 0 : i32
    return %c0_i32, %c0_i32_0 : i32, i32
  }
  func.func @transform_3(%arg0: i32) -> (i32, i32) {
    %c0_i32 = arith.constant 0 : i32
    %c0_i32_0 = arith.constant 0 : i32
    %c0_i32_1 = arith.constant 0 : i32
    return %c0_i32, %c0_i32_0 : i32, i32
  }
  func.func @transform_4(%arg0: i32) -> (i32, i32, i32) {
    %c0_i32 = arith.constant 0 : i32
    %c0_i32_0 = arith.constant 0 : i32
    %c0_i32_1 = arith.constant 0 : i32
    return %arg0, %c0_i32, %c0_i32_0 : i32, i32, i32
  }
}

module attributes {stable_mosaic.version = 11 : i64} {
  func.func @_chan_matmul_bias_kernel(%arg0: i32, %arg1: memref<1x8x256xbf16, #tpu.memory_space<vmem>>, %arg2: memref<3x8xbf16, #tpu.memory_space<vmem>>, %arg3: memref<3x1xf32, #tpu.memory_space<vmem>>, %arg4: memref<1x3x256xf32, #tpu.memory_space<vmem>>) attributes {dimension_semantics = [#tpu.dimension_semantics<parallel>], iteration_bounds = array<i64: 2>, scalar_prefetch = 0 : i64, scratch_operands = 0 : i64, tpu.core_type = #tpu.core_type<tc>, window_params = [{transform_indices = @transform_0, window_bounds = array<i64: 1, 8, 256>}, {pipeline_mode = #tpu.pipeline_mode<synchronous>, transform_indices = @transform_1, window_bounds = array<i64: 3, 8>}, {pipeline_mode = #tpu.pipeline_mode<synchronous>, transform_indices = @transform_2, window_bounds = array<i64: 3, 1>}, {transform_indices = @transform_3, window_bounds = array<i64: 1, 3, 256>}]} {
    %c0 = arith.constant 0 : index
    %c0_0 = arith.constant 0 : index
    %0 = vector.load %arg2[%c0, %c0_0] : memref<3x8xbf16, #tpu.memory_space<vmem>>, vector<3x8xbf16>
    %c0_1 = arith.constant 0 : index
    %c0_2 = arith.constant 0 : index
    %c0_3 = arith.constant 0 : index
    %1 = vector.load %arg1[%c0_1, %c0_2, %c0_3] : memref<1x8x256xbf16, #tpu.memory_space<vmem>>, vector<1x8x256xbf16>
    %2 = vector.shape_cast %1 : vector<1x8x256xbf16> to vector<8x256xbf16>
    %cst = arith.constant dense<0.000000e+00> : vector<3x256xf32>
    %3 = tpu.matmul %0, %2, %cst {dimension_numbers = #tpu.dot_dimension_numbers<[1], [0], [0], [1], [0, 0, 1, 1], [], []>} : vector<3x8xbf16>, vector<8x256xbf16>, vector<3x256xf32> -> vector<3x256xf32>
    %c0_4 = arith.constant 0 : index
    %c0_5 = arith.constant 0 : index
    %4 = vector.load %arg3[%c0_4, %c0_5] : memref<3x1xf32, #tpu.memory_space<vmem>>, vector<3x1xf32>
    %5 = vector.broadcast %4 : vector<3x1xf32> to vector<3x256xf32>
    %6 = arith.addf %3, %5 : vector<3x256xf32>
    %c0_6 = arith.constant 0 : index
    %c0_7 = arith.constant 0 : index
    %c0_8 = arith.constant 0 : index
    %7 = vector.load %arg4[%c0_6, %c0_7, %c0_8] : memref<1x3x256xf32, #tpu.memory_space<vmem>>, vector<1x3x256xf32>
    %8 = vector.shape_cast %7 : vector<1x3x256xf32> to vector<3x256xf32>
    %9 = vector.shape_cast %6 : vector<3x256xf32> to vector<1x3x256xf32>
    tpu.vector_store %arg4[%c0_6, %c0_7, %c0_8], %9 {strides = array<i32>} : memref<1x3x256xf32, #tpu.memory_space<vmem>>, vector<1x3x256xf32>,
    return
  }
  func.func @transform_0(%arg0: i32) -> (i32, i32, i32) {
    %c0_i32 = arith.constant 0 : i32
    %c0_i32_0 = arith.constant 0 : i32
    %c0_i32_1 = arith.constant 0 : i32
    return %arg0, %c0_i32, %c0_i32_0 : i32, i32, i32
  }
  func.func @transform_1(%arg0: i32) -> (i32, i32) {
    %c0_i32 = arith.constant 0 : i32
    %c0_i32_0 = arith.constant 0 : i32
    %c0_i32_1 = arith.constant 0 : i32
    return %c0_i32, %c0_i32_0 : i32, i32
  }
  func.func @transform_2(%arg0: i32) -> (i32, i32) {
    %c0_i32 = arith.constant 0 : i32
    %c0_i32_0 = arith.constant 0 : i32
    %c0_i32_1 = arith.constant 0 : i32
    return %c0_i32, %c0_i32_0 : i32, i32
  }
  func.func @transform_3(%arg0: i32) -> (i32, i32, i32) {
    %c0_i32 = arith.constant 0 : i32
    %c0_i32_0 = arith.constant 0 : i32
    %c0_i32_1 = arith.constant 0 : i32
    return %arg0, %c0_i32, %c0_i32_0 : i32, i32, i32
  }
}

</mosaic_0001>

<llo_original>
// kernel: _lambda_.13
$region0: #{_lambda_.13}
  #allocation0 [shape = 'u32[]', space=smem, size = 0x4, offset = 0x4, fixed_abs, tag = 'smem constant byte address 0x4 - core index']
  #allocation1 [shape = 'u32[144,128]{1,0:T(1,128)}', space=vmem, size = 0x12000, scoped, tag = 'internal scratch']
  %s0 = inlined_call_operand.vmem [shape: bf16[2,8,256], index: 0, kind: input, shape index: {}]
  %s1 = inlined_call_operand.vmem [shape: bf16[9,256], index: 1, kind: input, shape index: {}]
  %s2 = inlined_call_operand.vmem [shape: bf16[8,72], index: 2, kind: input, shape index: {}]
  %s3 = inlined_call_operand.vmem [shape: bf16[2,8,256], index: 3, kind: output, shape index: {}]
  %s4 = sld [smem:[#allocation0]]
  $region45: #{_lambda_.13} parent=0
    _
  %s6 = ssub.s32 1, %s4
  %s7 = scalar_select 0, %s6, %s4
  loop: start=0, step=1, limit=4
  $region2: #{_lambda_.13} parent=0 // loop_pre_header
    _
  $region3: #{_lambda_.13} parent=0 // loop_header
    %s9 = sphi 0, %s13
    %p10 = scmp.ge.s32.totalorder %s9, 4
    %s19 = sphi 0, %s21
    %s22 = sphi 0, %s19
    %s23 = sphi 0, %s22
    %s39 = sphi 0, %s23
    %s43 = sphi 0, %s43
    %s45 = sphi 0, %s43
    %s46 = sphi 0, %s45
    %s60 = sphi 0, %s46
    %s64 = sphi 0, %s64
    %s66 = sphi 0, %s64
    %s67 = sphi 0, %s66
    %s81 = sphi 0, %s67
    %s87 = sphi 0, %s89
    %s90 = sphi 0, %s87
    %s91 = sphi 0, %s90
    %s107 = sphi 0, %s91
  $region4: #{_lambda_.13} parent=0 // loop_header_branch
    %12 = sbr.rel (%p10) target = $region8
  $region5: #{_lambda_.13} parent=0 // loop_body
    %s14 = ssub.s32 %s9, 1
    %s15 = ssub.s32 %s9, 2
    %s16 = sadd.s32 %s9, 1
    %s17 = ssub.s32 %s9, %s16
    %p18 = scmp.eq.s32.totalorder %s17, 0
    %s20 = sadd.s32 %s19, 1
    %s21 = scalar_select %p18, %s19, %s20
    %p24 = pneg %p18
    %p25 = scmp.eq.s32.totalorder %s9, 1
    %p26 = por %p24, %p25
    %p27 = scmp.ne.s32.totalorder %s19, %s22
    %p28 = scmp.eq.s32.totalorder %s9, 0
    %p29 = por %p27, %p28
    %p30 = scmp.ne.s32.totalorder %s19, %s22
    %p31 = scmp.eq.s32.totalorder %s14, 1
    %p32 = por %p30, %p31
    %p33 = scmp.ne.s32.totalorder %s22, %s23
    %p34 = scmp.eq.s32.totalorder %s14, 0
    %p35 = por %p33, %p34
    %p36 = scmp.ne.s32.totalorder %s22, %s23
    %p37 = scmp.eq.s32.totalorder %s15, 1
    %p38 = por %p36, %p37
    %p40 = scmp.ne.s32.totalorder %s23, %s39
    %p41 = scmp.eq.s32.totalorder %s15, 0
    %p42 = por %p40, %p41
    %s44 = sadd.s32 %s43, 1
    %p47 = scmp.eq.s32.totalorder %s9, 1
    %p48 = scmp.ne.s32.totalorder %s43, %s45
    %p49 = scmp.eq.s32.totalorder %s9, 0
    %p50 = por %p48, %p49
    %p51 = scmp.ne.s32.totalorder %s43, %s45
    %p52 = scmp.eq.s32.totalorder %s14, 1
    %p53 = por %p51, %p52
    %p54 = scmp.ne.s32.totalorder %s45, %s46
    %p55 = scmp.eq.s32.totalorder %s14, 0
    %p56 = por %p54, %p55
    %p57 = scmp.ne.s32.totalorder %s45, %s46
    %p58 = scmp.eq.s32.totalorder %s15, 1
    %p59 = por %p57, %p58
    %p61 = scmp.ne.s32.totalorder %s46, %s60
    %p62 = scmp.eq.s32.totalorder %s15, 0
    %p63 = por %p61, %p62
    %s65 = sadd.s32 %s64, 1
    %p68 = scmp.eq.s32.totalorder %s9, 1
    %p69 = scmp.ne.s32.totalorder %s64, %s66
    %p70 = scmp.eq.s32.totalorder %s9, 0
    %p71 = por %p69, %p70
    %p72 = scmp.ne.s32.totalorder %s64, %s66
    %p73 = scmp.eq.s32.totalorder %s14, 1
    %p74 = por %p72, %p73
    %p75 = scmp.ne.s32.totalorder %s66, %s67
    %p76 = scmp.eq.s32.totalorder %s14, 0
    %p77 = por %p75, %p76
    %p78 = scmp.ne.s32.totalorder %s66, %s67
    %p79 = scmp.eq.s32.totalorder %s15, 1
    %p80 = por %p78, %p79
    %p82 = scmp.ne.s32.totalorder %s67, %s81
    %p83 = scmp.eq.s32.totalorder %s15, 0
    %p84 = por %p82, %p83
    %s85 = ssub.s32 %s9, %s16
    %p86 = scmp.eq.s32.totalorder %s85, 0
    %s88 = sadd.s32 %s87, 1
    %s89 = scalar_select %p86, %s87, %s88
    %p92 = pneg %p86
    %p93 = scmp.eq.s32.totalorder %s9, 1
    %p94 = por %p92, %p93
    %p95 = scmp.ne.s32.totalorder %s87, %s90
    %p96 = scmp.eq.s32.totalorder %s9, 0
    %p97 = por %p95, %p96
    %p98 = scmp.ne.s32.totalorder %s87, %s90
    %p99 = scmp.eq.s32.totalorder %s14, 1
    %p100 = por %p98, %p99
    %p101 = scmp.ne.s32.totalorder %s90, %s91
    %p102 = scmp.eq.s32.totalorder %s14, 0
    %p103 = por %p101, %p102
    %p104 = scmp.ne.s32.totalorder %s90, %s91
    %p105 = scmp.eq.s32.totalorder %s15, 1
    %p106 = por %p104, %p105
    %p108 = scmp.ne.s32.totalorder %s91, %s107
    %p109 = scmp.eq.s32.totalorder %s15, 0
    %p110 = por %p108, %p109
    %p111 = scmp.le.s32.totalorder 1, %s9
    %p112 = scmp.lt.s32.totalorder %s9, 3
    %p113 = pnand %p111, %p112
    %p114 = pneg %p113
    // Predicated region
    $region9: #{_lambda_.13} parent=5 // pred_check
      _
    $region10: #{_lambda_.13} parent=5 // pred_check_branch
      %116 = sbr.rel (%p113) target = $region12
    $region11: #{_lambda_.13} parent=5 // pred_region
      %s117 = ssub.s32 %s9, 1
      // Predicated region
      $region13: #{_lambda_.13} parent=11 // pred_check
        %p118 = pneg %p56
      $region14: #{_lambda_.13} parent=11 // pred_check_branch
        %120 = sbr.rel (%p118) target = $region16
      $region15: #{_lambda_.13} parent=11 // pred_region
        _
      $region16: #{_lambda_.13} parent=11 // pred_fallthru
        _
      // Predicated region
      $region17: #{_lambda_.13} parent=11 // pred_check
        %p121 = pneg %p77
      $region18: #{_lambda_.13} parent=11 // pred_check_branch
        %123 = sbr.rel (%p121) target = $region20
      $region19: #{_lambda_.13} parent=11 // pred_region
        _
      $region20: #{_lambda_.13} parent=11 // pred_fallthru
        _
    $region12: #{_lambda_.13} parent=5 // pred_fallthru
      _
    %p124 = scmp.lt.s32.totalorder %s9, 2
    // Predicated region
    $region21: #{_lambda_.13} parent=5 // pred_check
      %p125 = pneg %p124
    $region22: #{_lambda_.13} parent=5 // pred_check_branch
      %127 = sbr.rel (%p125) target = $region24
    $region23: #{_lambda_.13} parent=5 // pred_region
      // Predicated region
      $region25: #{_lambda_.13} parent=23 // pred_check
        %p128 = pneg %p29
      $region26: #{_lambda_.13} parent=23 // pred_check_branch
        %130 = sbr.rel (%p128) target = $region28
      $region27: #{_lambda_.13} parent=23 // pred_region
        %p131 = scmp.lt.s32.totalorder %s9, 1
        %s132 = scalar_select %p131, %s9, 1
        %s133 = smul.addr %s132, 2
        %s134 = smul.addr %s133, 4
        %s135 = scalar_lea.vmem %s0, %s134
      $region28: #{_lambda_.13} parent=23 // pred_fallthru
        _
    $region24: #{_lambda_.13} parent=5 // pred_fallthru
      _
    %p136 = scmp.le.s32.totalorder 1, %s9
    %p137 = scmp.lt.s32.totalorder %s9, 3
    %p138 = pnand %p136, %p137
    %p139 = pneg %p138
    // Predicated region
    $region29: #{_lambda_.13} parent=5 // pred_check
      _
    $region30: #{_lambda_.13} parent=5 // pred_check_branch
      %141 = sbr.rel (%p138) target = $region32
    $region31: #{_lambda_.13} parent=5 // pred_region
      %s142 = ssub.s32 %s9, 1
      %p143 = scmp.lt.s32.totalorder %s14, 1
      %s144 = scalar_select %p143, %s14, 1
      %s145 = smul.addr %s144, 2
      %s146 = smul.addr %s145, 4
      %s147 = scalar_lea.vmem %s0, %s146
      %p148 = pneg %p35
      %p149 = pneg %p32
      %p150 = pneg %p56
      %p151 = pneg %p53
      %p152 = pneg %p77
      %p153 = pneg %p74
      %p154 = pneg %p103
      %p155 = pneg %p100
      %p156 = scmp.lt.s32.totalorder %s14, 1
      %s157 = scalar_select %p156, %s14, 1
      %s158 = smul.addr %s157, 2
      %s159 = smul.addr %s158, 4
      %s160 = scalar_lea.vmem %s3, %s159
      %p161 = scmp.lt.s32.totalorder %s14, 1
      %s162 = scalar_select %p161, %s14, 1
      %s163 = smul.addr %s162, 2
      %s164 = smul.addr %s163, 4
      %s165 = scalar_lea.vmem %s0, %s164
      %p166 = scmp.lt.s32.totalorder %s14, 1
      %s167 = scalar_select %p166, %s14, 1
      %s168 = smul.addr %s167, 2
      %s169 = smul.addr %s168, 4
      %s170 = scalar_lea.vmem %s3, %s169
      %v172 = vld [vmem:[%s1] sm:$0xff]
      %v173 = vld [vmem:[%s1 + $0x8] sm:$0x11]
      %v174 = vld [vmem:[%s165] sm:$0xff]
      %v176 = vunpack.c.l.b16 %v174
      %v177 = vunpack.c.h.b16 %v174
      %v178 = vpack.c.b16 %v176, %v176
      %v179 = vpack.c.b16 %v177, %v177
      %180 = vrot.lane.b32.xlu0 %v178, 17
      %v181 = vpop.permute.xlu0 %180
      %182 = vrot.lane.b32.xlu0 %v179, 17
      %v183 = vpop.permute.xlu0 %182
      %vm184 = vcmask 138240
      %v185 = vsel %vm184, %v181, %v183
      %vm187 = vcmask 138240
      %v190 = vsel %vm187, 0, %v181
      %v193 = vsel %vm187, %v183, 0
      %v196 = vunpack.c.l.b16 %v172
      %v197 = vunpack.c.h.b16 %v172
      %v198 = vpack.c.b16 %v196, %v196
      %v199 = vpack.c.b16 %v197, %v197
      %v201 = vpack.i.b16 %v198, %v198
      %v203 = vlaneseq
      %v204 = vshrl.u32 %v203, 7
      %v205 = vsub.s32 0, %v204
      %v206 = vrot.slane %v201, %v205
      %v208 = vpack.i.b16 %v199, %v199
      %v210 = vlaneseq
      %v211 = vshrl.u32 %v210, 7
      %v212 = vsub.s32 0, %v211
      %v213 = vrot.slane %v208, %v212
      %v214 = vmul.bf16 %v190, %v206
      %v215 = vmul.bf16 %v185, %v213
      %v216 = vshrl.u32 %v198, 16
      %v217 = vpack.i.b16 %v216, %v216
      %v219 = vlaneseq
      %v220 = vshrl.u32 %v219, 7
      %v221 = vsub.s32 0, %v220
      %v222 = vrot.slane %v217, %v221
      %v223 = vshrl.u32 %v199, 16
      %v224 = vpack.i.b16 %v223, %v223
      %v226 = vlaneseq
      %v227 = vshrl.u32 %v226, 7
      %v228 = vsub.s32 0, %v227
      %v229 = vrot.slane %v224, %v228
      %232 = vrot.lane.b32.xlu0 %v222, 1
      %v233 = vpop.permute.xlu0 %232
      %234 = vrot.lane.b32.xlu0 %v229, 1
      %v235 = vpop.permute.xlu0 %234
      %vm236 = vcmask 7168
      %v237 = vsel %vm236, %v233, %v235
      %v241 = vmul.bf16 %v190, %v233
      %v242 = vmul.bf16 %v185, %v237
      %v243 = vmul.bf16 %v193, %v235
      %v244 = vlaneseq
      %v245 = vshrl.u32 %v244, 7
      %v246 = vsub.s32 1, %v245
      %v247 = vrot.slane %v201, %v246
      %v248 = vlaneseq
      %v249 = vshrl.u32 %v248, 7
      %v250 = vsub.s32 1, %v249
      %v251 = vrot.slane %v208, %v250
      %254 = vrot.lane.b32.xlu0 %v247, 2
      %v255 = vpop.permute.xlu0 %254
      %256 = vrot.lane.b32.xlu0 %v251, 2
      %v257 = vpop.permute.xlu0 %256
      %vm258 = vcmask 15360
      %v259 = vsel %vm258, %v255, %v257
      %v263 = vmul.bf16 %v190, %v255
      %v264 = vmul.bf16 %v185, %v259
      %v265 = vmul.bf16 %v193, %v257
      %v266 = vlaneseq
      %v267 = vshrl.u32 %v266, 7
      %v268 = vsub.s32 1, %v267
      %v269 = vrot.slane %v217, %v268
      %v270 = vlaneseq
      %v271 = vshrl.u32 %v270, 7
      %v272 = vsub.s32 1, %v271
      %v273 = vrot.slane %v224, %v272
      %276 = vrot.lane.b32.xlu0 %v269, 16
      %v277 = vpop.permute.xlu0 %276
      %278 = vrot.lane.b32.xlu0 %v273, 16
      %v279 = vpop.permute.xlu0 %278
      %vm280 = vcmask 130048
      %v281 = vsel %vm280, %v277, %v279
      %v285 = vmul.bf16 %v190, %v277
      %v286 = vmul.bf16 %v185, %v281
      %v287 = vmul.bf16 %v193, %v279
      %v288 = vlaneseq
      %v289 = vshrl.u32 %v288, 7
      %v290 = vsub.s32 2, %v289
      %v291 = vrot.slane %v201, %v290
      %v292 = vlaneseq
      %v293 = vshrl.u32 %v292, 7
      %v294 = vsub.s32 2, %v293
      %v295 = vrot.slane %v208, %v294
      %298 = vrot.lane.b32.xlu0 %v291, 17
      %v299 = vpop.permute.xlu0 %298
      %300 = vrot.lane.b32.xlu0 %v295, 17
      %v301 = vpop.permute.xlu0 %300
      %v302 = vsel %vm184, %v299, %v301
      %v306 = vmul.bf16 %v190, %v299
      %v307 = vmul.bf16 %v185, %v302
      %v308 = vmul.bf16 %v193, %v301
      %v309 = vlaneseq
      %v310 = vshrl.u32 %v309, 7
      %v311 = vsub.s32 2, %v310
      %v312 = vrot.slane %v217, %v311
      %v313 = vlaneseq
      %v314 = vshrl.u32 %v313, 7
      %v315 = vsub.s32 2, %v314
      %v316 = vrot.slane %v224, %v315
      %319 = vrot.lane.b32.xlu0 %v312, 18
      %v320 = vpop.permute.xlu0 %319
      %321 = vrot.lane.b32.xlu0 %v316, 18
      %v322 = vpop.permute.xlu0 %321
      %vm323 = vcmask 146432
      %v324 = vsel %vm323, %v320, %v322
      %v328 = vmul.bf16 %v190, %v320
      %v329 = vmul.bf16 %v185, %v324
      %v330 = vmul.bf16 %v193, %v322
      %v331 = vlaneseq
      %v332 = vshrl.u32 %v331, 7
      %v333 = vsub.s32 3, %v332
      %v334 = vrot.slane %v201, %v333
      %v335 = vlaneseq
      %v336 = vshrl.u32 %v335, 7
      %v337 = vsub.s32 3, %v336
      %v338 = vrot.slane %v208, %v337
      %341 = vrot.lane.b32.xlu0 %v334, 32
      %v342 = vpop.permute.xlu0 %341
      %343 = vrot.lane.b32.xlu0 %v338, 32
      %v344 = vpop.permute.xlu0 %343
      %vm345 = vcmask 261120
      %v346 = vsel %vm345, %v342, %v344
      %v350 = vmul.bf16 %v190, %v342
      %v351 = vmul.bf16 %v185, %v346
      %v352 = vmul.bf16 %v193, %v344
      %v353 = vlaneseq
      %v354 = vshrl.u32 %v353, 7
      %v355 = vsub.s32 3, %v354
      %v356 = vrot.slane %v217, %v355
      %v357 = vlaneseq
      %v358 = vshrl.u32 %v357, 7
      %v359 = vsub.s32 3, %v358
      %v360 = vrot.slane %v224, %v359
      %363 = vrot.lane.b32.xlu0 %v356, 33
      %v364 = vpop.permute.xlu0 %363
      %365 = vrot.lane.b32.xlu0 %v360, 33
      %v366 = vpop.permute.xlu0 %365
      %vm367 = vcmask 269312
      %v368 = vsel %vm367, %v364, %v366
      %v372 = vmul.bf16 %v190, %v364
      %v373 = vmul.bf16 %v185, %v368
      %v374 = vmul.bf16 %v193, %v366
      %v376 = vunpack.c.l.b16 %v173
      %v377 = vunpack.c.h.b16 %v173
      %v378 = vpack.c.b16 %v376, %v376
      %v379 = vpack.c.b16 %v377, %v377
      %v381 = vpack.i.b16 %v378, %v378
      %v383 = vlaneseq
      %v384 = vshrl.u32 %v383, 7
      %v385 = vsub.s32 0, %v384
      %v386 = vrot.slane %v381, %v385
      %v388 = vpack.i.b16 %v379, %v379
      %v390 = vlaneseq
      %v391 = vshrl.u32 %v390, 7
      %v392 = vsub.s32 0, %v391
      %v393 = vrot.slane %v388, %v392
      %396 = vrot.lane.b32.xlu0 %v386, 34
      %v397 = vpop.permute.xlu0 %396
      %398 = vrot.lane.b32.xlu0 %v393, 34
      %v399 = vpop.permute.xlu0 %398
      %vm400 = vcmask 277504
      %v401 = vsel %vm400, %v397, %v399
      %v405 = vmul.bf16 %v190, %v397
      %v406 = vmul.bf16 %v185, %v401
      %v407 = vmul.bf16 %v193, %v399
      %v411 = vrot.slane %v241, 4
      %v412 = vrot.slane %v242, 4
      %v413 = vrot.slane %v243, 4
      %414 = vrot.lane.b32.xlu0 %v411, 127
      %v415 = vpop.permute.xlu0 %414
      %416 = vrot.lane.b32.xlu0 %v412, 127
      %v417 = vpop.permute.xlu0 %416
      %418 = vrot.lane.b32.xlu0 %v413, 127
      %v419 = vpop.permute.xlu0 %418
      %vm420 = vcmask 1039360
      %v421 = vsel %vm420, %v415, %v417
      %v422 = vsel %vm420, %v417, %v419
      %426 = vrot.lane.b32.xlu0 %v263, 126
      %v427 = vpop.permute.xlu0 %426
      %428 = vrot.lane.b32.xlu0 %v264, 126
      %v429 = vpop.permute.xlu0 %428
      %430 = vrot.lane.b32.xlu0 %v265, 126
      %v431 = vpop.permute.xlu0 %430
      %vm432 = vcmask 1031168
      %v433 = vsel %vm432, %v427, %v429
      %v434 = vsel %vm432, %v429, %v431
      %v438 = vrot.slane %v285, 4
      %v439 = vrot.slane %v286, 4
      %v440 = vrot.slane %v287, 4
      %441 = vrot.lane.b32.xlu0 %v438, 112
      %v442 = vpop.permute.xlu0 %441
      %443 = vrot.lane.b32.xlu0 %v439, 112
      %v444 = vpop.permute.xlu0 %443
      %445 = vrot.lane.b32.xlu0 %v440, 112
      %v446 = vpop.permute.xlu0 %445
      %vm447 = vcmask 916480
      %v448 = vsel %vm447, %v442, %v444
      %v449 = vsel %vm447, %v444, %v446
      %453 = vrot.lane.b32.xlu0 %v306, 111
      %v454 = vpop.permute.xlu0 %453
      %455 = vrot.lane.b32.xlu0 %v307, 111
      %v456 = vpop.permute.xlu0 %455
      %457 = vrot.lane.b32.xlu0 %v308, 111
      %v458 = vpop.permute.xlu0 %457
      %vm459 = vcmask 908288
      %v460 = vsel %vm459, %v454, %v456
      %v461 = vsel %vm459, %v456, %v458
      %v465 = vrot.slane %v328, 4
      %v466 = vrot.slane %v329, 4
      %v467 = vrot.slane %v330, 4
      %468 = vrot.lane.b32.xlu0 %v465, 110
      %v469 = vpop.permute.xlu0 %468
      %470 = vrot.lane.b32.xlu0 %v466, 110
      %v471 = vpop.permute.xlu0 %470
      %472 = vrot.lane.b32.xlu0 %v467, 110
      %v473 = vpop.permute.xlu0 %472
      %vm474 = vcmask 900096
      %v475 = vsel %vm474, %v469, %v471
      %v476 = vsel %vm474, %v471, %v473
      %480 = vrot.lane.b32.xlu0 %v350, 96
      %v481 = vpop.permute.xlu0 %480
      %482 = vrot.lane.b32.xlu0 %v351, 96
      %v483 = vpop.permute.xlu0 %482
      %484 = vrot.lane.b32.xlu0 %v352, 96
      %v485 = vpop.permute.xlu0 %484
      %vm486 = vcmask 785408
      %v487 = vsel %vm486, %v481, %v483
      %v488 = vsel %vm486, %v483, %v485
      %v492 = vrot.slane %v372, 4
      %v493 = vrot.slane %v373, 4
      %v494 = vrot.slane %v374, 4
      %495 = vrot.lane.b32.xlu0 %v492, 95
      %v496 = vpop.permute.xlu0 %495
      %497 = vrot.lane.b32.xlu0 %v493, 95
      %v498 = vpop.permute.xlu0 %497
      %499 = vrot.lane.b32.xlu0 %v494, 95
      %v500 = vpop.permute.xlu0 %499
      %vm501 = vcmask 777216
      %v502 = vsel %vm501, %v496, %v498
      %v503 = vsel %vm501, %v498, %v500
      %507 = vrot.lane.b32.xlu0 %v405, 94
      %v508 = vpop.permute.xlu0 %507
      %509 = vrot.lane.b32.xlu0 %v406, 94
      %v510 = vpop.permute.xlu0 %509
      %511 = vrot.lane.b32.xlu0 %v407, 94
      %v512 = vpop.permute.xlu0 %511
      %vm513 = vcmask 769024
      %v514 = vsel %vm513, %v508, %v510
      %v515 = vsel %vm513, %v510, %v512
      %vm516 = vcmask 1043456
      %v519 = vsel %vm516, %v214, %v421
      %v523 = vsel %vm516, %v215, %v422
      %v527 = vsel %vm516, %v433, %v448
      %v531 = vsel %vm516, %v434, %v449
      %v535 = vsel %vm516, %v460, %v475
      %v539 = vsel %vm516, %v461, %v476
      %v543 = vsel %vm516, %v487, %v502
      %v547 = vsel %vm516, %v488, %v503
      %v549 = vld [vmem:[%s2] sm:$0xf]
      %vm550 = vcmask 588800
      %v552 = vsel %vm550, %v549, 0
      %v555 = vsel %vm516, %v514, 0
      %v558 = vsel %vm516, %v515, 0
      %560 = vmatprep.subr.bf16.mxu0 %v523
      %561 = vmatpush1.bf16.msra.mxu0 %v519
      %562 = vmatprep.subr.bf16.mxu0 %v531
      %563 = vmatpush1.bf16.msra.mxu0 %v527
      %564 = vmatprep.subr.bf16.mxu0 %v539
      %565 = vmatpush1.bf16.msra.mxu0 %v535
      %566 = vmatprep.subr.bf16.mxu0 %v547
      %567 = vmatpush1.bf16.msra.mxu0 %v543
      %568 = vmatprep.subr.bf16.mxu0 %v558
      %569 = vmatpush1.bf16.msra.mxu0 %v555
      %570 = vmatprep.subr.bf16.mxu0 0
      %571 = vmatpush1.bf16.msra.mxu0 0
      %572 = vmatprep.subr.bf16.mxu0 0
      %573 = vmatpush1.bf16.msra.mxu0 0
      %574 = vmatprep.subr.bf16.mxu0 0
      %575 = vmatpush1.bf16.msra.mxu0 0
      %576 = vmatprep.subr.bf16.mxu0 0
      %577 = vmatpush1.bf16.msra.mxu0 0
      %578 = vmatprep.subr.bf16.mxu0 0
      %579 = vmatpush1.bf16.msra.mxu0 0
      %580 = vmatprep.subr.bf16.mxu0 0
      %581 = vmatpush1.bf16.msra.mxu0 0
      %582 = vmatprep.subr.bf16.mxu0 0
      %583 = vmatpush1.bf16.msra.mxu0 0
      %584 = vmatprep.subr.bf16.mxu0 0
      %585 = vmatpush1.bf16.msra.mxu0 0
      %586 = vmatprep.subr.bf16.mxu0 0
      %587 = vmatpush1.bf16.msra.mxu0 0
      %588 = vmatprep.subr.bf16.mxu0 0
      %589 = vmatpush1.bf16.msra.mxu0 0
      %590 = vmatprep.subr.bf16.mxu0 0
      %591 = vmatpush1.bf16.msra.mxu0 0
      %592 = vmatprep.mubr.bf16.mxu0 0
      %593 = vmatmul.mubr.bf16.gmra.mrb[0].mxu0 %v552
      %v594 = vpop.f32.mrb[0].mxu0
      %v595 = vadd.f32 0.0, %v594
      %v596 = vpop.f32.mrb[0].mxu0
      %v597 = vadd.f32 0.0, %v596
      %v598 = vpop.f32.mrb[0].mxu0
      %v599 = vpop.f32.mrb[0].mxu0
      %600 = vdwg.mxu0
      %v601 = vadd.f32 %v595, %v597
      %602 = vadd.xlane.f32.xlu0 %v601
      %v603 = vpop.xlane.xlu0 %602
      %v604 = vrcp.pop 256.0
      %v605 = vmul.f32 %v603, %v604
      %v606 = vsub.f32 %v595, %v605
      %v607 = vsub.f32 %v597, %v605
      %v608 = vmul.f32 %v606, %v606
      %v609 = vmul.f32 %v607, %v607
      %v610 = vadd.f32 %v608, %v609
      %611 = vadd.xlane.f32.xlu0 %v610
      %v612 = vpop.xlane.xlu0 %611
      %v613 = vmul.f32 %v612, %v604
      %v614 = vadd.f32 %v613, 1e-05
      %v615 = vrsqrt.pop %v614
      %v616 = vmul.f32 %v606, %v615
      %v617 = vmul.f32 %v607, %v615
      %vm618 = vcmp.ge.f32.partialorder %v616, 0.0
      %vm619 = vcmp.ge.f32.partialorder %v617, 0.0
      %v620 = vmul.f32 %v616, 0.01
      %v621 = vmul.f32 %v617, 0.01
      %v622 = vsel %vm618, %v616, %v620
      %v623 = vsel %vm619, %v617, %v621
      %v624 = vpack.c.bf16 %v622, %v622
      %v625 = vpack.c.bf16 %v623, %v623
      %v628 = vunpack.c.l.b16 %v624
      %v629 = vunpack.c.l.b16 %v625
      %v630 = vpack.c.b16 %v629, %v628
      %632 = vst [vmem:[%s170] sm:$0xff] %v630
      %p633 = scmp.lt.s32.totalorder %s14, 1
      %s634 = scalar_select %p633, %s14, 1
      %s635 = smul.addr %s634, 2
      %s636 = smul.addr %s635, 4
      %s637 = scalar_lea.vmem %s3, %s636
      // Predicated region
      $region33: #{_lambda_.13} parent=31 // pred_check
        %p638 = pneg %p100
      $region34: #{_lambda_.13} parent=31 // pred_check_branch
        %640 = sbr.rel (%p638) target = $region36
      $region35: #{_lambda_.13} parent=31 // pred_region
        _
      $region36: #{_lambda_.13} parent=31 // pred_fallthru
        _
    $region32: #{_lambda_.13} parent=5 // pred_fallthru
      _
    %p641 = scmp.le.s32.totalorder 2, %s9
    // Predicated region
    $region37: #{_lambda_.13} parent=5 // pred_check
      %p642 = pneg %p641
    $region38: #{_lambda_.13} parent=5 // pred_check_branch
      %644 = sbr.rel (%p642) target = $region40
    $region39: #{_lambda_.13} parent=5 // pred_region
      %s645 = ssub.s32 %s9, 2
      // Predicated region
      $region41: #{_lambda_.13} parent=39 // pred_check
        %p646 = pneg %p106
      $region42: #{_lambda_.13} parent=39 // pred_check_branch
        %648 = sbr.rel (%p646) target = $region44
      $region43: #{_lambda_.13} parent=39 // pred_region
        %p649 = scmp.lt.s32.totalorder %s15, 1
        %s650 = scalar_select %p649, %s15, 1
        %s651 = smul.addr %s650, 2
        %s652 = smul.addr %s651, 4
        %s653 = scalar_lea.vmem %s3, %s652
      $region44: #{_lambda_.13} parent=39 // pred_fallthru
        _
    $region40: #{_lambda_.13} parent=5 // pred_fallthru
      _
  $region6: #{_lambda_.13} parent=0 // loop_footer
    %s13 = sadd.s32 1, %s9
  $region7: #{_lambda_.13} parent=0 // loop_footer_branch
    %8 = sbr.rel target = $region3
  $region8: #{_lambda_.13} parent=0 // loop_exit
    _

// kernel: _lambda_.15
$region0: #{_lambda_.15}
  #allocation0 [shape = 'u32[]', space=smem, size = 0x4, offset = 0x4, fixed_abs, tag = 'smem constant byte address 0x4 - core index']
  #allocation1 [shape = 'u32[144,128]{1,0:T(1,128)}', space=vmem, size = 0x12000, scoped, tag = 'internal scratch']
  %s0 = inlined_call_operand.vmem [shape: bf16[2,32,64], index: 0, kind: input, shape index: {}]
  %s1 = inlined_call_operand.vmem [shape: bf16[4,64], index: 1, kind: input, shape index: {}]
  %s2 = inlined_call_operand.vmem [shape: bf16[16,128], index: 2, kind: input, shape index: {}]
  %s3 = inlined_call_operand.vmem [shape: bf16[2,16,64], index: 3, kind: output, shape index: {}]
  %s4 = sld [smem:[#allocation0]]
  $region45: #{_lambda_.15} parent=0
    _
  %s6 = ssub.s32 1, %s4
  %s7 = scalar_select 0, %s6, %s4
  loop: start=0, step=1, limit=4
  $region2: #{_lambda_.15} parent=0 // loop_pre_header
    _
  $region3: #{_lambda_.15} parent=0 // loop_header
    %s9 = sphi 0, %s13
    %p10 = scmp.ge.s32.totalorder %s9, 4
    %s19 = sphi 0, %s21
    %s22 = sphi 0, %s19
    %s23 = sphi 0, %s22
    %s39 = sphi 0, %s23
    %s43 = sphi 0, %s43
    %s45 = sphi 0, %s43
    %s46 = sphi 0, %s45
    %s60 = sphi 0, %s46
    %s64 = sphi 0, %s64
    %s66 = sphi 0, %s64
    %s67 = sphi 0, %s66
    %s81 = sphi 0, %s67
    %s87 = sphi 0, %s89
    %s90 = sphi 0, %s87
    %s91 = sphi 0, %s90
    %s107 = sphi 0, %s91
  $region4: #{_lambda_.15} parent=0 // loop_header_branch
    %12 = sbr.rel (%p10) target = $region8
  $region5: #{_lambda_.15} parent=0 // loop_body
    %s14 = ssub.s32 %s9, 1
    %s15 = ssub.s32 %s9, 2
    %s16 = sadd.s32 %s9, 1
    %s17 = ssub.s32 %s9, %s16
    %p18 = scmp.eq.s32.totalorder %s17, 0
    %s20 = sadd.s32 %s19, 1
    %s21 = scalar_select %p18, %s19, %s20
    %p24 = pneg %p18
    %p25 = scmp.eq.s32.totalorder %s9, 1
    %p26 = por %p24, %p25
    %p27 = scmp.ne.s32.totalorder %s19, %s22
    %p28 = scmp.eq.s32.totalorder %s9, 0
    %p29 = por %p27, %p28
    %p30 = scmp.ne.s32.totalorder %s19, %s22
    %p31 = scmp.eq.s32.totalorder %s14, 1
    %p32 = por %p30, %p31
    %p33 = scmp.ne.s32.totalorder %s22, %s23
    %p34 = scmp.eq.s32.totalorder %s14, 0
    %p35 = por %p33, %p34
    %p36 = scmp.ne.s32.totalorder %s22, %s23
    %p37 = scmp.eq.s32.totalorder %s15, 1
    %p38 = por %p36, %p37
    %p40 = scmp.ne.s32.totalorder %s23, %s39
    %p41 = scmp.eq.s32.totalorder %s15, 0
    %p42 = por %p40, %p41
    %s44 = sadd.s32 %s43, 1
    %p47 = scmp.eq.s32.totalorder %s9, 1
    %p48 = scmp.ne.s32.totalorder %s43, %s45
    %p49 = scmp.eq.s32.totalorder %s9, 0
    %p50 = por %p48, %p49
    %p51 = scmp.ne.s32.totalorder %s43, %s45
    %p52 = scmp.eq.s32.totalorder %s14, 1
    %p53 = por %p51, %p52
    %p54 = scmp.ne.s32.totalorder %s45, %s46
    %p55 = scmp.eq.s32.totalorder %s14, 0
    %p56 = por %p54, %p55
    %p57 = scmp.ne.s32.totalorder %s45, %s46
    %p58 = scmp.eq.s32.totalorder %s15, 1
    %p59 = por %p57, %p58
    %p61 = scmp.ne.s32.totalorder %s46, %s60
    %p62 = scmp.eq.s32.totalorder %s15, 0
    %p63 = por %p61, %p62
    %s65 = sadd.s32 %s64, 1
    %p68 = scmp.eq.s32.totalorder %s9, 1
    %p69 = scmp.ne.s32.totalorder %s64, %s66
    %p70 = scmp.eq.s32.totalorder %s9, 0
    %p71 = por %p69, %p70
    %p72 = scmp.ne.s32.totalorder %s64, %s66
    %p73 = scmp.eq.s32.totalorder %s14, 1
    %p74 = por %p72, %p73
    %p75 = scmp.ne.s32.totalorder %s66, %s67
    %p76 = scmp.eq.s32.totalorder %s14, 0
    %p77 = por %p75, %p76
    %p78 = scmp.ne.s32.totalorder %s66, %s67
    %p79 = scmp.eq.s32.totalorder %s15, 1
    %p80 = por %p78, %p79
    %p82 = scmp.ne.s32.totalorder %s67, %s81
    %p83 = scmp.eq.s32.totalorder %s15, 0
    %p84 = por %p82, %p83
    %s85 = ssub.s32 %s9, %s16
    %p86 = scmp.eq.s32.totalorder %s85, 0
    %s88 = sadd.s32 %s87, 1
    %s89 = scalar_select %p86, %s87, %s88
    %p92 = pneg %p86
    %p93 = scmp.eq.s32.totalorder %s9, 1
    %p94 = por %p92, %p93
    %p95 = scmp.ne.s32.totalorder %s87, %s90
    %p96 = scmp.eq.s32.totalorder %s9, 0
    %p97 = por %p95, %p96
    %p98 = scmp.ne.s32.totalorder %s87, %s90
    %p99 = scmp.eq.s32.totalorder %s14, 1
    %p100 = por %p98, %p99
    %p101 = scmp.ne.s32.totalorder %s90, %s91
    %p102 = scmp.eq.s32.totalorder %s14, 0
    %p103 = por %p101, %p102
    %p104 = scmp.ne.s32.totalorder %s90, %s91
    %p105 = scmp.eq.s32.totalorder %s15, 1
    %p106 = por %p104, %p105
    %p108 = scmp.ne.s32.totalorder %s91, %s107
    %p109 = scmp.eq.s32.totalorder %s15, 0
    %p110 = por %p108, %p109
    %p111 = scmp.le.s32.totalorder 1, %s9
    %p112 = scmp.lt.s32.totalorder %s9, 3
    %p113 = pnand %p111, %p112
    %p114 = pneg %p113
    // Predicated region
    $region9: #{_lambda_.15} parent=5 // pred_check
      _
    $region10: #{_lambda_.15} parent=5 // pred_check_branch
      %116 = sbr.rel (%p113) target = $region12
    $region11: #{_lambda_.15} parent=5 // pred_region
      %s117 = ssub.s32 %s9, 1
      // Predicated region
      $region13: #{_lambda_.15} parent=11 // pred_check
        %p118 = pneg %p56
      $region14: #{_lambda_.15} parent=11 // pred_check_branch
        %120 = sbr.rel (%p118) target = $region16
      $region15: #{_lambda_.15} parent=11 // pred_region
        _
      $region16: #{_lambda_.15} parent=11 // pred_fallthru
        _
      // Predicated region
      $region17: #{_lambda_.15} parent=11 // pred_check
        %p121 = pneg %p77
      $region18: #{_lambda_.15} parent=11 // pred_check_branch
        %123 = sbr.rel (%p121) target = $region20
      $region19: #{_lambda_.15} parent=11 // pred_region
        _
      $region20: #{_lambda_.15} parent=11 // pred_fallthru
        _
    $region12: #{_lambda_.15} parent=5 // pred_fallthru
      _
    %p124 = scmp.lt.s32.totalorder %s9, 2
    // Predicated region
    $region21: #{_lambda_.15} parent=5 // pred_check
      %p125 = pneg %p124
    $region22: #{_lambda_.15} parent=5 // pred_check_branch
      %127 = sbr.rel (%p125) target = $region24
    $region23: #{_lambda_.15} parent=5 // pred_region
      // Predicated region
      $region25: #{_lambda_.15} parent=23 // pred_check
        %p128 = pneg %p29
      $region26: #{_lambda_.15} parent=23 // pred_check_branch
        %130 = sbr.rel (%p128) target = $region28
      $region27: #{_lambda_.15} parent=23 // pred_region
        %p131 = scmp.lt.s32.totalorder %s9, 1
        %s132 = scalar_select %p131, %s9, 1
        %s133 = smul.addr %s132, 4
        %s134 = smul.addr %s133, 4
        %s135 = scalar_lea.vmem %s0, %s134
      $region28: #{_lambda_.15} parent=23 // pred_fallthru
        _
    $region24: #{_lambda_.15} parent=5 // pred_fallthru
      _
    %p136 = scmp.le.s32.totalorder 1, %s9
    %p137 = scmp.lt.s32.totalorder %s9, 3
    %p138 = pnand %p136, %p137
    %p139 = pneg %p138
    // Predicated region
    $region29: #{_lambda_.15} parent=5 // pred_check
      _
    $region30: #{_lambda_.15} parent=5 // pred_check_branch
      %141 = sbr.rel (%p138) target = $region32
    $region31: #{_lambda_.15} parent=5 // pred_region
      %s142 = ssub.s32 %s9, 1
      %p143 = scmp.lt.s32.totalorder %s14, 1
      %s144 = scalar_select %p143, %s14, 1
      %s145 = smul.addr %s144, 4
      %s146 = smul.addr %s145, 4
      %s147 = scalar_lea.vmem %s0, %s146
      %p148 = pneg %p35
      %p149 = pneg %p32
      %p150 = pneg %p56
      %p151 = pneg %p53
      %p152 = pneg %p77
      %p153 = pneg %p74
      %p154 = pneg %p103
      %p155 = pneg %p100
      %p156 = scmp.lt.s32.totalorder %s14, 1
      %s157 = scalar_select %p156, %s14, 1
      %s158 = smul.addr %s157, 2
      %s159 = smul.addr %s158, 4
      %s160 = scalar_lea.vmem %s3, %s159
      %p161 = scmp.lt.s32.totalorder %s14, 1
      %s162 = scalar_select %p161, %s14, 1
      %s163 = smul.addr %s162, 4
      %s164 = smul.addr %s163, 4
      %s165 = scalar_lea.vmem %s0, %s164
      %p166 = scmp.lt.s32.totalorder %s14, 1
      %s167 = scalar_select %p166, %s14, 1
      %s168 = smul.addr %s167, 2
      %s169 = smul.addr %s168, 4
      %s170 = scalar_lea.vmem %s3, %s169
      %v172 = vld [vmem:[%s1] sm:$0x3]
      %v173 = vld [vmem:[%s165] sm:$0xf]
      %v174 = vld [vmem:[%s165 + $0x4] sm:$0xf]
      %v175 = vld [vmem:[%s165 + $0x8] sm:$0xf]
      %v176 = vld [vmem:[%s165 + $0xc] sm:$0xf]
      %v181 = vunpack.c.l.b16 %v173
      %v182 = vunpack.c.l.b16 %v174
      %v183 = vunpack.c.l.b16 %v175
      %v184 = vunpack.c.l.b16 %v176
      %v185 = vpack.c.b16 %v182, %v181
      %v186 = vpack.c.b16 %v184, %v183
      %187 = vrot.lane.b32.xlu0 %v185, 9
      %v188 = vpop.permute.xlu0 %187
      %189 = vrot.lane.b32.xlu0 %v186, 9
      %v190 = vpop.permute.xlu0 %189
      %vm191 = vcmask 72704
      %v194 = vsel %vm191, 0, %v188
      %v196 = vsel %vm191, 0, %v190
      %vm197 = vcmask 596992
      %v198 = vsel %vm197, %v194, 0
      %v200 = vsel %vm197, %v196, 0
      %v203 = vpack.i.b16 %v172, %v172
      %v205 = vlaneseq
      %v206 = vshrl.u32 %v205, 7
      %v207 = vsub.s32 0, %v206
      %v208 = vrot.slane %v203, %v207
      %v209 = vmul.bf16 %v198, %v208
      %v210 = vmul.bf16 %v200, %v208
      %v211 = vshrl.u32 %v172, 16
      %v212 = vpack.i.b16 %v211, %v211
      %v214 = vlaneseq
      %v215 = vshrl.u32 %v214, 7
      %v216 = vsub.s32 0, %v215
      %v217 = vrot.slane %v212, %v216
      %219 = vrot.lane.b32.xlu0 %v217, 1
      %v220 = vpop.permute.xlu0 %219
      %v222 = vmul.bf16 %v198, %v220
      %v223 = vmul.bf16 %v200, %v220
      %v224 = vlaneseq
      %v225 = vshrl.u32 %v224, 7
      %v226 = vsub.s32 1, %v225
      %v227 = vrot.slane %v203, %v226
      %229 = vrot.lane.b32.xlu0 %v227, 8
      %v230 = vpop.permute.xlu0 %229
      %v232 = vmul.bf16 %v198, %v230
      %v233 = vmul.bf16 %v200, %v230
      %v234 = vlaneseq
      %v235 = vshrl.u32 %v234, 7
      %v236 = vsub.s32 1, %v235
      %v237 = vrot.slane %v212, %v236
      %239 = vrot.lane.b32.xlu0 %v237, 9
      %v240 = vpop.permute.xlu0 %239
      %v242 = vmul.bf16 %v198, %v240
      %v243 = vmul.bf16 %v200, %v240
      %246 = vrot.lane.b32.xlu0 %v222, 127
      %v247 = vpop.permute.xlu0 %246
      %248 = vrot.lane.b32.xlu0 %v223, 127
      %v249 = vpop.permute.xlu0 %248
      %254 = vrot.lane.b32.xlu0 %v232, 120
      %v255 = vpop.permute.xlu0 %254
      %256 = vrot.lane.b32.xlu0 %v233, 120
      %v257 = vpop.permute.xlu0 %256
      %262 = vrot.lane.b32.xlu0 %v242, 119
      %v263 = vpop.permute.xlu0 %262
      %264 = vrot.lane.b32.xlu0 %v243, 119
      %v265 = vpop.permute.xlu0 %264
      %v268 = vld [vmem:[%s2] sm:$0xf]
      %v269 = vld [vmem:[%s2 + $0x4] sm:$0xf]
      %v272 = vunpack.c.l.b16 %v268
      %v273 = vunpack.c.l.b16 %v269
      %v274 = vpack.c.b16 %v273, %v272
      %276 = vmatprep.subr.bf16.mxu0 0
      %277 = vmatpush1.bf16.msra.mxu0 %v209
      %278 = vmatprep.subr.bf16.mxu0 0
      %279 = vmatpush1.bf16.msra.mxu0 %v210
      %280 = vmatprep.subr.bf16.mxu0 0
      %281 = vmatpush1.bf16.msra.mxu0 %v247
      %282 = vmatprep.subr.bf16.mxu0 0
      %283 = vmatpush1.bf16.msra.mxu0 %v249
      %284 = vmatprep.subr.bf16.mxu0 0
      %285 = vmatpush1.bf16.msra.mxu0 %v255
      %286 = vmatprep.subr.bf16.mxu0 0
      %287 = vmatpush1.bf16.msra.mxu0 %v257
      %288 = vmatprep.subr.bf16.mxu0 0
      %289 = vmatpush1.bf16.msra.mxu0 %v263
      %290 = vmatprep.subr.bf16.mxu0 0
      %291 = vmatpush1.bf16.msra.mxu0 %v265
      %292 = vmatprep.subr.bf16.mxu0 0
      %293 = vmatpush1.bf16.msra.mxu0 0
      %294 = vmatprep.subr.bf16.mxu0 0
      %295 = vmatpush1.bf16.msra.mxu0 0
      %296 = vmatprep.subr.bf16.mxu0 0
      %297 = vmatpush1.bf16.msra.mxu0 0
      %298 = vmatprep.subr.bf16.mxu0 0
      %299 = vmatpush1.bf16.msra.mxu0 0
      %300 = vmatprep.subr.bf16.mxu0 0
      %301 = vmatpush1.bf16.msra.mxu0 0
      %302 = vmatprep.subr.bf16.mxu0 0
      %303 = vmatpush1.bf16.msra.mxu0 0
      %304 = vmatprep.subr.bf16.mxu0 0
      %305 = vmatpush1.bf16.msra.mxu0 0
      %306 = vmatprep.subr.bf16.mxu0 0
      %307 = vmatpush1.bf16.msra.mxu0 0
      %308 = vmatprep.mubr.bf16.mxu0 0
      %309 = vmatmul.mubr.bf16.gmra.mrb[0].mxu0 %v274
      %v310 = vpop.f32.mrb[0].mxu0
      %v311 = vadd.f32 0.0, %v310
      %v312 = vpop.f32.mrb[0].mxu0
      %v313 = vpop.f32.mrb[0].mxu0
      %v314 = vadd.f32 0.0, %v313
      %v315 = vpop.f32.mrb[0].mxu0
      %316 = vdwg.mxu0
      %vm317 = vcmask 523264
      %v318 = vsel %vm317, %v311, 0.0
      %319 = vadd.xlane.f32.xlu0 %v318
      %v320 = vpop.xlane.xlu0 %319
      %v321 = vsel %vm317, %v314, 0.0
      %322 = vadd.xlane.f32.xlu0 %v321
      %v323 = vpop.xlane.xlu0 %322
      %v324 = vrcp.pop 64.0
      %v325 = vmul.f32 %v320, %v324
      %v326 = vmul.f32 %v323, %v324
      %v327 = vsub.f32 %v311, %v325
      %v328 = vsub.f32 %v314, %v326
      %v329 = vmul.f32 %v327, %v327
      %v330 = vmul.f32 %v328, %v328
      %v331 = vsel %vm317, %v329, 0.0
      %332 = vadd.xlane.f32.xlu0 %v331
      %v333 = vpop.xlane.xlu0 %332
      %v334 = vsel %vm317, %v330, 0.0
      %335 = vadd.xlane.f32.xlu0 %v334
      %v336 = vpop.xlane.xlu0 %335
      %v337 = vmul.f32 %v333, %v324
      %v338 = vmul.f32 %v336, %v324
      %v339 = vadd.f32 %v337, 1e-05
      %v340 = vadd.f32 %v338, 1e-05
      %v341 = vrsqrt.pop %v339
      %v342 = vrsqrt.pop %v340
      %v343 = vmul.f32 %v327, %v341
      %v344 = vmul.f32 %v328, %v342
      %vm345 = vcmp.ge.f32.partialorder %v343, 0.0
      %vm346 = vcmp.ge.f32.partialorder %v344, 0.0
      %v347 = vmul.f32 %v343, 0.01
      %v348 = vmul.f32 %v344, 0.01
      %v349 = vsel %vm345, %v343, %v347
      %v350 = vsel %vm346, %v344, %v348
      %v351 = vpack.c.bf16 %v350, %v349
      %v353 = vunpack.c.l.b16 %v351
      %v354 = vunpack.c.h.b16 %v351
      %v355 = vpack.c.b16 %v353, %v353
      %v356 = vpack.c.b16 %v354, %v354
      %vm359 = vcmask 519168
      %360 = vst.msk [vmem:[%s170] sm:$0xf] %vm359, %v355
      %361 = vst.msk [vmem:[%s170 + $0x4] sm:$0xf] %vm359, %v356
      %p362 = scmp.lt.s32.totalorder %s14, 1
      %s363 = scalar_select %p362, %s14, 1
      %s364 = smul.addr %s363, 2
      %s365 = smul.addr %s364, 4
      %s366 = scalar_lea.vmem %s3, %s365
      // Predicated region
      $region33: #{_lambda_.15} parent=31 // pred_check
        %p367 = pneg %p100
      $region34: #{_lambda_.15} parent=31 // pred_check_branch
        %369 = sbr.rel (%p367) target = $region36
      $region35: #{_lambda_.15} parent=31 // pred_region
        _
      $region36: #{_lambda_.15} parent=31 // pred_fallthru
        _
    $region32: #{_lambda_.15} parent=5 // pred_fallthru
      _
    %p370 = scmp.le.s32.totalorder 2, %s9
    // Predicated region
    $region37: #{_lambda_.15} parent=5 // pred_check
      %p371 = pneg %p370
    $region38: #{_lambda_.15} parent=5 // pred_check_branch
      %373 = sbr.rel (%p371) target = $region40
    $region39: #{_lambda_.15} parent=5 // pred_region
      %s374 = ssub.s32 %s9, 2
      // Predicated region
      $region41: #{_lambda_.15} parent=39 // pred_check
        %p375 = pneg %p106
      $region42: #{_lambda_.15} parent=39 // pred_check_branch
        %377 = sbr.rel (%p375) target = $region44
      $region43: #{_lambda_.15} parent=39 // pred_region
        %p378 = scmp.lt.s32.totalorder %s15, 1
        %s379 = scalar_select %p378, %s15, 1
        %s380 = smul.addr %s379, 2
        %s381 = smul.addr %s380, 4
        %s382 = scalar_lea.vmem %s3, %s381
      $region44: #{_lambda_.15} parent=39 // pred_fallthru
        _
    $region40: #{_lambda_.15} parent=5 // pred_fallthru
      _
  $region6: #{_lambda_.15} parent=0 // loop_footer
    %s13 = sadd.s32 1, %s9
  $region7: #{_lambda_.15} parent=0 // loop_footer_branch
    %8 = sbr.rel target = $region3
  $region8: #{_lambda_.15} parent=0 // loop_exit
    _

// kernel: _lambda_.16
$region0: #{_lambda_.16}
  #allocation0 [shape = 'u32[]', space=smem, size = 0x4, offset = 0x4, fixed_abs, tag = 'smem constant byte address 0x4 - core index']
  #allocation1 [shape = 'u32[144,128]{1,0:T(1,128)}', space=vmem, size = 0x12000, scoped, tag = 'internal scratch']
  %s0 = inlined_call_operand.vmem [shape: bf16[2,16,64], index: 0, kind: input, shape index: {}]
  %s1 = inlined_call_operand.vmem [shape: bf16[9,64], index: 1, kind: input, shape index: {}]
  %s2 = inlined_call_operand.vmem [shape: bf16[16,144], index: 2, kind: input, shape index: {}]
  %s3 = inlined_call_operand.vmem [shape: bf16[2,16,64], index: 3, kind: output, shape index: {}]
  %s4 = sld [smem:[#allocation0]]
  $region45: #{_lambda_.16} parent=0
    _
  %s6 = ssub.s32 1, %s4
  %s7 = scalar_select 0, %s6, %s4
  loop: start=0, step=1, limit=4
  $region2: #{_lambda_.16} parent=0 // loop_pre_header
    _
  $region3: #{_lambda_.16} parent=0 // loop_header
    %s9 = sphi 0, %s13
    %p10 = scmp.ge.s32.totalorder %s9, 4
    %s19 = sphi 0, %s21
    %s22 = sphi 0, %s19
    %s23 = sphi 0, %s22
    %s39 = sphi 0, %s23
    %s43 = sphi 0, %s43
    %s45 = sphi 0, %s43
    %s46 = sphi 0, %s45
    %s60 = sphi 0, %s46
    %s64 = sphi 0, %s64
    %s66 = sphi 0, %s64
    %s67 = sphi 0, %s66
    %s81 = sphi 0, %s67
    %s87 = sphi 0, %s89
    %s90 = sphi 0, %s87
    %s91 = sphi 0, %s90
    %s107 = sphi 0, %s91
  $region4: #{_lambda_.16} parent=0 // loop_header_branch
    %12 = sbr.rel (%p10) target = $region8
  $region5: #{_lambda_.16} parent=0 // loop_body
    %s14 = ssub.s32 %s9, 1
    %s15 = ssub.s32 %s9, 2
    %s16 = sadd.s32 %s9, 1
    %s17 = ssub.s32 %s9, %s16
    %p18 = scmp.eq.s32.totalorder %s17, 0
    %s20 = sadd.s32 %s19, 1
    %s21 = scalar_select %p18, %s19, %s20
    %p24 = pneg %p18
    %p25 = scmp.eq.s32.totalorder %s9, 1
    %p26 = por %p24, %p25
    %p27 = scmp.ne.s32.totalorder %s19, %s22
    %p28 = scmp.eq.s32.totalorder %s9, 0
    %p29 = por %p27, %p28
    %p30 = scmp.ne.s32.totalorder %s19, %s22
    %p31 = scmp.eq.s32.totalorder %s14, 1
    %p32 = por %p30, %p31
    %p33 = scmp.ne.s32.totalorder %s22, %s23
    %p34 = scmp.eq.s32.totalorder %s14, 0
    %p35 = por %p33, %p34
    %p36 = scmp.ne.s32.totalorder %s22, %s23
    %p37 = scmp.eq.s32.totalorder %s15, 1
    %p38 = por %p36, %p37
    %p40 = scmp.ne.s32.totalorder %s23, %s39
    %p41 = scmp.eq.s32.totalorder %s15, 0
    %p42 = por %p40, %p41
    %s44 = sadd.s32 %s43, 1
    %p47 = scmp.eq.s32.totalorder %s9, 1
    %p48 = scmp.ne.s32.totalorder %s43, %s45
    %p49 = scmp.eq.s32.totalorder %s9, 0
    %p50 = por %p48, %p49
    %p51 = scmp.ne.s32.totalorder %s43, %s45
    %p52 = scmp.eq.s32.totalorder %s14, 1
    %p53 = por %p51, %p52
    %p54 = scmp.ne.s32.totalorder %s45, %s46
    %p55 = scmp.eq.s32.totalorder %s14, 0
    %p56 = por %p54, %p55
    %p57 = scmp.ne.s32.totalorder %s45, %s46
    %p58 = scmp.eq.s32.totalorder %s15, 1
    %p59 = por %p57, %p58
    %p61 = scmp.ne.s32.totalorder %s46, %s60
    %p62 = scmp.eq.s32.totalorder %s15, 0
    %p63 = por %p61, %p62
    %s65 = sadd.s32 %s64, 1
    %p68 = scmp.eq.s32.totalorder %s9, 1
    %p69 = scmp.ne.s32.totalorder %s64, %s66
    %p70 = scmp.eq.s32.totalorder %s9, 0
    %p71 = por %p69, %p70
    %p72 = scmp.ne.s32.totalorder %s64, %s66
    %p73 = scmp.eq.s32.totalorder %s14, 1
    %p74 = por %p72, %p73
    %p75 = scmp.ne.s32.totalorder %s66, %s67
    %p76 = scmp.eq.s32.totalorder %s14, 0
    %p77 = por %p75, %p76
    %p78 = scmp.ne.s32.totalorder %s66, %s67
    %p79 = scmp.eq.s32.totalorder %s15, 1
    %p80 = por %p78, %p79
    %p82 = scmp.ne.s32.totalorder %s67, %s81
    %p83 = scmp.eq.s32.totalorder %s15, 0
    %p84 = por %p82, %p83
    %s85 = ssub.s32 %s9, %s16
    %p86 = scmp.eq.s32.totalorder %s85, 0
    %s88 = sadd.s32 %s87, 1
    %s89 = scalar_select %p86, %s87, %s88
    %p92 = pneg %p86
    %p93 = scmp.eq.s32.totalorder %s9, 1
    %p94 = por %p92, %p93
    %p95 = scmp.ne.s32.totalorder %s87, %s90
    %p96 = scmp.eq.s32.totalorder %s9, 0
    %p97 = por %p95, %p96
    %p98 = scmp.ne.s32.totalorder %s87, %s90
    %p99 = scmp.eq.s32.totalorder %s14, 1
    %p100 = por %p98, %p99
    %p101 = scmp.ne.s32.totalorder %s90, %s91
    %p102 = scmp.eq.s32.totalorder %s14, 0
    %p103 = por %p101, %p102
    %p104 = scmp.ne.s32.totalorder %s90, %s91
    %p105 = scmp.eq.s32.totalorder %s15, 1
    %p106 = por %p104, %p105
    %p108 = scmp.ne.s32.totalorder %s91, %s107
    %p109 = scmp.eq.s32.totalorder %s15, 0
    %p110 = por %p108, %p109
    %p111 = scmp.le.s32.totalorder 1, %s9
    %p112 = scmp.lt.s32.totalorder %s9, 3
    %p113 = pnand %p111, %p112
    %p114 = pneg %p113
    // Predicated region
    $region9: #{_lambda_.16} parent=5 // pred_check
      _
    $region10: #{_lambda_.16} parent=5 // pred_check_branch
      %116 = sbr.rel (%p113) target = $region12
    $region11: #{_lambda_.16} parent=5 // pred_region
      %s117 = ssub.s32 %s9, 1
      // Predicated region
      $region13: #{_lambda_.16} parent=11 // pred_check
        %p118 = pneg %p56
      $region14: #{_lambda_.16} parent=11 // pred_check_branch
        %120 = sbr.rel (%p118) target = $region16
      $region15: #{_lambda_.16} parent=11 // pred_region
        _
      $region16: #{_lambda_.16} parent=11 // pred_fallthru
        _
      // Predicated region
      $region17: #{_lambda_.16} parent=11 // pred_check
        %p121 = pneg %p77
      $region18: #{_lambda_.16} parent=11 // pred_check_branch
        %123 = sbr.rel (%p121) target = $region20
      $region19: #{_lambda_.16} parent=11 // pred_region
        _
      $region20: #{_lambda_.16} parent=11 // pred_fallthru
        _
    $region12: #{_lambda_.16} parent=5 // pred_fallthru
      _
    %p124 = scmp.lt.s32.totalorder %s9, 2
    // Predicated region
    $region21: #{_lambda_.16} parent=5 // pred_check
      %p125 = pneg %p124
    $region22: #{_lambda_.16} parent=5 // pred_check_branch
      %127 = sbr.rel (%p125) target = $region24
    $region23: #{_lambda_.16} parent=5 // pred_region
      // Predicated region
      $region25: #{_lambda_.16} parent=23 // pred_check
        %p128 = pneg %p29
      $region26: #{_lambda_.16} parent=23 // pred_check_branch
        %130 = sbr.rel (%p128) target = $region28
      $region27: #{_lambda_.16} parent=23 // pred_region
        %p131 = scmp.lt.s32.totalorder %s9, 1
        %s132 = scalar_select %p131, %s9, 1
        %s133 = smul.addr %s132, 2
        %s134 = smul.addr %s133, 4
        %s135 = scalar_lea.vmem %s0, %s134
      $region28: #{_lambda_.16} parent=23 // pred_fallthru
        _
    $region24: #{_lambda_.16} parent=5 // pred_fallthru
      _
    %p136 = scmp.le.s32.totalorder 1, %s9
    %p137 = scmp.lt.s32.totalorder %s9, 3
    %p138 = pnand %p136, %p137
    %p139 = pneg %p138
    // Predicated region
    $region29: #{_lambda_.16} parent=5 // pred_check
      _
    $region30: #{_lambda_.16} parent=5 // pred_check_branch
      %141 = sbr.rel (%p138) target = $region32
    $region31: #{_lambda_.16} parent=5 // pred_region
      %s142 = ssub.s32 %s9, 1
      %p143 = scmp.lt.s32.totalorder %s14, 1
      %s144 = scalar_select %p143, %s14, 1
      %s145 = smul.addr %s144, 2
      %s146 = smul.addr %s145, 4
      %s147 = scalar_lea.vmem %s0, %s146
      %p148 = pneg %p35
      %p149 = pneg %p32
      %p150 = pneg %p56
      %p151 = pneg %p53
      %p152 = pneg %p77
      %p153 = pneg %p74
      %p154 = pneg %p103
      %p155 = pneg %p100
      %p156 = scmp.lt.s32.totalorder %s14, 1
      %s157 = scalar_select %p156, %s14, 1
      %s158 = smul.addr %s157, 2
      %s159 = smul.addr %s158, 4
      %s160 = scalar_lea.vmem %s3, %s159
      %p161 = scmp.lt.s32.totalorder %s14, 1
      %s162 = scalar_select %p161, %s14, 1
      %s163 = smul.addr %s162, 2
      %s164 = smul.addr %s163, 4
      %s165 = scalar_lea.vmem %s0, %s164
      %p166 = scmp.lt.s32.totalorder %s14, 1
      %s167 = scalar_select %p166, %s14, 1
      %s168 = smul.addr %s167, 2
      %s169 = smul.addr %s168, 4
      %s170 = scalar_lea.vmem %s3, %s169
      %v172 = vld [vmem:[%s1] sm:$0xf]
      %v173 = vld [vmem:[%s1 + $0x4] sm:$0x1]
      %v174 = vld [vmem:[%s165] sm:$0xf]
      %v175 = vld [vmem:[%s165 + $0x4] sm:$0xf]
      %v178 = vunpack.c.l.b16 %v174
      %v179 = vunpack.c.l.b16 %v175
      %v180 = vpack.c.b16 %v179, %v178
      %181 = vrot.lane.b32.xlu0 %v180, 9
      %v182 = vpop.permute.xlu0 %181
      %vm183 = vcmask 72704
      %v186 = vsel %vm183, 0, %v182
      %vm187 = vcmask 596992
      %v188 = vsel %vm187, %v186, 0
      %v191 = vpack.i.b16 %v172, %v172
      %v193 = vlaneseq
      %v194 = vshrl.u32 %v193, 7
      %v195 = vsub.s32 0, %v194
      %v196 = vrot.slane %v191, %v195
      %v197 = vmul.bf16 %v188, %v196
      %v198 = vshrl.u32 %v172, 16
      %v199 = vpack.i.b16 %v198, %v198
      %v201 = vlaneseq
      %v202 = vshrl.u32 %v201, 7
      %v203 = vsub.s32 0, %v202
      %v204 = vrot.slane %v199, %v203
      %206 = vrot.lane.b32.xlu0 %v204, 1
      %v207 = vpop.permute.xlu0 %206
      %v209 = vmul.bf16 %v188, %v207
      %v210 = vlaneseq
      %v211 = vshrl.u32 %v210, 7
      %v212 = vsub.s32 1, %v211
      %v213 = vrot.slane %v191, %v212
      %215 = vrot.lane.b32.xlu0 %v213, 2
      %v216 = vpop.permute.xlu0 %215
      %v218 = vmul.bf16 %v188, %v216
      %v219 = vlaneseq
      %v220 = vshrl.u32 %v219, 7
      %v221 = vsub.s32 1, %v220
      %v222 = vrot.slane %v199, %v221
      %224 = vrot.lane.b32.xlu0 %v222, 8
      %v225 = vpop.permute.xlu0 %224
      %v227 = vmul.bf16 %v188, %v225
      %v228 = vlaneseq
      %v229 = vshrl.u32 %v228, 7
      %v230 = vsub.s32 2, %v229
      %v231 = vrot.slane %v191, %v230
      %233 = vrot.lane.b32.xlu0 %v231, 9
      %v234 = vpop.permute.xlu0 %233
      %v236 = vmul.bf16 %v188, %v234
      %v237 = vlaneseq
      %v238 = vshrl.u32 %v237, 7
      %v239 = vsub.s32 2, %v238
      %v240 = vrot.slane %v199, %v239
      %242 = vrot.lane.b32.xlu0 %v240, 10
      %v243 = vpop.permute.xlu0 %242
      %v245 = vmul.bf16 %v188, %v243
      %v246 = vlaneseq
      %v247 = vshrl.u32 %v246, 7
      %v248 = vsub.s32 3, %v247
      %v249 = vrot.slane %v191, %v248
      %251 = vrot.lane.b32.xlu0 %v249, 16
      %v252 = vpop.permute.xlu0 %251
      %v254 = vmul.bf16 %v188, %v252
      %v255 = vlaneseq
      %v256 = vshrl.u32 %v255, 7
      %v257 = vsub.s32 3, %v256
      %v258 = vrot.slane %v199, %v257
      %260 = vrot.lane.b32.xlu0 %v258, 17
      %v261 = vpop.permute.xlu0 %260
      %v263 = vmul.bf16 %v188, %v261
      %v265 = vpack.i.b16 %v173, %v173
      %v267 = vlaneseq
      %v268 = vshrl.u32 %v267, 7
      %v269 = vsub.s32 0, %v268
      %v270 = vrot.slane %v265, %v269
      %272 = vrot.lane.b32.xlu0 %v270, 18
      %v273 = vpop.permute.xlu0 %272
      %v275 = vmul.bf16 %v188, %v273
      %277 = vrot.lane.b32.xlu0 %v209, 127
      %v278 = vpop.permute.xlu0 %277
      %281 = vrot.lane.b32.xlu0 %v218, 126
      %v282 = vpop.permute.xlu0 %281
      %285 = vrot.lane.b32.xlu0 %v227, 120
      %v286 = vpop.permute.xlu0 %285
      %289 = vrot.lane.b32.xlu0 %v236, 119
      %v290 = vpop.permute.xlu0 %289
      %293 = vrot.lane.b32.xlu0 %v245, 118
      %v294 = vpop.permute.xlu0 %293
      %297 = vrot.lane.b32.xlu0 %v254, 112
      %v298 = vpop.permute.xlu0 %297
      %301 = vrot.lane.b32.xlu0 %v263, 111
      %v302 = vpop.permute.xlu0 %301
      %305 = vrot.lane.b32.xlu0 %v275, 110
      %v306 = vpop.permute.xlu0 %305
      %v308 = vld [vmem:[%s2] sm:$0xff]
      %v309 = vld [vmem:[%s2 + $0x8] sm:$0xff]
      %v312 = vunpack.c.l.b16 %v308
      %v313 = vunpack.c.h.b16 %v308
      %v314 = vunpack.c.l.b16 %v309
      %v315 = vunpack.c.h.b16 %v309
      %v316 = vpack.c.b16 %v314, %v312
      %v317 = vpack.c.b16 %v315, %v313
      %vm319 = vcmask 130048
      %v321 = vsel %vm319, %v317, 0
      %323 = vmatprep.subr.bf16.mxu0 0
      %324 = vmatpush1.bf16.msra.mxu0 %v197
      %325 = vmatprep.subr.bf16.mxu0 0
      %326 = vmatpush1.bf16.msra.mxu0 %v278
      %327 = vmatprep.subr.bf16.mxu0 0
      %328 = vmatpush1.bf16.msra.mxu0 %v282
      %329 = vmatprep.subr.bf16.mxu0 0
      %330 = vmatpush1.bf16.msra.mxu0 %v286
      %331 = vmatprep.subr.bf16.mxu0 0
      %332 = vmatpush1.bf16.msra.mxu0 %v290
      %333 = vmatprep.subr.bf16.mxu0 0
      %334 = vmatpush1.bf16.msra.mxu0 %v294
      %335 = vmatprep.subr.bf16.mxu0 0
      %336 = vmatpush1.bf16.msra.mxu0 %v298
      %337 = vmatprep.subr.bf16.mxu0 0
      %338 = vmatpush1.bf16.msra.mxu0 %v302
      %339 = vmatprep.subr.bf16.mxu0 0
      %340 = vmatpush1.bf16.msra.mxu0 %v306
      %341 = vmatprep.subr.bf16.mxu0 0
      %342 = vmatpush1.bf16.msra.mxu0 0
      %343 = vmatprep.subr.bf16.mxu0 0
      %344 = vmatpush1.bf16.msra.mxu0 0
      %345 = vmatprep.subr.bf16.mxu0 0
      %346 = vmatpush1.bf16.msra.mxu0 0
      %347 = vmatprep.subr.bf16.mxu0 0
      %348 = vmatpush1.bf16.msra.mxu0 0
      %349 = vmatprep.subr.bf16.mxu0 0
      %350 = vmatpush1.bf16.msra.mxu0 0
      %351 = vmatprep.subr.bf16.mxu0 0
      %352 = vmatpush1.bf16.msra.mxu0 0
      %353 = vmatprep.subr.bf16.mxu0 0
      %354 = vmatpush1.bf16.msra.mxu0 0
      %355 = vmatprep.mubr.bf16.mxu0 %v321
      %356 = vmatmul.mubr.bf16.gmra.mrb[0].mxu0 %v316
      %v357 = vpop.f32.mrb[0].mxu0
      %v358 = vadd.f32 0.0, %v357
      %v359 = vpop.f32.mrb[0].mxu0
      %v360 = vpop.f32.mrb[0].mxu0
      %v361 = vadd.f32 0.0, %v360
      %v362 = vpop.f32.mrb[0].mxu0
      %363 = vdwg.mxu0
      %vm364 = vcmask 523264
      %v365 = vsel %vm364, %v358, 0.0
      %366 = vadd.xlane.f32.xlu0 %v365
      %v367 = vpop.xlane.xlu0 %366
      %v368 = vsel %vm364, %v361, 0.0
      %369 = vadd.xlane.f32.xlu0 %v368
      %v370 = vpop.xlane.xlu0 %369
      %v371 = vrcp.pop 64.0
      %v372 = vmul.f32 %v367, %v371
      %v373 = vmul.f32 %v370, %v371
      %v374 = vsub.f32 %v358, %v372
      %v375 = vsub.f32 %v361, %v373
      %v376 = vmul.f32 %v374, %v374
      %v377 = vmul.f32 %v375, %v375
      %v378 = vsel %vm364, %v376, 0.0
      %379 = vadd.xlane.f32.xlu0 %v378
      %v380 = vpop.xlane.xlu0 %379
      %v381 = vsel %vm364, %v377, 0.0
      %382 = vadd.xlane.f32.xlu0 %v381
      %v383 = vpop.xlane.xlu0 %382
      %v384 = vmul.f32 %v380, %v371
      %v385 = vmul.f32 %v383, %v371
      %v386 = vadd.f32 %v384, 1e-05
      %v387 = vadd.f32 %v385, 1e-05
      %v388 = vrsqrt.pop %v386
      %v389 = vrsqrt.pop %v387
      %v390 = vmul.f32 %v374, %v388
      %v391 = vmul.f32 %v375, %v389
      %vm392 = vcmp.ge.f32.partialorder %v390, 0.0
      %vm393 = vcmp.ge.f32.partialorder %v391, 0.0
      %v394 = vmul.f32 %v390, 0.01
      %v395 = vmul.f32 %v391, 0.01
      %v396 = vsel %vm392, %v390, %v394
      %v397 = vsel %vm393, %v391, %v395
      %v398 = vpack.c.bf16 %v397, %v396
      %v400 = vunpack.c.l.b16 %v398
      %v401 = vunpack.c.h.b16 %v398
      %v402 = vpack.c.b16 %v400, %v400
      %v403 = vpack.c.b16 %v401, %v401
      %vm406 = vcmask 519168
      %407 = vst.msk [vmem:[%s170] sm:$0xf] %vm406, %v402
      %408 = vst.msk [vmem:[%s170 + $0x4] sm:$0xf] %vm406, %v403
      %p409 = scmp.lt.s32.totalorder %s14, 1
      %s410 = scalar_select %p409, %s14, 1
      %s411 = smul.addr %s410, 2
      %s412 = smul.addr %s411, 4
      %s413 = scalar_lea.vmem %s3, %s412
      // Predicated region
      $region33: #{_lambda_.16} parent=31 // pred_check
        %p414 = pneg %p100
      $region34: #{_lambda_.16} parent=31 // pred_check_branch
        %416 = sbr.rel (%p414) target = $region36
      $region35: #{_lambda_.16} parent=31 // pred_region
        _
      $region36: #{_lambda_.16} parent=31 // pred_fallthru
        _
    $region32: #{_lambda_.16} parent=5 // pred_fallthru
      _
    %p417 = scmp.le.s32.totalorder 2, %s9
    // Predicated region
    $region37: #{_lambda_.16} parent=5 // pred_check
      %p418 = pneg %p417
    $region38: #{_lambda_.16} parent=5 // pred_check_branch
      %420 = sbr.rel (%p418) target = $region40
    $region39: #{_lambda_.16} parent=5 // pred_region
      %s421 = ssub.s32 %s9, 2
      // Predicated region
      $region41: #{_lambda_.16} parent=39 // pred_check
        %p422 = pneg %p106
      $region42: #{_lambda_.16} parent=39 // pred_check_branch
        %424 = sbr.rel (%p422) target = $region44
      $region43: #{_lambda_.16} parent=39 // pred_region
        %p425 = scmp.lt.s32.totalorder %s15, 1
        %s426 = scalar_select %p425, %s15, 1
        %s427 = smul.addr %s426, 2
        %s428 = smul.addr %s427, 4
        %s429 = scalar_lea.vmem %s3, %s428
      $region44: #{_lambda_.16} parent=39 // pred_fallthru
        _
    $region40: #{_lambda_.16} parent=5 // pred_fallthru
      _
  $region6: #{_lambda_.16} parent=0 // loop_footer
    %s13 = sadd.s32 1, %s9
  $region7: #{_lambda_.16} parent=0 // loop_footer_branch
    %8 = sbr.rel target = $region3
  $region8: #{_lambda_.16} parent=0 // loop_exit
    _

// kernel: _lambda_.19
$region0: #{_lambda_.19}
  #allocation0 [shape = 'u32[]', space=smem, size = 0x4, offset = 0x4, fixed_abs, tag = 'smem constant byte address 0x4 - core index']
  #allocation1 [shape = 'u32[144,128]{1,0:T(1,128)}', space=vmem, size = 0x12000, scoped, tag = 'internal scratch']
  %s0 = inlined_call_operand.vmem [shape: bf16[2,32,16], index: 0, kind: input, shape index: {}]
  %s1 = inlined_call_operand.vmem [shape: bf16[64,32], index: 1, kind: input, shape index: {}]
  %s2 = inlined_call_operand.vmem [shape: bf16[2,64,16], index: 2, kind: output, shape index: {}]
  %s3 = sld [smem:[#allocation0]]
  $region41: #{_lambda_.19} parent=0
    _
  %s5 = ssub.s32 1, %s3
  %s6 = scalar_select 0, %s5, %s3
  loop: start=0, step=1, limit=4
  $region2: #{_lambda_.19} parent=0 // loop_pre_header
    _
  $region3: #{_lambda_.19} parent=0 // loop_header
    %s8 = sphi 0, %s12
    %p9 = scmp.ge.s32.totalorder %s8, 4
    %s18 = sphi 0, %s20
    %s21 = sphi 0, %s18
    %s22 = sphi 0, %s21
    %s38 = sphi 0, %s22
    %s42 = sphi 0, %s42
    %s44 = sphi 0, %s42
    %s45 = sphi 0, %s44
    %s59 = sphi 0, %s45
    %s65 = sphi 0, %s67
    %s68 = sphi 0, %s65
    %s69 = sphi 0, %s68
    %s85 = sphi 0, %s69
  $region4: #{_lambda_.19} parent=0 // loop_header_branch
    %11 = sbr.rel (%p9) target = $region8
  $region5: #{_lambda_.19} parent=0 // loop_body
    %s13 = ssub.s32 %s8, 1
    %s14 = ssub.s32 %s8, 2
    %s15 = sadd.s32 %s8, 1
    %s16 = ssub.s32 %s8, %s15
    %p17 = scmp.eq.s32.totalorder %s16, 0
    %s19 = sadd.s32 %s18, 1
    %s20 = scalar_select %p17, %s18, %s19
    %p23 = pneg %p17
    %p24 = scmp.eq.s32.totalorder %s8, 1
    %p25 = por %p23, %p24
    %p26 = scmp.ne.s32.totalorder %s18, %s21
    %p27 = scmp.eq.s32.totalorder %s8, 0
    %p28 = por %p26, %p27
    %p29 = scmp.ne.s32.totalorder %s18, %s21
    %p30 = scmp.eq.s32.totalorder %s13, 1
    %p31 = por %p29, %p30
    %p32 = scmp.ne.s32.totalorder %s21, %s22
    %p33 = scmp.eq.s32.totalorder %s13, 0
    %p34 = por %p32, %p33
    %p35 = scmp.ne.s32.totalorder %s21, %s22
    %p36 = scmp.eq.s32.totalorder %s14, 1
    %p37 = por %p35, %p36
    %p39 = scmp.ne.s32.totalorder %s22, %s38
    %p40 = scmp.eq.s32.totalorder %s14, 0
    %p41 = por %p39, %p40
    %s43 = sadd.s32 %s42, 1
    %p46 = scmp.eq.s32.totalorder %s8, 1
    %p47 = scmp.ne.s32.totalorder %s42, %s44
    %p48 = scmp.eq.s32.totalorder %s8, 0
    %p49 = por %p47, %p48
    %p50 = scmp.ne.s32.totalorder %s42, %s44
    %p51 = scmp.eq.s32.totalorder %s13, 1
    %p52 = por %p50, %p51
    %p53 = scmp.ne.s32.totalorder %s44, %s45
    %p54 = scmp.eq.s32.totalorder %s13, 0
    %p55 = por %p53, %p54
    %p56 = scmp.ne.s32.totalorder %s44, %s45
    %p57 = scmp.eq.s32.totalorder %s14, 1
    %p58 = por %p56, %p57
    %p60 = scmp.ne.s32.totalorder %s45, %s59
    %p61 = scmp.eq.s32.totalorder %s14, 0
    %p62 = por %p60, %p61
    %s63 = ssub.s32 %s8, %s15
    %p64 = scmp.eq.s32.totalorder %s63, 0
    %s66 = sadd.s32 %s65, 1
    %s67 = scalar_select %p64, %s65, %s66
    %p70 = pneg %p64
    %p71 = scmp.eq.s32.totalorder %s8, 1
    %p72 = por %p70, %p71
    %p73 = scmp.ne.s32.totalorder %s65, %s68
    %p74 = scmp.eq.s32.totalorder %s8, 0
    %p75 = por %p73, %p74
    %p76 = scmp.ne.s32.totalorder %s65, %s68
    %p77 = scmp.eq.s32.totalorder %s13, 1
    %p78 = por %p76, %p77
    %p79 = scmp.ne.s32.totalorder %s68, %s69
    %p80 = scmp.eq.s32.totalorder %s13, 0
    %p81 = por %p79, %p80
    %p82 = scmp.ne.s32.totalorder %s68, %s69
    %p83 = scmp.eq.s32.totalorder %s14, 1
    %p84 = por %p82, %p83
    %p86 = scmp.ne.s32.totalorder %s69, %s85
    %p87 = scmp.eq.s32.totalorder %s14, 0
    %p88 = por %p86, %p87
    %p89 = scmp.le.s32.totalorder 1, %s8
    %p90 = scmp.lt.s32.totalorder %s8, 3
    %p91 = pnand %p89, %p90
    %p92 = pneg %p91
    // Predicated region
    $region9: #{_lambda_.19} parent=5 // pred_check
      _
    $region10: #{_lambda_.19} parent=5 // pred_check_branch
      %94 = sbr.rel (%p91) target = $region12
    $region11: #{_lambda_.19} parent=5 // pred_region
      %s95 = ssub.s32 %s8, 1
      // Predicated region
      $region13: #{_lambda_.19} parent=11 // pred_check
        %p96 = pneg %p55
      $region14: #{_lambda_.19} parent=11 // pred_check_branch
        %98 = sbr.rel (%p96) target = $region16
      $region15: #{_lambda_.19} parent=11 // pred_region
        _
      $region16: #{_lambda_.19} parent=11 // pred_fallthru
        _
    $region12: #{_lambda_.19} parent=5 // pred_fallthru
      _
    %p99 = scmp.lt.s32.totalorder %s8, 2
    // Predicated region
    $region17: #{_lambda_.19} parent=5 // pred_check
      %p100 = pneg %p99
    $region18: #{_lambda_.19} parent=5 // pred_check_branch
      %102 = sbr.rel (%p100) target = $region20
    $region19: #{_lambda_.19} parent=5 // pred_region
      // Predicated region
      $region21: #{_lambda_.19} parent=19 // pred_check
        %p103 = pneg %p28
      $region22: #{_lambda_.19} parent=19 // pred_check_branch
        %105 = sbr.rel (%p103) target = $region24
      $region23: #{_lambda_.19} parent=19 // pred_region
        %p106 = scmp.lt.s32.totalorder %s8, 1
        %s107 = scalar_select %p106, %s8, 1
        %s108 = smul.addr %s107, 4
        %s109 = smul.addr %s108, 4
        %s110 = scalar_lea.vmem %s0, %s109
      $region24: #{_lambda_.19} parent=19 // pred_fallthru
        _
    $region20: #{_lambda_.19} parent=5 // pred_fallthru
      _
    %p111 = scmp.le.s32.totalorder 1, %s8
    %p112 = scmp.lt.s32.totalorder %s8, 3
    %p113 = pnand %p111, %p112
    %p114 = pneg %p113
    // Predicated region
    $region25: #{_lambda_.19} parent=5 // pred_check
      _
    $region26: #{_lambda_.19} parent=5 // pred_check_branch
      %116 = sbr.rel (%p113) target = $region28
    $region27: #{_lambda_.19} parent=5 // pred_region
      %s117 = ssub.s32 %s8, 1
      %p118 = scmp.lt.s32.totalorder %s13, 1
      %s119 = scalar_select %p118, %s13, 1
      %s120 = smul.addr %s119, 4
      %s121 = smul.addr %s120, 4
      %s122 = scalar_lea.vmem %s0, %s121
      %p123 = pneg %p34
      %p124 = pneg %p31
      %p125 = pneg %p55
      %p126 = pneg %p52
      %p127 = pneg %p81
      %p128 = pneg %p78
      %p129 = scmp.lt.s32.totalorder %s13, 1
      %s130 = scalar_select %p129, %s13, 1
      %s131 = smul.addr %s130, 8
      %s132 = smul.addr %s131, 4
      %s133 = scalar_lea.vmem %s2, %s132
      %p134 = scmp.lt.s32.totalorder %s13, 1
      %s135 = scalar_select %p134, %s13, 1
      %s136 = smul.addr %s135, 4
      %s137 = smul.addr %s136, 4
      %s138 = scalar_lea.vmem %s0, %s137
      %p139 = scmp.lt.s32.totalorder %s13, 1
      %s140 = scalar_select %p139, %s13, 1
      %s141 = smul.addr %s140, 8
      %s142 = smul.addr %s141, 4
      %s143 = scalar_lea.vmem %s2, %s142
      %v145 = vld [vmem:[%s1] sm:$0xf]
      %v146 = vld [vmem:[%s1 + $0x4] sm:$0xf]
      %v147 = vld [vmem:[%s1 + $0x8] sm:$0xf]
      %v148 = vld [vmem:[%s1 + $0xc] sm:$0xf]
      %v149 = vld [vmem:[%s1 + $0x10] sm:$0xf]
      %v150 = vld [vmem:[%s1 + $0x14] sm:$0xf]
      %v151 = vld [vmem:[%s1 + $0x18] sm:$0xf]
      %v152 = vld [vmem:[%s1 + $0x1c] sm:$0xf]
      %v153 = vld [vmem:[%s138] sm:$0xf]
      %v154 = vld [vmem:[%s138 + $0x4] sm:$0xf]
      %v155 = vld [vmem:[%s138 + $0x8] sm:$0xf]
      %v156 = vld [vmem:[%s138 + $0xc] sm:$0xf]
      %v165 = vunpack.c.l.b16 %v145
      %v166 = vunpack.c.l.b16 %v146
      %v167 = vunpack.c.l.b16 %v147
      %v168 = vunpack.c.l.b16 %v148
      %v169 = vunpack.c.l.b16 %v149
      %v170 = vunpack.c.l.b16 %v150
      %v171 = vunpack.c.l.b16 %v151
      %v172 = vunpack.c.l.b16 %v152
      %v173 = vpack.c.b16 %v166, %v165
      %v174 = vpack.c.b16 %v168, %v167
      %v175 = vpack.c.b16 %v170, %v169
      %v176 = vpack.c.b16 %v172, %v171
      %v181 = vunpack.c.l.b16 %v153
      %v182 = vunpack.c.l.b16 %v154
      %v183 = vunpack.c.l.b16 %v155
      %v184 = vunpack.c.l.b16 %v156
      %v185 = vpack.c.b16 %v182, %v181
      %v186 = vpack.c.b16 %v184, %v183
      %vm189 = vcmask 261120
      %v191 = vsel %vm189, %v173, 0
      %v194 = vsel %vm189, %v174, 0
      %v197 = vsel %vm189, %v175, 0
      %v200 = vsel %vm189, %v176, 0
      %202 = vmatprep.subr.bf16.mxu0 0
      %203 = vmatpush1.bf16.msra.mxu0 %v185
      %204 = vmatprep.subr.bf16.mxu0 0
      %205 = vmatpush1.bf16.msra.mxu0 %v186
      %206 = vmatprep.subr.bf16.mxu0 0
      %207 = vmatpush1.bf16.msra.mxu0 0
      %208 = vmatprep.subr.bf16.mxu0 0
      %209 = vmatpush1.bf16.msra.mxu0 0
      %210 = vmatprep.subr.bf16.mxu0 0
      %211 = vmatpush1.bf16.msra.mxu0 0
      %212 = vmatprep.subr.bf16.mxu0 0
      %213 = vmatpush1.bf16.msra.mxu0 0
      %214 = vmatprep.subr.bf16.mxu0 0
      %215 = vmatpush1.bf16.msra.mxu0 0
      %216 = vmatprep.subr.bf16.mxu0 0
      %217 = vmatpush1.bf16.msra.mxu0 0
      %218 = vmatprep.subr.bf16.mxu0 0
      %219 = vmatpush1.bf16.msra.mxu0 0
      %220 = vmatprep.subr.bf16.mxu0 0
      %221 = vmatpush1.bf16.msra.mxu0 0
      %222 = vmatprep.subr.bf16.mxu0 0
      %223 = vmatpush1.bf16.msra.mxu0 0
      %224 = vmatprep.subr.bf16.mxu0 0
      %225 = vmatpush1.bf16.msra.mxu0 0
      %226 = vmatprep.subr.bf16.mxu0 0
      %227 = vmatpush1.bf16.msra.mxu0 0
      %228 = vmatprep.subr.bf16.mxu0 0
      %229 = vmatpush1.bf16.msra.mxu0 0
      %230 = vmatprep.subr.bf16.mxu0 0
      %231 = vmatpush1.bf16.msra.mxu0 0
      %232 = vmatprep.subr.bf16.mxu0 0
      %233 = vmatpush1.bf16.msra.mxu0 0
      %234 = vmatprep.mubr.bf16.mxu0 0
      %235 = vmatmul.mubr.bf16.gmra.mrb[0].mxu0 %v191
      %v236 = vpop.f32.mrb[0].mxu0
      %v237 = vadd.f32 0.0, %v236
      %v238 = vpop.f32.mrb[0].mxu0
      %v239 = vpop.f32.mrb[0].mxu0
      %v240 = vadd.f32 0.0, %v239
      %v241 = vpop.f32.mrb[0].mxu0
      %242 = vmatprep.mubr.bf16.mxu0 0
      %243 = vmatmul.mubr.bf16.gmra.mrb[0].mxu0 %v194
      %v244 = vpop.f32.mrb[0].mxu0
      %v245 = vadd.f32 0.0, %v244
      %v246 = vpop.f32.mrb[0].mxu0
      %v247 = vpop.f32.mrb[0].mxu0
      %v248 = vadd.f32 0.0, %v247
      %v249 = vpop.f32.mrb[0].mxu0
      %250 = vmatprep.mubr.bf16.mxu0 0
      %251 = vmatmul.mubr.bf16.gmra.mrb[0].mxu0 %v197
      %v252 = vpop.f32.mrb[0].mxu0
      %v253 = vadd.f32 0.0, %v252
      %v254 = vpop.f32.mrb[0].mxu0
      %v255 = vpop.f32.mrb[0].mxu0
      %v256 = vadd.f32 0.0, %v255
      %v257 = vpop.f32.mrb[0].mxu0
      %258 = vmatprep.mubr.bf16.mxu0 0
      %259 = vmatmul.mubr.bf16.gmra.mrb[0].mxu0 %v200
      %v260 = vpop.f32.mrb[0].mxu0
      %v261 = vadd.f32 0.0, %v260
      %v262 = vpop.f32.mrb[0].mxu0
      %v263 = vpop.f32.mrb[0].mxu0
      %v264 = vadd.f32 0.0, %v263
      %v265 = vpop.f32.mrb[0].mxu0
      %266 = vdwg.mxu0
      %v267 = vpack.c.bf16 %v240, %v237
      %v268 = vpack.c.bf16 %v248, %v245
      %v269 = vpack.c.bf16 %v256, %v253
      %v270 = vpack.c.bf16 %v264, %v261
      %v275 = vunpack.c.l.b16 %v267
      %v276 = vunpack.c.h.b16 %v267
      %v277 = vunpack.c.l.b16 %v268
      %v278 = vunpack.c.h.b16 %v268
      %v279 = vunpack.c.l.b16 %v269
      %v280 = vunpack.c.h.b16 %v269
      %v281 = vunpack.c.l.b16 %v270
      %v282 = vunpack.c.h.b16 %v270
      %v283 = vpack.c.b16 %v275, %v275
      %v284 = vpack.c.b16 %v276, %v276
      %v285 = vpack.c.b16 %v277, %v277
      %v286 = vpack.c.b16 %v278, %v278
      %v287 = vpack.c.b16 %v279, %v279
      %v288 = vpack.c.b16 %v280, %v280
      %v289 = vpack.c.b16 %v281, %v281
      %v290 = vpack.c.b16 %v282, %v282
      %vm299 = vcmask 125952
      %300 = vst.msk [vmem:[%s143] sm:$0xf] %vm299, %v283
      %301 = vst.msk [vmem:[%s143 + $0x4] sm:$0xf] %vm299, %v284
      %302 = vst.msk [vmem:[%s143 + $0x8] sm:$0xf] %vm299, %v285
      %303 = vst.msk [vmem:[%s143 + $0xc] sm:$0xf] %vm299, %v286
      %304 = vst.msk [vmem:[%s143 + $0x10] sm:$0xf] %vm299, %v287
      %305 = vst.msk [vmem:[%s143 + $0x14] sm:$0xf] %vm299, %v288
      %306 = vst.msk [vmem:[%s143 + $0x18] sm:$0xf] %vm299, %v289
      %307 = vst.msk [vmem:[%s143 + $0x1c] sm:$0xf] %vm299, %v290
      %p308 = scmp.lt.s32.totalorder %s13, 1
      %s309 = scalar_select %p308, %s13, 1
      %s310 = smul.addr %s309, 8
      %s311 = smul.addr %s310, 4
      %s312 = scalar_lea.vmem %s2, %s311
      // Predicated region
      $region29: #{_lambda_.19} parent=27 // pred_check
        %p313 = pneg %p78
      $region30: #{_lambda_.19} parent=27 // pred_check_branch
        %315 = sbr.rel (%p313) target = $region32
      $region31: #{_lambda_.19} parent=27 // pred_region
        _
      $region32: #{_lambda_.19} parent=27 // pred_fallthru
        _
    $region28: #{_lambda_.19} parent=5 // pred_fallthru
      _
    %p316 = scmp.le.s32.totalorder 2, %s8
    // Predicated region
    $region33: #{_lambda_.19} parent=5 // pred_check
      %p317 = pneg %p316
    $region34: #{_lambda_.19} parent=5 // pred_check_branch
      %319 = sbr.rel (%p317) target = $region36
    $region35: #{_lambda_.19} parent=5 // pred_region
      %s320 = ssub.s32 %s8, 2
      // Predicated region
      $region37: #{_lambda_.19} parent=35 // pred_check
        %p321 = pneg %p84
      $region38: #{_lambda_.19} parent=35 // pred_check_branch
        %323 = sbr.rel (%p321) target = $region40
      $region39: #{_lambda_.19} parent=35 // pred_region
        %p324 = scmp.lt.s32.totalorder %s14, 1
        %s325 = scalar_select %p324, %s14, 1
        %s326 = smul.addr %s325, 8
        %s327 = smul.addr %s326, 4
        %s328 = scalar_lea.vmem %s2, %s327
      $region40: #{_lambda_.19} parent=35 // pred_fallthru
        _
    $region36: #{_lambda_.19} parent=5 // pred_fallthru
      _
  $region6: #{_lambda_.19} parent=0 // loop_footer
    %s12 = sadd.s32 1, %s8
  $region7: #{_lambda_.19} parent=0 // loop_footer_branch
    %7 = sbr.rel target = $region3
  $region8: #{_lambda_.19} parent=0 // loop_exit
    _

// kernel: _lambda_.17
$region0: #{_lambda_.17}
  #allocation0 [shape = 'u32[]', space=smem, size = 0x4, offset = 0x4, fixed_abs, tag = 'smem constant byte address 0x4 - core index']
  #allocation1 [shape = 'u32[144,128]{1,0:T(1,128)}', space=vmem, size = 0x12000, scoped, tag = 'internal scratch']
  %s0 = inlined_call_operand.vmem [shape: bf16[2,64,16], index: 0, kind: input, shape index: {}]
  %s1 = inlined_call_operand.vmem [shape: bf16[4,16], index: 1, kind: input, shape index: {}]
  %s2 = inlined_call_operand.vmem [shape: bf16[32,256], index: 2, kind: input, shape index: {}]
  %s3 = inlined_call_operand.vmem [shape: bf16[2,32,16], index: 3, kind: output, shape index: {}]
  %s4 = sld [smem:[#allocation0]]
  $region45: #{_lambda_.17} parent=0
    _
  %s6 = ssub.s32 1, %s4
  %s7 = scalar_select 0, %s6, %s4
  loop: start=0, step=1, limit=4
  $region2: #{_lambda_.17} parent=0 // loop_pre_header
    _
  $region3: #{_lambda_.17} parent=0 // loop_header
    %s9 = sphi 0, %s13
    %p10 = scmp.ge.s32.totalorder %s9, 4
    %s19 = sphi 0, %s21
    %s22 = sphi 0, %s19
    %s23 = sphi 0, %s22
    %s39 = sphi 0, %s23
    %s43 = sphi 0, %s43
    %s45 = sphi 0, %s43
    %s46 = sphi 0, %s45
    %s60 = sphi 0, %s46
    %s64 = sphi 0, %s64
    %s66 = sphi 0, %s64
    %s67 = sphi 0, %s66
    %s81 = sphi 0, %s67
    %s87 = sphi 0, %s89
    %s90 = sphi 0, %s87
    %s91 = sphi 0, %s90
    %s107 = sphi 0, %s91
  $region4: #{_lambda_.17} parent=0 // loop_header_branch
    %12 = sbr.rel (%p10) target = $region8
  $region5: #{_lambda_.17} parent=0 // loop_body
    %s14 = ssub.s32 %s9, 1
    %s15 = ssub.s32 %s9, 2
    %s16 = sadd.s32 %s9, 1
    %s17 = ssub.s32 %s9, %s16
    %p18 = scmp.eq.s32.totalorder %s17, 0
    %s20 = sadd.s32 %s19, 1
    %s21 = scalar_select %p18, %s19, %s20
    %p24 = pneg %p18
    %p25 = scmp.eq.s32.totalorder %s9, 1
    %p26 = por %p24, %p25
    %p27 = scmp.ne.s32.totalorder %s19, %s22
    %p28 = scmp.eq.s32.totalorder %s9, 0
    %p29 = por %p27, %p28
    %p30 = scmp.ne.s32.totalorder %s19, %s22
    %p31 = scmp.eq.s32.totalorder %s14, 1
    %p32 = por %p30, %p31
    %p33 = scmp.ne.s32.totalorder %s22, %s23
    %p34 = scmp.eq.s32.totalorder %s14, 0
    %p35 = por %p33, %p34
    %p36 = scmp.ne.s32.totalorder %s22, %s23
    %p37 = scmp.eq.s32.totalorder %s15, 1
    %p38 = por %p36, %p37
    %p40 = scmp.ne.s32.totalorder %s23, %s39
    %p41 = scmp.eq.s32.totalorder %s15, 0
    %p42 = por %p40, %p41
    %s44 = sadd.s32 %s43, 1
    %p47 = scmp.eq.s32.totalorder %s9, 1
    %p48 = scmp.ne.s32.totalorder %s43, %s45
    %p49 = scmp.eq.s32.totalorder %s9, 0
    %p50 = por %p48, %p49
    %p51 = scmp.ne.s32.totalorder %s43, %s45
    %p52 = scmp.eq.s32.totalorder %s14, 1
    %p53 = por %p51, %p52
    %p54 = scmp.ne.s32.totalorder %s45, %s46
    %p55 = scmp.eq.s32.totalorder %s14, 0
    %p56 = por %p54, %p55
    %p57 = scmp.ne.s32.totalorder %s45, %s46
    %p58 = scmp.eq.s32.totalorder %s15, 1
    %p59 = por %p57, %p58
    %p61 = scmp.ne.s32.totalorder %s46, %s60
    %p62 = scmp.eq.s32.totalorder %s15, 0
    %p63 = por %p61, %p62
    %s65 = sadd.s32 %s64, 1
    %p68 = scmp.eq.s32.totalorder %s9, 1
    %p69 = scmp.ne.s32.totalorder %s64, %s66
    %p70 = scmp.eq.s32.totalorder %s9, 0
    %p71 = por %p69, %p70
    %p72 = scmp.ne.s32.totalorder %s64, %s66
    %p73 = scmp.eq.s32.totalorder %s14, 1
    %p74 = por %p72, %p73
    %p75 = scmp.ne.s32.totalorder %s66, %s67
    %p76 = scmp.eq.s32.totalorder %s14, 0
    %p77 = por %p75, %p76
    %p78 = scmp.ne.s32.totalorder %s66, %s67
    %p79 = scmp.eq.s32.totalorder %s15, 1
    %p80 = por %p78, %p79
    %p82 = scmp.ne.s32.totalorder %s67, %s81
    %p83 = scmp.eq.s32.totalorder %s15, 0
    %p84 = por %p82, %p83
    %s85 = ssub.s32 %s9, %s16
    %p86 = scmp.eq.s32.totalorder %s85, 0
    %s88 = sadd.s32 %s87, 1
    %s89 = scalar_select %p86, %s87, %s88
    %p92 = pneg %p86
    %p93 = scmp.eq.s32.totalorder %s9, 1
    %p94 = por %p92, %p93
    %p95 = scmp.ne.s32.totalorder %s87, %s90
    %p96 = scmp.eq.s32.totalorder %s9, 0
    %p97 = por %p95, %p96
    %p98 = scmp.ne.s32.totalorder %s87, %s90
    %p99 = scmp.eq.s32.totalorder %s14, 1
    %p100 = por %p98, %p99
    %p101 = scmp.ne.s32.totalorder %s90, %s91
    %p102 = scmp.eq.s32.totalorder %s14, 0
    %p103 = por %p101, %p102
    %p104 = scmp.ne.s32.totalorder %s90, %s91
    %p105 = scmp.eq.s32.totalorder %s15, 1
    %p106 = por %p104, %p105
    %p108 = scmp.ne.s32.totalorder %s91, %s107
    %p109 = scmp.eq.s32.totalorder %s15, 0
    %p110 = por %p108, %p109
    %p111 = scmp.le.s32.totalorder 1, %s9
    %p112 = scmp.lt.s32.totalorder %s9, 3
    %p113 = pnand %p111, %p112
    %p114 = pneg %p113
    // Predicated region
    $region9: #{_lambda_.17} parent=5 // pred_check
      _
    $region10: #{_lambda_.17} parent=5 // pred_check_branch
      %116 = sbr.rel (%p113) target = $region12
    $region11: #{_lambda_.17} parent=5 // pred_region
      %s117 = ssub.s32 %s9, 1
      // Predicated region
      $region13: #{_lambda_.17} parent=11 // pred_check
        %p118 = pneg %p56
      $region14: #{_lambda_.17} parent=11 // pred_check_branch
        %120 = sbr.rel (%p118) target = $region16
      $region15: #{_lambda_.17} parent=11 // pred_region
        _
      $region16: #{_lambda_.17} parent=11 // pred_fallthru
        _
      // Predicated region
      $region17: #{_lambda_.17} parent=11 // pred_check
        %p121 = pneg %p77
      $region18: #{_lambda_.17} parent=11 // pred_check_branch
        %123 = sbr.rel (%p121) target = $region20
      $region19: #{_lambda_.17} parent=11 // pred_region
        _
      $region20: #{_lambda_.17} parent=11 // pred_fallthru
        _
    $region12: #{_lambda_.17} parent=5 // pred_fallthru
      _
    %p124 = scmp.lt.s32.totalorder %s9, 2
    // Predicated region
    $region21: #{_lambda_.17} parent=5 // pred_check
      %p125 = pneg %p124
    $region22: #{_lambda_.17} parent=5 // pred_check_branch
      %127 = sbr.rel (%p125) target = $region24
    $region23: #{_lambda_.17} parent=5 // pred_region
      // Predicated region
      $region25: #{_lambda_.17} parent=23 // pred_check
        %p128 = pneg %p29
      $region26: #{_lambda_.17} parent=23 // pred_check_branch
        %130 = sbr.rel (%p128) target = $region28
      $region27: #{_lambda_.17} parent=23 // pred_region
        %p131 = scmp.lt.s32.totalorder %s9, 1
        %s132 = scalar_select %p131, %s9, 1
        %s133 = smul.addr %s132, 8
        %s134 = smul.addr %s133, 4
        %s135 = scalar_lea.vmem %s0, %s134
      $region28: #{_lambda_.17} parent=23 // pred_fallthru
        _
    $region24: #{_lambda_.17} parent=5 // pred_fallthru
      _
    %p136 = scmp.le.s32.totalorder 1, %s9
    %p137 = scmp.lt.s32.totalorder %s9, 3
    %p138 = pnand %p136, %p137
    %p139 = pneg %p138
    // Predicated region
    $region29: #{_lambda_.17} parent=5 // pred_check
      _
    $region30: #{_lambda_.17} parent=5 // pred_check_branch
      %141 = sbr.rel (%p138) target = $region32
    $region31: #{_lambda_.17} parent=5 // pred_region
      %s142 = ssub.s32 %s9, 1
      %p143 = scmp.lt.s32.totalorder %s14, 1
      %s144 = scalar_select %p143, %s14, 1
      %s145 = smul.addr %s144, 8
      %s146 = smul.addr %s145, 4
      %s147 = scalar_lea.vmem %s0, %s146
      %p148 = pneg %p35
      %p149 = pneg %p32
      %p150 = pneg %p56
      %p151 = pneg %p53
      %p152 = pneg %p77
      %p153 = pneg %p74
      %p154 = pneg %p103
      %p155 = pneg %p100
      %p156 = scmp.lt.s32.totalorder %s14, 1
      %s157 = scalar_select %p156, %s14, 1
      %s158 = smul.addr %s157, 4
      %s159 = smul.addr %s158, 4
      %s160 = scalar_lea.vmem %s3, %s159
      %p161 = scmp.lt.s32.totalorder %s14, 1
      %s162 = scalar_select %p161, %s14, 1
      %s163 = smul.addr %s162, 8
      %s164 = smul.addr %s163, 4
      %s165 = scalar_lea.vmem %s0, %s164
      %p166 = scmp.lt.s32.totalorder %s14, 1
      %s167 = scalar_select %p166, %s14, 1
      %s168 = smul.addr %s167, 4
      %s169 = smul.addr %s168, 4
      %s170 = scalar_lea.vmem %s3, %s169
      %v172 = vld [vmem:[%s1] sm:$0x3]
      %v173 = vld [vmem:[%s165] sm:$0xf]
      %v174 = vld [vmem:[%s165 + $0x4] sm:$0xf]
      %v175 = vld [vmem:[%s165 + $0x8] sm:$0xf]
      %v176 = vld [vmem:[%s165 + $0xc] sm:$0xf]
      %v177 = vld [vmem:[%s165 + $0x10] sm:$0xf]
      %v178 = vld [vmem:[%s165 + $0x14] sm:$0xf]
      %v179 = vld [vmem:[%s165 + $0x18] sm:$0xf]
      %v180 = vld [vmem:[%s165 + $0x1c] sm:$0xf]
      %v189 = vunpack.c.l.b16 %v173
      %v190 = vunpack.c.l.b16 %v174
      %v191 = vunpack.c.l.b16 %v175
      %v192 = vunpack.c.l.b16 %v176
      %v193 = vunpack.c.l.b16 %v177
      %v194 = vunpack.c.l.b16 %v178
      %v195 = vunpack.c.l.b16 %v179
      %v196 = vunpack.c.l.b16 %v180
      %v197 = vpack.c.b16 %v190, %v189
      %v198 = vpack.c.b16 %v192, %v191
      %v199 = vpack.c.b16 %v194, %v193
      %v200 = vpack.c.b16 %v196, %v195
      %201 = vrot.lane.b32.xlu0 %v197, 5
      %v202 = vpop.permute.xlu0 %201
      %203 = vrot.lane.b32.xlu0 %v198, 5
      %v204 = vpop.permute.xlu0 %203
      %205 = vrot.lane.b32.xlu0 %v199, 5
      %v206 = vpop.permute.xlu0 %205
      %207 = vrot.lane.b32.xlu0 %v200, 5
      %v208 = vpop.permute.xlu0 %207
      %vm209 = vcmask 39936
      %v212 = vsel %vm209, 0, %v202
      %v214 = vsel %vm209, 0, %v204
      %v216 = vsel %vm209, 0, %v206
      %v218 = vsel %vm209, 0, %v208
      %vm219 = vcmask 171008
      %v220 = vsel %vm219, %v212, 0
      %v222 = vsel %vm219, %v214, 0
      %v224 = vsel %vm219, %v216, 0
      %v226 = vsel %vm219, %v218, 0
      %v229 = vpack.i.b16 %v172, %v172
      %v231 = vlaneseq
      %v232 = vshrl.u32 %v231, 7
      %v233 = vsub.s32 0, %v232
      %v234 = vrot.slane %v229, %v233
      %v235 = vmul.bf16 %v220, %v234
      %v236 = vmul.bf16 %v222, %v234
      %v237 = vmul.bf16 %v224, %v234
      %v238 = vmul.bf16 %v226, %v234
      %v239 = vshrl.u32 %v172, 16
      %v240 = vpack.i.b16 %v239, %v239
      %v242 = vlaneseq
      %v243 = vshrl.u32 %v242, 7
      %v244 = vsub.s32 0, %v243
      %v245 = vrot.slane %v240, %v244
      %247 = vrot.lane.b32.xlu0 %v245, 1
      %v248 = vpop.permute.xlu0 %247
      %v250 = vmul.bf16 %v220, %v248
      %v251 = vmul.bf16 %v222, %v248
      %v252 = vmul.bf16 %v224, %v248
      %v253 = vmul.bf16 %v226, %v248
      %v254 = vlaneseq
      %v255 = vshrl.u32 %v254, 7
      %v256 = vsub.s32 1, %v255
      %v257 = vrot.slane %v229, %v256
      %259 = vrot.lane.b32.xlu0 %v257, 4
      %v260 = vpop.permute.xlu0 %259
      %v262 = vmul.bf16 %v220, %v260
      %v263 = vmul.bf16 %v222, %v260
      %v264 = vmul.bf16 %v224, %v260
      %v265 = vmul.bf16 %v226, %v260
      %v266 = vlaneseq
      %v267 = vshrl.u32 %v266, 7
      %v268 = vsub.s32 1, %v267
      %v269 = vrot.slane %v240, %v268
      %271 = vrot.lane.b32.xlu0 %v269, 5
      %v272 = vpop.permute.xlu0 %271
      %v274 = vmul.bf16 %v220, %v272
      %v275 = vmul.bf16 %v222, %v272
      %v276 = vmul.bf16 %v224, %v272
      %v277 = vmul.bf16 %v226, %v272
      %282 = vrot.lane.b32.xlu0 %v250, 127
      %v283 = vpop.permute.xlu0 %282
      %284 = vrot.lane.b32.xlu0 %v251, 127
      %v285 = vpop.permute.xlu0 %284
      %286 = vrot.lane.b32.xlu0 %v252, 127
      %v287 = vpop.permute.xlu0 %286
      %288 = vrot.lane.b32.xlu0 %v253, 127
      %v289 = vpop.permute.xlu0 %288
      %298 = vrot.lane.b32.xlu0 %v262, 124
      %v299 = vpop.permute.xlu0 %298
      %300 = vrot.lane.b32.xlu0 %v263, 124
      %v301 = vpop.permute.xlu0 %300
      %302 = vrot.lane.b32.xlu0 %v264, 124
      %v303 = vpop.permute.xlu0 %302
      %304 = vrot.lane.b32.xlu0 %v265, 124
      %v305 = vpop.permute.xlu0 %304
      %314 = vrot.lane.b32.xlu0 %v274, 123
      %v315 = vpop.permute.xlu0 %314
      %316 = vrot.lane.b32.xlu0 %v275, 123
      %v317 = vpop.permute.xlu0 %316
      %318 = vrot.lane.b32.xlu0 %v276, 123
      %v319 = vpop.permute.xlu0 %318
      %320 = vrot.lane.b32.xlu0 %v277, 123
      %v321 = vpop.permute.xlu0 %320
      %v326 = vld [vmem:[%s2] sm:$0xff]
      %v327 = vld [vmem:[%s2 + $0x8] sm:$0xff]
      %v328 = vld [vmem:[%s2 + $0x10] sm:$0xff]
      %v329 = vld [vmem:[%s2 + $0x18] sm:$0xff]
      %v334 = vunpack.c.l.b16 %v326
      %v335 = vunpack.c.h.b16 %v326
      %v336 = vunpack.c.l.b16 %v327
      %v337 = vunpack.c.h.b16 %v327
      %v338 = vunpack.c.l.b16 %v328
      %v339 = vunpack.c.h.b16 %v328
      %v340 = vunpack.c.l.b16 %v329
      %v341 = vunpack.c.h.b16 %v329
      %v342 = vpack.c.b16 %v336, %v334
      %v343 = vpack.c.b16 %v337, %v335
      %v344 = vpack.c.b16 %v340, %v338
      %v345 = vpack.c.b16 %v341, %v339
      %350 = vmatprep.subr.bf16.mxu0 0
      %351 = vmatpush1.bf16.msra.mxu0 %v235
      %352 = vmatprep.subr.bf16.mxu0 0
      %353 = vmatpush1.bf16.msra.mxu0 %v236
      %354 = vmatprep.subr.bf16.mxu0 0
      %355 = vmatpush1.bf16.msra.mxu0 %v237
      %356 = vmatprep.subr.bf16.mxu0 0
      %357 = vmatpush1.bf16.msra.mxu0 %v238
      %358 = vmatprep.subr.bf16.mxu0 0
      %359 = vmatpush1.bf16.msra.mxu0 %v283
      %360 = vmatprep.subr.bf16.mxu0 0
      %361 = vmatpush1.bf16.msra.mxu0 %v285
      %362 = vmatprep.subr.bf16.mxu0 0
      %363 = vmatpush1.bf16.msra.mxu0 %v287
      %364 = vmatprep.subr.bf16.mxu0 0
      %365 = vmatpush1.bf16.msra.mxu0 %v289
      %366 = vmatprep.subr.bf16.mxu0 0
      %367 = vmatpush1.bf16.msra.mxu0 %v299
      %368 = vmatprep.subr.bf16.mxu0 0
      %369 = vmatpush1.bf16.msra.mxu0 %v301
      %370 = vmatprep.subr.bf16.mxu0 0
      %371 = vmatpush1.bf16.msra.mxu0 %v303
      %372 = vmatprep.subr.bf16.mxu0 0
      %373 = vmatpush1.bf16.msra.mxu0 %v305
      %374 = vmatprep.subr.bf16.mxu0 0
      %375 = vmatpush1.bf16.msra.mxu0 %v315
      %376 = vmatprep.subr.bf16.mxu0 0
      %377 = vmatpush1.bf16.msra.mxu0 %v317
      %378 = vmatprep.subr.bf16.mxu0 0
      %379 = vmatpush1.bf16.msra.mxu0 %v319
      %380 = vmatprep.subr.bf16.mxu0 0
      %381 = vmatpush1.bf16.msra.mxu0 %v321
      %382 = vmatprep.mubr.bf16.mxu0 %v343
      %383 = vmatmul.mubr.bf16.gmra.mrb[0].mxu0 %v342
      %v384 = vpop.f32.mrb[0].mxu0
      %v385 = vadd.f32 0.0, %v384
      %v386 = vpop.f32.mrb[0].mxu0
      %v387 = vpop.f32.mrb[0].mxu0
      %v388 = vadd.f32 0.0, %v387
      %v389 = vpop.f32.mrb[0].mxu0
      %390 = vmatprep.mubr.bf16.mxu0 %v345
      %391 = vmatmul.mubr.bf16.gmra.mrb[0].mxu0 %v344
      %v392 = vpop.f32.mrb[0].mxu0
      %v393 = vadd.f32 0.0, %v392
      %v394 = vpop.f32.mrb[0].mxu0
      %v395 = vpop.f32.mrb[0].mxu0
      %v396 = vadd.f32 0.0, %v395
      %v397 = vpop.f32.mrb[0].mxu0
      %398 = vdwg.mxu0
      %vm399 = vcmask 130048
      %v400 = vsel %vm399, %v385, 0.0
      %401 = vadd.xlane.f32.xlu0 %v400
      %v402 = vpop.xlane.xlu0 %401
      %v403 = vsel %vm399, %v388, 0.0
      %404 = vadd.xlane.f32.xlu0 %v403
      %v405 = vpop.xlane.xlu0 %404
      %v406 = vsel %vm399, %v393, 0.0
      %407 = vadd.xlane.f32.xlu0 %v406
      %v408 = vpop.xlane.xlu0 %407
      %v409 = vsel %vm399, %v396, 0.0
      %410 = vadd.xlane.f32.xlu0 %v409
      %v411 = vpop.xlane.xlu0 %410
      %v412 = vrcp.pop 16.0
      %v413 = vmul.f32 %v402, %v412
      %v414 = vmul.f32 %v405, %v412
      %v415 = vmul.f32 %v408, %v412
      %v416 = vmul.f32 %v411, %v412
      %v417 = vsub.f32 %v385, %v413
      %v418 = vsub.f32 %v388, %v414
      %v419 = vsub.f32 %v393, %v415
      %v420 = vsub.f32 %v396, %v416
      %v421 = vmul.f32 %v417, %v417
      %v422 = vmul.f32 %v418, %v418
      %v423 = vmul.f32 %v419, %v419
      %v424 = vmul.f32 %v420, %v420
      %v425 = vsel %vm399, %v421, 0.0
      %426 = vadd.xlane.f32.xlu0 %v425
      %v427 = vpop.xlane.xlu0 %426
      %v428 = vsel %vm399, %v422, 0.0
      %429 = vadd.xlane.f32.xlu0 %v428
      %v430 = vpop.xlane.xlu0 %429
      %v431 = vsel %vm399, %v423, 0.0
      %432 = vadd.xlane.f32.xlu0 %v431
      %v433 = vpop.xlane.xlu0 %432
      %v434 = vsel %vm399, %v424, 0.0
      %435 = vadd.xlane.f32.xlu0 %v434
      %v436 = vpop.xlane.xlu0 %435
      %v437 = vmul.f32 %v427, %v412
      %v438 = vmul.f32 %v430, %v412
      %v439 = vmul.f32 %v433, %v412
      %v440 = vmul.f32 %v436, %v412
      %v441 = vadd.f32 %v437, 1e-05
      %v442 = vadd.f32 %v438, 1e-05
      %v443 = vadd.f32 %v439, 1e-05
      %v444 = vadd.f32 %v440, 1e-05
      %v445 = vrsqrt.pop %v441
      %v446 = vrsqrt.pop %v442
      %v447 = vrsqrt.pop %v443
      %v448 = vrsqrt.pop %v444
      %v449 = vmul.f32 %v417, %v445
      %v450 = vmul.f32 %v418, %v446
      %v451 = vmul.f32 %v419, %v447
      %v452 = vmul.f32 %v420, %v448
      %vm453 = vcmp.ge.f32.partialorder %v449, 0.0
      %vm454 = vcmp.ge.f32.partialorder %v450, 0.0
      %vm455 = vcmp.ge.f32.partialorder %v451, 0.0
      %vm456 = vcmp.ge.f32.partialorder %v452, 0.0
      %v457 = vmul.f32 %v449, 0.01
      %v458 = vmul.f32 %v450, 0.01
      %v459 = vmul.f32 %v451, 0.01
      %v460 = vmul.f32 %v452, 0.01
      %v461 = vsel %vm453, %v449, %v457
      %v462 = vsel %vm454, %v450, %v458
      %v463 = vsel %vm455, %v451, %v459
      %v464 = vsel %vm456, %v452, %v460
      %v465 = vpack.c.bf16 %v462, %v461
      %v466 = vpack.c.bf16 %v464, %v463
      %v469 = vunpack.c.l.b16 %v465
      %v470 = vunpack.c.h.b16 %v465
      %v471 = vunpack.c.l.b16 %v466
      %v472 = vunpack.c.h.b16 %v466
      %v473 = vpack.c.b16 %v469, %v469
      %v474 = vpack.c.b16 %v470, %v470
      %v475 = vpack.c.b16 %v471, %v471
      %v476 = vpack.c.b16 %v472, %v472
      %vm481 = vcmask 125952
      %482 = vst.msk [vmem:[%s170] sm:$0xf] %vm481, %v473
      %483 = vst.msk [vmem:[%s170 + $0x4] sm:$0xf] %vm481, %v474
      %484 = vst.msk [vmem:[%s170 + $0x8] sm:$0xf] %vm481, %v475
      %485 = vst.msk [vmem:[%s170 + $0xc] sm:$0xf] %vm481, %v476
      %p486 = scmp.lt.s32.totalorder %s14, 1
      %s487 = scalar_select %p486, %s14, 1
      %s488 = smul.addr %s487, 4
      %s489 = smul.addr %s488, 4
      %s490 = scalar_lea.vmem %s3, %s489
      // Predicated region
      $region33: #{_lambda_.17} parent=31 // pred_check
        %p491 = pneg %p100
      $region34: #{_lambda_.17} parent=31 // pred_check_branch
        %493 = sbr.rel (%p491) target = $region36
      $region35: #{_lambda_.17} parent=31 // pred_region
        _
      $region36: #{_lambda_.17} parent=31 // pred_fallthru
        _
    $region32: #{_lambda_.17} parent=5 // pred_fallthru
      _
    %p494 = scmp.le.s32.totalorder 2, %s9
    // Predicated region
    $region37: #{_lambda_.17} parent=5 // pred_check
      %p495 = pneg %p494
    $region38: #{_lambda_.17} parent=5 // pred_check_branch
      %497 = sbr.rel (%p495) target = $region40
    $region39: #{_lambda_.17} parent=5 // pred_region
      %s498 = ssub.s32 %s9, 2
      // Predicated region
      $region41: #{_lambda_.17} parent=39 // pred_check
        %p499 = pneg %p106
      $region42: #{_lambda_.17} parent=39 // pred_check_branch
        %501 = sbr.rel (%p499) target = $region44
      $region43: #{_lambda_.17} parent=39 // pred_region
        %p502 = scmp.lt.s32.totalorder %s15, 1
        %s503 = scalar_select %p502, %s15, 1
        %s504 = smul.addr %s503, 4
        %s505 = smul.addr %s504, 4
        %s506 = scalar_lea.vmem %s3, %s505
      $region44: #{_lambda_.17} parent=39 // pred_fallthru
        _
    $region40: #{_lambda_.17} parent=5 // pred_fallthru
      _
  $region6: #{_lambda_.17} parent=0 // loop_footer
    %s13 = sadd.s32 1, %s9
  $region7: #{_lambda_.17} parent=0 // loop_footer_branch
    %8 = sbr.rel target = $region3
  $region8: #{_lambda_.17} parent=0 // loop_exit
    _

// kernel: _lambda_.18
$region0: #{_lambda_.18}
  #allocation0 [shape = 'u32[]', space=smem, size = 0x4, offset = 0x4, fixed_abs, tag = 'smem constant byte address 0x4 - core index']
  #allocation1 [shape = 'u32[144,128]{1,0:T(1,128)}', space=vmem, size = 0x12000, scoped, tag = 'internal scratch']
  %s0 = inlined_call_operand.vmem [shape: bf16[2,32,16], index: 0, kind: input, shape index: {}]
  %s1 = inlined_call_operand.vmem [shape: bf16[9,16], index: 1, kind: input, shape index: {}]
  %s2 = inlined_call_operand.vmem [shape: bf16[32,288], index: 2, kind: input, shape index: {}]
  %s3 = inlined_call_operand.vmem [shape: bf16[2,32,16], index: 3, kind: output, shape index: {}]
  %s4 = sld [smem:[#allocation0]]
  $region45: #{_lambda_.18} parent=0
    _
  %s6 = ssub.s32 1, %s4
  %s7 = scalar_select 0, %s6, %s4
  loop: start=0, step=1, limit=4
  $region2: #{_lambda_.18} parent=0 // loop_pre_header
    _
  $region3: #{_lambda_.18} parent=0 // loop_header
    %s9 = sphi 0, %s13
    %p10 = scmp.ge.s32.totalorder %s9, 4
    %s19 = sphi 0, %s21
    %s22 = sphi 0, %s19
    %s23 = sphi 0, %s22
    %s39 = sphi 0, %s23
    %s43 = sphi 0, %s43
    %s45 = sphi 0, %s43
    %s46 = sphi 0, %s45
    %s60 = sphi 0, %s46
    %s64 = sphi 0, %s64
    %s66 = sphi 0, %s64
    %s67 = sphi 0, %s66
    %s81 = sphi 0, %s67
    %s87 = sphi 0, %s89
    %s90 = sphi 0, %s87
    %s91 = sphi 0, %s90
    %s107 = sphi 0, %s91
  $region4: #{_lambda_.18} parent=0 // loop_header_branch
    %12 = sbr.rel (%p10) target = $region8
  $region5: #{_lambda_.18} parent=0 // loop_body
    %s14 = ssub.s32 %s9, 1
    %s15 = ssub.s32 %s9, 2
    %s16 = sadd.s32 %s9, 1
    %s17 = ssub.s32 %s9, %s16
    %p18 = scmp.eq.s32.totalorder %s17, 0
    %s20 = sadd.s32 %s19, 1
    %s21 = scalar_select %p18, %s19, %s20
    %p24 = pneg %p18
    %p25 = scmp.eq.s32.totalorder %s9, 1
    %p26 = por %p24, %p25
    %p27 = scmp.ne.s32.totalorder %s19, %s22
    %p28 = scmp.eq.s32.totalorder %s9, 0
    %p29 = por %p27, %p28
    %p30 = scmp.ne.s32.totalorder %s19, %s22
    %p31 = scmp.eq.s32.totalorder %s14, 1
    %p32 = por %p30, %p31
    %p33 = scmp.ne.s32.totalorder %s22, %s23
    %p34 = scmp.eq.s32.totalorder %s14, 0
    %p35 = por %p33, %p34
    %p36 = scmp.ne.s32.totalorder %s22, %s23
    %p37 = scmp.eq.s32.totalorder %s15, 1
    %p38 = por %p36, %p37
    %p40 = scmp.ne.s32.totalorder %s23, %s39
    %p41 = scmp.eq.s32.totalorder %s15, 0
    %p42 = por %p40, %p41
    %s44 = sadd.s32 %s43, 1
    %p47 = scmp.eq.s32.totalorder %s9, 1
    %p48 = scmp.ne.s32.totalorder %s43, %s45
    %p49 = scmp.eq.s32.totalorder %s9, 0
    %p50 = por %p48, %p49
    %p51 = scmp.ne.s32.totalorder %s43, %s45
    %p52 = scmp.eq.s32.totalorder %s14, 1
    %p53 = por %p51, %p52
    %p54 = scmp.ne.s32.totalorder %s45, %s46
    %p55 = scmp.eq.s32.totalorder %s14, 0
    %p56 = por %p54, %p55
    %p57 = scmp.ne.s32.totalorder %s45, %s46
    %p58 = scmp.eq.s32.totalorder %s15, 1
    %p59 = por %p57, %p58
    %p61 = scmp.ne.s32.totalorder %s46, %s60
    %p62 = scmp.eq.s32.totalorder %s15, 0
    %p63 = por %p61, %p62
    %s65 = sadd.s32 %s64, 1
    %p68 = scmp.eq.s32.totalorder %s9, 1
    %p69 = scmp.ne.s32.totalorder %s64, %s66
    %p70 = scmp.eq.s32.totalorder %s9, 0
    %p71 = por %p69, %p70
    %p72 = scmp.ne.s32.totalorder %s64, %s66
    %p73 = scmp.eq.s32.totalorder %s14, 1
    %p74 = por %p72, %p73
    %p75 = scmp.ne.s32.totalorder %s66, %s67
    %p76 = scmp.eq.s32.totalorder %s14, 0
    %p77 = por %p75, %p76
    %p78 = scmp.ne.s32.totalorder %s66, %s67
    %p79 = scmp.eq.s32.totalorder %s15, 1
    %p80 = por %p78, %p79
    %p82 = scmp.ne.s32.totalorder %s67, %s81
    %p83 = scmp.eq.s32.totalorder %s15, 0
    %p84 = por %p82, %p83
    %s85 = ssub.s32 %s9, %s16
    %p86 = scmp.eq.s32.totalorder %s85, 0
    %s88 = sadd.s32 %s87, 1
    %s89 = scalar_select %p86, %s87, %s88
    %p92 = pneg %p86
    %p93 = scmp.eq.s32.totalorder %s9, 1
    %p94 = por %p92, %p93
    %p95 = scmp.ne.s32.totalorder %s87, %s90
    %p96 = scmp.eq.s32.totalorder %s9, 0
    %p97 = por %p95, %p96
    %p98 = scmp.ne.s32.totalorder %s87, %s90
    %p99 = scmp.eq.s32.totalorder %s14, 1
    %p100 = por %p98, %p99
    %p101 = scmp.ne.s32.totalorder %s90, %s91
    %p102 = scmp.eq.s32.totalorder %s14, 0
    %p103 = por %p101, %p102
    %p104 = scmp.ne.s32.totalorder %s90, %s91
    %p105 = scmp.eq.s32.totalorder %s15, 1
    %p106 = por %p104, %p105
    %p108 = scmp.ne.s32.totalorder %s91, %s107
    %p109 = scmp.eq.s32.totalorder %s15, 0
    %p110 = por %p108, %p109
    %p111 = scmp.le.s32.totalorder 1, %s9
    %p112 = scmp.lt.s32.totalorder %s9, 3
    %p113 = pnand %p111, %p112
    %p114 = pneg %p113
    // Predicated region
    $region9: #{_lambda_.18} parent=5 // pred_check
      _
    $region10: #{_lambda_.18} parent=5 // pred_check_branch
      %116 = sbr.rel (%p113) target = $region12
    $region11: #{_lambda_.18} parent=5 // pred_region
      %s117 = ssub.s32 %s9, 1
      // Predicated region
      $region13: #{_lambda_.18} parent=11 // pred_check
        %p118 = pneg %p56
      $region14: #{_lambda_.18} parent=11 // pred_check_branch
        %120 = sbr.rel (%p118) target = $region16
      $region15: #{_lambda_.18} parent=11 // pred_region
        _
      $region16: #{_lambda_.18} parent=11 // pred_fallthru
        _
      // Predicated region
      $region17: #{_lambda_.18} parent=11 // pred_check
        %p121 = pneg %p77
      $region18: #{_lambda_.18} parent=11 // pred_check_branch
        %123 = sbr.rel (%p121) target = $region20
      $region19: #{_lambda_.18} parent=11 // pred_region
        _
      $region20: #{_lambda_.18} parent=11 // pred_fallthru
        _
    $region12: #{_lambda_.18} parent=5 // pred_fallthru
      _
    %p124 = scmp.lt.s32.totalorder %s9, 2
    // Predicated region
    $region21: #{_lambda_.18} parent=5 // pred_check
      %p125 = pneg %p124
    $region22: #{_lambda_.18} parent=5 // pred_check_branch
      %127 = sbr.rel (%p125) target = $region24
    $region23: #{_lambda_.18} parent=5 // pred_region
      // Predicated region
      $region25: #{_lambda_.18} parent=23 // pred_check
        %p128 = pneg %p29
      $region26: #{_lambda_.18} parent=23 // pred_check_branch
        %130 = sbr.rel (%p128) target = $region28
      $region27: #{_lambda_.18} parent=23 // pred_region
        %p131 = scmp.lt.s32.totalorder %s9, 1
        %s132 = scalar_select %p131, %s9, 1
        %s133 = smul.addr %s132, 4
        %s134 = smul.addr %s133, 4
        %s135 = scalar_lea.vmem %s0, %s134
      $region28: #{_lambda_.18} parent=23 // pred_fallthru
        _
    $region24: #{_lambda_.18} parent=5 // pred_fallthru
      _
    %p136 = scmp.le.s32.totalorder 1, %s9
    %p137 = scmp.lt.s32.totalorder %s9, 3
    %p138 = pnand %p136, %p137
    %p139 = pneg %p138
    // Predicated region
    $region29: #{_lambda_.18} parent=5 // pred_check
      _
    $region30: #{_lambda_.18} parent=5 // pred_check_branch
      %141 = sbr.rel (%p138) target = $region32
    $region31: #{_lambda_.18} parent=5 // pred_region
      %s142 = ssub.s32 %s9, 1
      %p143 = scmp.lt.s32.totalorder %s14, 1
      %s144 = scalar_select %p143, %s14, 1
      %s145 = smul.addr %s144, 4
      %s146 = smul.addr %s145, 4
      %s147 = scalar_lea.vmem %s0, %s146
      %p148 = pneg %p35
      %p149 = pneg %p32
      %p150 = pneg %p56
      %p151 = pneg %p53
      %p152 = pneg %p77
      %p153 = pneg %p74
      %p154 = pneg %p103
      %p155 = pneg %p100
      %p156 = scmp.lt.s32.totalorder %s14, 1
      %s157 = scalar_select %p156, %s14, 1
      %s158 = smul.addr %s157, 4
      %s159 = smul.addr %s158, 4
      %s160 = scalar_lea.vmem %s3, %s159
      %p161 = scmp.lt.s32.totalorder %s14, 1
      %s162 = scalar_select %p161, %s14, 1
      %s163 = smul.addr %s162, 4
      %s164 = smul.addr %s163, 4
      %s165 = scalar_lea.vmem %s0, %s164
      %p166 = scmp.lt.s32.totalorder %s14, 1
      %s167 = scalar_select %p166, %s14, 1
      %s168 = smul.addr %s167, 4
      %s169 = smul.addr %s168, 4
      %s170 = scalar_lea.vmem %s3, %s169
      %v172 = vld [vmem:[%s1] sm:$0xf]
      %v173 = vld [vmem:[%s1 + $0x4] sm:$0x1]
      %v174 = vld [vmem:[%s165] sm:$0xf]
      %v175 = vld [vmem:[%s165 + $0x4] sm:$0xf]
      %v176 = vld [vmem:[%s165 + $0x8] sm:$0xf]
      %v177 = vld [vmem:[%s165 + $0xc] sm:$0xf]
      %v182 = vunpack.c.l.b16 %v174
      %v183 = vunpack.c.l.b16 %v175
      %v184 = vunpack.c.l.b16 %v176
      %v185 = vunpack.c.l.b16 %v177
      %v186 = vpack.c.b16 %v183, %v182
      %v187 = vpack.c.b16 %v185, %v184
      %188 = vrot.lane.b32.xlu0 %v186, 5
      %v189 = vpop.permute.xlu0 %188
      %190 = vrot.lane.b32.xlu0 %v187, 5
      %v191 = vpop.permute.xlu0 %190
      %vm192 = vcmask 39936
      %v195 = vsel %vm192, 0, %v189
      %v197 = vsel %vm192, 0, %v191
      %vm198 = vcmask 171008
      %v199 = vsel %vm198, %v195, 0
      %v201 = vsel %vm198, %v197, 0
      %v204 = vpack.i.b16 %v172, %v172
      %v206 = vlaneseq
      %v207 = vshrl.u32 %v206, 7
      %v208 = vsub.s32 0, %v207
      %v209 = vrot.slane %v204, %v208
      %v210 = vmul.bf16 %v199, %v209
      %v211 = vmul.bf16 %v201, %v209
      %v212 = vshrl.u32 %v172, 16
      %v213 = vpack.i.b16 %v212, %v212
      %v215 = vlaneseq
      %v216 = vshrl.u32 %v215, 7
      %v217 = vsub.s32 0, %v216
      %v218 = vrot.slane %v213, %v217
      %220 = vrot.lane.b32.xlu0 %v218, 1
      %v221 = vpop.permute.xlu0 %220
      %v223 = vmul.bf16 %v199, %v221
      %v224 = vmul.bf16 %v201, %v221
      %v225 = vlaneseq
      %v226 = vshrl.u32 %v225, 7
      %v227 = vsub.s32 1, %v226
      %v228 = vrot.slane %v204, %v227
      %230 = vrot.lane.b32.xlu0 %v228, 2
      %v231 = vpop.permute.xlu0 %230
      %v233 = vmul.bf16 %v199, %v231
      %v234 = vmul.bf16 %v201, %v231
      %v235 = vlaneseq
      %v236 = vshrl.u32 %v235, 7
      %v237 = vsub.s32 1, %v236
      %v238 = vrot.slane %v213, %v237
      %240 = vrot.lane.b32.xlu0 %v238, 4
      %v241 = vpop.permute.xlu0 %240
      %v243 = vmul.bf16 %v199, %v241
      %v244 = vmul.bf16 %v201, %v241
      %v245 = vlaneseq
      %v246 = vshrl.u32 %v245, 7
      %v247 = vsub.s32 2, %v246
      %v248 = vrot.slane %v204, %v247
      %250 = vrot.lane.b32.xlu0 %v248, 5
      %v251 = vpop.permute.xlu0 %250
      %v253 = vmul.bf16 %v199, %v251
      %v254 = vmul.bf16 %v201, %v251
      %v255 = vlaneseq
      %v256 = vshrl.u32 %v255, 7
      %v257 = vsub.s32 2, %v256
      %v258 = vrot.slane %v213, %v257
      %260 = vrot.lane.b32.xlu0 %v258, 6
      %v261 = vpop.permute.xlu0 %260
      %v263 = vmul.bf16 %v199, %v261
      %v264 = vmul.bf16 %v201, %v261
      %v265 = vlaneseq
      %v266 = vshrl.u32 %v265, 7
      %v267 = vsub.s32 3, %v266
      %v268 = vrot.slane %v204, %v267
      %270 = vrot.lane.b32.xlu0 %v268, 8
      %v271 = vpop.permute.xlu0 %270
      %v273 = vmul.bf16 %v199, %v271
      %v274 = vmul.bf16 %v201, %v271
      %v275 = vlaneseq
      %v276 = vshrl.u32 %v275, 7
      %v277 = vsub.s32 3, %v276
      %v278 = vrot.slane %v213, %v277
      %280 = vrot.lane.b32.xlu0 %v278, 9
      %v281 = vpop.permute.xlu0 %280
      %v283 = vmul.bf16 %v199, %v281
      %v284 = vmul.bf16 %v201, %v281
      %v286 = vpack.i.b16 %v173, %v173
      %v288 = vlaneseq
      %v289 = vshrl.u32 %v288, 7
      %v290 = vsub.s32 0, %v289
      %v291 = vrot.slane %v286, %v290
      %293 = vrot.lane.b32.xlu0 %v291, 10
      %v294 = vpop.permute.xlu0 %293
      %v296 = vmul.bf16 %v199, %v294
      %v297 = vmul.bf16 %v201, %v294
      %300 = vrot.lane.b32.xlu0 %v223, 127
      %v301 = vpop.permute.xlu0 %300
      %302 = vrot.lane.b32.xlu0 %v224, 127
      %v303 = vpop.permute.xlu0 %302
      %308 = vrot.lane.b32.xlu0 %v233, 126
      %v309 = vpop.permute.xlu0 %308
      %310 = vrot.lane.b32.xlu0 %v234, 126
      %v311 = vpop.permute.xlu0 %310
      %316 = vrot.lane.b32.xlu0 %v243, 124
      %v317 = vpop.permute.xlu0 %316
      %318 = vrot.lane.b32.xlu0 %v244, 124
      %v319 = vpop.permute.xlu0 %318
      %324 = vrot.lane.b32.xlu0 %v253, 123
      %v325 = vpop.permute.xlu0 %324
      %326 = vrot.lane.b32.xlu0 %v254, 123
      %v327 = vpop.permute.xlu0 %326
      %332 = vrot.lane.b32.xlu0 %v263, 122
      %v333 = vpop.permute.xlu0 %332
      %334 = vrot.lane.b32.xlu0 %v264, 122
      %v335 = vpop.permute.xlu0 %334
      %340 = vrot.lane.b32.xlu0 %v273, 120
      %v341 = vpop.permute.xlu0 %340
      %342 = vrot.lane.b32.xlu0 %v274, 120
      %v343 = vpop.permute.xlu0 %342
      %348 = vrot.lane.b32.xlu0 %v283, 119
      %v349 = vpop.permute.xlu0 %348
      %350 = vrot.lane.b32.xlu0 %v284, 119
      %v351 = vpop.permute.xlu0 %350
      %356 = vrot.lane.b32.xlu0 %v296, 118
      %v357 = vpop.permute.xlu0 %356
      %358 = vrot.lane.b32.xlu0 %v297, 118
      %v359 = vpop.permute.xlu0 %358
      %v362 = vld [vmem:[%s2] sm:$0xff]
      %v363 = vld [vmem:[%s2 + $0x8] sm:$0xf]
      %v364 = vld [vmem:[%s2 + $0xc] sm:$0xff]
      %v365 = vld [vmem:[%s2 + $0x14] sm:$0xf]
      %v366 = vld [vmem:[%s2 + $0x18] sm:$0xff]
      %v367 = vld [vmem:[%s2 + $0x20] sm:$0xf]
      %v368 = vld [vmem:[%s2 + $0x24] sm:$0xff]
      %v369 = vld [vmem:[%s2 + $0x2c] sm:$0xf]
      %v378 = vunpack.c.l.b16 %v362
      %v379 = vunpack.c.h.b16 %v362
      %v380 = vunpack.c.l.b16 %v363
      %v381 = vunpack.c.l.b16 %v364
      %v382 = vunpack.c.h.b16 %v364
      %v383 = vunpack.c.l.b16 %v365
      %v384 = vunpack.c.l.b16 %v366
      %v385 = vunpack.c.h.b16 %v366
      %v386 = vunpack.c.l.b16 %v367
      %v387 = vunpack.c.l.b16 %v368
      %v388 = vunpack.c.h.b16 %v368
      %v389 = vunpack.c.l.b16 %v369
      %v390 = vpack.c.b16 %v381, %v378
      %v391 = vpack.c.b16 %v382, %v379
      %v392 = vpack.c.b16 %v383, %v380
      %v393 = vpack.c.b16 %v387, %v384
      %v394 = vpack.c.b16 %v388, %v385
      %v395 = vpack.c.b16 %v389, %v386
      %vm400 = vcmask 261120
      %v402 = vsel %vm400, %v392, 0
      %v405 = vsel %vm400, %v395, 0
      %407 = vmatprep.subr.bf16.mxu0 0
      %408 = vmatpush1.bf16.msra.mxu0 %v210
      %409 = vmatprep.subr.bf16.mxu0 0
      %410 = vmatpush1.bf16.msra.mxu0 %v211
      %411 = vmatprep.subr.bf16.mxu0 0
      %412 = vmatpush1.bf16.msra.mxu0 %v301
      %413 = vmatprep.subr.bf16.mxu0 0
      %414 = vmatpush1.bf16.msra.mxu0 %v303
      %415 = vmatprep.subr.bf16.mxu0 0
      %416 = vmatpush1.bf16.msra.mxu0 %v309
      %417 = vmatprep.subr.bf16.mxu0 0
      %418 = vmatpush1.bf16.msra.mxu0 %v311
      %419 = vmatprep.subr.bf16.mxu0 0
      %420 = vmatpush1.bf16.msra.mxu0 %v317
      %421 = vmatprep.subr.bf16.mxu0 0
      %422 = vmatpush1.bf16.msra.mxu0 %v319
      %423 = vmatprep.subr.bf16.mxu0 0
      %424 = vmatpush1.bf16.msra.mxu0 %v325
      %425 = vmatprep.subr.bf16.mxu0 0
      %426 = vmatpush1.bf16.msra.mxu0 %v327
      %427 = vmatprep.subr.bf16.mxu0 0
      %428 = vmatpush1.bf16.msra.mxu0 %v333
      %429 = vmatprep.subr.bf16.mxu0 0
      %430 = vmatpush1.bf16.msra.mxu0 %v335
      %431 = vmatprep.subr.bf16.mxu0 0
      %432 = vmatpush1.bf16.msra.mxu0 %v341
      %433 = vmatprep.subr.bf16.mxu0 0
      %434 = vmatpush1.bf16.msra.mxu0 %v343
      %435 = vmatprep.subr.bf16.mxu0 0
      %436 = vmatpush1.bf16.msra.mxu0 %v349
      %437 = vmatprep.subr.bf16.mxu0 0
      %438 = vmatpush1.bf16.msra.mxu0 %v351
      %439 = vmatprep.mubr.bf16.mxu0 %v391
      %440 = vmatmul.mubr.bf16.gmra.mrb[0].mxu0 %v390
      %v441 = vpop.f32.mrb[0].mxu0
      %v442 = vadd.f32 0.0, %v441
      %v443 = vpop.f32.mrb[0].mxu0
      %v444 = vpop.f32.mrb[0].mxu0
      %v445 = vadd.f32 0.0, %v444
      %v446 = vpop.f32.mrb[0].mxu0
      %447 = vmatprep.mubr.bf16.mxu0 %v394
      %448 = vmatmul.mubr.bf16.gmra.mrb[0].mxu0 %v393
      %v449 = vpop.f32.mrb[0].mxu0
      %v450 = vadd.f32 0.0, %v449
      %v451 = vpop.f32.mrb[0].mxu0
      %v452 = vpop.f32.mrb[0].mxu0
      %v453 = vadd.f32 0.0, %v452
      %v454 = vpop.f32.mrb[0].mxu0
      %455 = vdwg.mxu0
      %456 = vmatprep.subr.bf16.mxu0 0
      %457 = vmatpush1.bf16.msra.mxu0 %v357
      %458 = vmatprep.subr.bf16.mxu0 0
      %459 = vmatpush1.bf16.msra.mxu0 %v359
      %460 = vmatprep.subr.bf16.mxu0 0
      %461 = vmatpush1.bf16.msra.mxu0 0
      %462 = vmatprep.subr.bf16.mxu0 0
      %463 = vmatpush1.bf16.msra.mxu0 0
      %464 = vmatprep.subr.bf16.mxu0 0
      %465 = vmatpush1.bf16.msra.mxu0 0
      %466 = vmatprep.subr.bf16.mxu0 0
      %467 = vmatpush1.bf16.msra.mxu0 0
      %468 = vmatprep.subr.bf16.mxu0 0
      %469 = vmatpush1.bf16.msra.mxu0 0
      %470 = vmatprep.subr.bf16.mxu0 0
      %471 = vmatpush1.bf16.msra.mxu0 0
      %472 = vmatprep.subr.bf16.mxu0 0
      %473 = vmatpush1.bf16.msra.mxu0 0
      %474 = vmatprep.subr.bf16.mxu0 0
      %475 = vmatpush1.bf16.msra.mxu0 0
      %476 = vmatprep.subr.bf16.mxu0 0
      %477 = vmatpush1.bf16.msra.mxu0 0
      %478 = vmatprep.subr.bf16.mxu0 0
      %479 = vmatpush1.bf16.msra.mxu0 0
      %480 = vmatprep.subr.bf16.mxu0 0
      %481 = vmatpush1.bf16.msra.mxu0 0
      %482 = vmatprep.subr.bf16.mxu0 0
      %483 = vmatpush1.bf16.msra.mxu0 0
      %484 = vmatprep.subr.bf16.mxu0 0
      %485 = vmatpush1.bf16.msra.mxu0 0
      %486 = vmatprep.subr.bf16.mxu0 0
      %487 = vmatpush1.bf16.msra.mxu0 0
      %488 = vmatprep.mubr.bf16.mxu0 0
      %489 = vmatmul.mubr.bf16.gmra.mrb[0].mxu0 %v402
      %v490 = vpop.f32.mrb[0].mxu0
      %v491 = vadd.f32 %v442, %v490
      %v492 = vpop.f32.mrb[0].mxu0
      %v493 = vpop.f32.mrb[0].mxu0
      %v494 = vadd.f32 %v445, %v493
      %v495 = vpop.f32.mrb[0].mxu0
      %496 = vmatprep.mubr.bf16.mxu0 0
      %497 = vmatmul.mubr.bf16.gmra.mrb[0].mxu0 %v405
      %v498 = vpop.f32.mrb[0].mxu0
      %v499 = vadd.f32 %v450, %v498
      %v500 = vpop.f32.mrb[0].mxu0
      %v501 = vpop.f32.mrb[0].mxu0
      %v502 = vadd.f32 %v453, %v501
      %v503 = vpop.f32.mrb[0].mxu0
      %504 = vdwg.mxu0
      %vm505 = vcmask 130048
      %v506 = vsel %vm505, %v491, 0.0
      %507 = vadd.xlane.f32.xlu0 %v506
      %v508 = vpop.xlane.xlu0 %507
      %v509 = vsel %vm505, %v494, 0.0
      %510 = vadd.xlane.f32.xlu0 %v509
      %v511 = vpop.xlane.xlu0 %510
      %v512 = vsel %vm505, %v499, 0.0
      %513 = vadd.xlane.f32.xlu0 %v512
      %v514 = vpop.xlane.xlu0 %513
      %v515 = vsel %vm505, %v502, 0.0
      %516 = vadd.xlane.f32.xlu0 %v515
      %v517 = vpop.xlane.xlu0 %516
      %v518 = vrcp.pop 16.0
      %v519 = vmul.f32 %v508, %v518
      %v520 = vmul.f32 %v511, %v518
      %v521 = vmul.f32 %v514, %v518
      %v522 = vmul.f32 %v517, %v518
      %v523 = vsub.f32 %v491, %v519
      %v524 = vsub.f32 %v494, %v520
      %v525 = vsub.f32 %v499, %v521
      %v526 = vsub.f32 %v502, %v522
      %v527 = vmul.f32 %v523, %v523
      %v528 = vmul.f32 %v524, %v524
      %v529 = vmul.f32 %v525, %v525
      %v530 = vmul.f32 %v526, %v526
      %v531 = vsel %vm505, %v527, 0.0
      %532 = vadd.xlane.f32.xlu0 %v531
      %v533 = vpop.xlane.xlu0 %532
      %v534 = vsel %vm505, %v528, 0.0
      %535 = vadd.xlane.f32.xlu0 %v534
      %v536 = vpop.xlane.xlu0 %535
      %v537 = vsel %vm505, %v529, 0.0
      %538 = vadd.xlane.f32.xlu0 %v537
      %v539 = vpop.xlane.xlu0 %538
      %v540 = vsel %vm505, %v530, 0.0
      %541 = vadd.xlane.f32.xlu0 %v540
      %v542 = vpop.xlane.xlu0 %541
      %v543 = vmul.f32 %v533, %v518
      %v544 = vmul.f32 %v536, %v518
      %v545 = vmul.f32 %v539, %v518
      %v546 = vmul.f32 %v542, %v518
      %v547 = vadd.f32 %v543, 1e-05
      %v548 = vadd.f32 %v544, 1e-05
      %v549 = vadd.f32 %v545, 1e-05
      %v550 = vadd.f32 %v546, 1e-05
      %v551 = vrsqrt.pop %v547
      %v552 = vrsqrt.pop %v548
      %v553 = vrsqrt.pop %v549
      %v554 = vrsqrt.pop %v550
      %v555 = vmul.f32 %v523, %v551
      %v556 = vmul.f32 %v524, %v552
      %v557 = vmul.f32 %v525, %v553
      %v558 = vmul.f32 %v526, %v554
      %vm559 = vcmp.ge.f32.partialorder %v555, 0.0
      %vm560 = vcmp.ge.f32.partialorder %v556, 0.0
      %vm561 = vcmp.ge.f32.partialorder %v557, 0.0
      %vm562 = vcmp.ge.f32.partialorder %v558, 0.0
      %v563 = vmul.f32 %v555, 0.01
      %v564 = vmul.f32 %v556, 0.01
      %v565 = vmul.f32 %v557, 0.01
      %v566 = vmul.f32 %v558, 0.01
      %v567 = vsel %vm559, %v555, %v563
      %v568 = vsel %vm560, %v556, %v564
      %v569 = vsel %vm561, %v557, %v565
      %v570 = vsel %vm562, %v558, %v566
      %v571 = vpack.c.bf16 %v568, %v567
      %v572 = vpack.c.bf16 %v570, %v569
      %v575 = vunpack.c.l.b16 %v571
      %v576 = vunpack.c.h.b16 %v571
      %v577 = vunpack.c.l.b16 %v572
      %v578 = vunpack.c.h.b16 %v572
      %v579 = vpack.c.b16 %v575, %v575
      %v580 = vpack.c.b16 %v576, %v576
      %v581 = vpack.c.b16 %v577, %v577
      %v582 = vpack.c.b16 %v578, %v578
      %vm587 = vcmask 125952
      %588 = vst.msk [vmem:[%s170] sm:$0xf] %vm587, %v579
      %589 = vst.msk [vmem:[%s170 + $0x4] sm:$0xf] %vm587, %v580
      %590 = vst.msk [vmem:[%s170 + $0x8] sm:$0xf] %vm587, %v581
      %591 = vst.msk [vmem:[%s170 + $0xc] sm:$0xf] %vm587, %v582
      %p592 = scmp.lt.s32.totalorder %s14, 1
      %s593 = scalar_select %p592, %s14, 1
      %s594 = smul.addr %s593, 4
      %s595 = smul.addr %s594, 4
      %s596 = scalar_lea.vmem %s3, %s595
      // Predicated region
      $region33: #{_lambda_.18} parent=31 // pred_check
        %p597 = pneg %p100
      $region34: #{_lambda_.18} parent=31 // pred_check_branch
        %599 = sbr.rel (%p597) target = $region36
      $region35: #{_lambda_.18} parent=31 // pred_region
        _
      $region36: #{_lambda_.18} parent=31 // pred_fallthru
        _
    $region32: #{_lambda_.18} parent=5 // pred_fallthru
      _
    %p600 = scmp.le.s32.totalorder 2, %s9
    // Predicated region
    $region37: #{_lambda_.18} parent=5 // pred_check
      %p601 = pneg %p600
    $region38: #{_lambda_.18} parent=5 // pred_check_branch
      %603 = sbr.rel (%p601) target = $region40
    $region39: #{_lambda_.18} parent=5 // pred_region
      %s604 = ssub.s32 %s9, 2
      // Predicated region
      $region41: #{_lambda_.18} parent=39 // pred_check
        %p605 = pneg %p106
      $region42: #{_lambda_.18} parent=39 // pred_check_branch
        %607 = sbr.rel (%p605) target = $region44
      $region43: #{_lambda_.18} parent=39 // pred_region
        %p608 = scmp.lt.s32.totalorder %s15, 1
        %s609 = scalar_select %p608, %s15, 1
        %s610 = smul.addr %s609, 4
        %s611 = smul.addr %s610, 4
        %s612 = scalar_lea.vmem %s3, %s611
      $region44: #{_lambda_.18} parent=39 // pred_fallthru
        _
    $region40: #{_lambda_.18} parent=5 // pred_fallthru
      _
  $region6: #{_lambda_.18} parent=0 // loop_footer
    %s13 = sadd.s32 1, %s9
  $region7: #{_lambda_.18} parent=0 // loop_footer_branch
    %8 = sbr.rel target = $region3
  $region8: #{_lambda_.18} parent=0 // loop_exit
    _

// kernel: _lambda_.22
$region0: #{_lambda_.22}
  #allocation0 [shape = 'u32[]', space=smem, size = 0x4, offset = 0x4, fixed_abs, tag = 'smem constant byte address 0x4 - core index']
  #allocation1 [shape = 'u32[144,128]{1,0:T(1,128)}', space=vmem, size = 0x12000, scoped, tag = 'internal scratch']
  %s0 = inlined_call_operand.vmem [shape: bf16[2,16,64], index: 0, kind: input, shape index: {}]
  %s1 = inlined_call_operand.vmem [shape: bf16[32,16], index: 1, kind: input, shape index: {}]
  %s2 = inlined_call_operand.vmem [shape: bf16[2,32,64], index: 2, kind: output, shape index: {}]
  %s3 = sld [smem:[#allocation0]]
  $region41: #{_lambda_.22} parent=0
    _
  %s5 = ssub.s32 1, %s3
  %s6 = scalar_select 0, %s5, %s3
  loop: start=0, step=1, limit=4
  $region2: #{_lambda_.22} parent=0 // loop_pre_header
    _
  $region3: #{_lambda_.22} parent=0 // loop_header
    %s8 = sphi 0, %s12
    %p9 = scmp.ge.s32.totalorder %s8, 4
    %s18 = sphi 0, %s20
    %s21 = sphi 0, %s18
    %s22 = sphi 0, %s21
    %s38 = sphi 0, %s22
    %s42 = sphi 0, %s42
    %s44 = sphi 0, %s42
    %s45 = sphi 0, %s44
    %s59 = sphi 0, %s45
    %s65 = sphi 0, %s67
    %s68 = sphi 0, %s65
    %s69 = sphi 0, %s68
    %s85 = sphi 0, %s69
  $region4: #{_lambda_.22} parent=0 // loop_header_branch
    %11 = sbr.rel (%p9) target = $region8
  $region5: #{_lambda_.22} parent=0 // loop_body
    %s13 = ssub.s32 %s8, 1
    %s14 = ssub.s32 %s8, 2
    %s15 = sadd.s32 %s8, 1
    %s16 = ssub.s32 %s8, %s15
    %p17 = scmp.eq.s32.totalorder %s16, 0
    %s19 = sadd.s32 %s18, 1
    %s20 = scalar_select %p17, %s18, %s19
    %p23 = pneg %p17
    %p24 = scmp.eq.s32.totalorder %s8, 1
    %p25 = por %p23, %p24
    %p26 = scmp.ne.s32.totalorder %s18, %s21
    %p27 = scmp.eq.s32.totalorder %s8, 0
    %p28 = por %p26, %p27
    %p29 = scmp.ne.s32.totalorder %s18, %s21
    %p30 = scmp.eq.s32.totalorder %s13, 1
    %p31 = por %p29, %p30
    %p32 = scmp.ne.s32.totalorder %s21, %s22
    %p33 = scmp.eq.s32.totalorder %s13, 0
    %p34 = por %p32, %p33
    %p35 = scmp.ne.s32.totalorder %s21, %s22
    %p36 = scmp.eq.s32.totalorder %s14, 1
    %p37 = por %p35, %p36
    %p39 = scmp.ne.s32.totalorder %s22, %s38
    %p40 = scmp.eq.s32.totalorder %s14, 0
    %p41 = por %p39, %p40
    %s43 = sadd.s32 %s42, 1
    %p46 = scmp.eq.s32.totalorder %s8, 1
    %p47 = scmp.ne.s32.totalorder %s42, %s44
    %p48 = scmp.eq.s32.totalorder %s8, 0
    %p49 = por %p47, %p48
    %p50 = scmp.ne.s32.totalorder %s42, %s44
    %p51 = scmp.eq.s32.totalorder %s13, 1
    %p52 = por %p50, %p51
    %p53 = scmp.ne.s32.totalorder %s44, %s45
    %p54 = scmp.eq.s32.totalorder %s13, 0
    %p55 = por %p53, %p54
    %p56 = scmp.ne.s32.totalorder %s44, %s45
    %p57 = scmp.eq.s32.totalorder %s14, 1
    %p58 = por %p56, %p57
    %p60 = scmp.ne.s32.totalorder %s45, %s59
    %p61 = scmp.eq.s32.totalorder %s14, 0
    %p62 = por %p60, %p61
    %s63 = ssub.s32 %s8, %s15
    %p64 = scmp.eq.s32.totalorder %s63, 0
    %s66 = sadd.s32 %s65, 1
    %s67 = scalar_select %p64, %s65, %s66
    %p70 = pneg %p64
    %p71 = scmp.eq.s32.totalorder %s8, 1
    %p72 = por %p70, %p71
    %p73 = scmp.ne.s32.totalorder %s65, %s68
    %p74 = scmp.eq.s32.totalorder %s8, 0
    %p75 = por %p73, %p74
    %p76 = scmp.ne.s32.totalorder %s65, %s68
    %p77 = scmp.eq.s32.totalorder %s13, 1
    %p78 = por %p76, %p77
    %p79 = scmp.ne.s32.totalorder %s68, %s69
    %p80 = scmp.eq.s32.totalorder %s13, 0
    %p81 = por %p79, %p80
    %p82 = scmp.ne.s32.totalorder %s68, %s69
    %p83 = scmp.eq.s32.totalorder %s14, 1
    %p84 = por %p82, %p83
    %p86 = scmp.ne.s32.totalorder %s69, %s85
    %p87 = scmp.eq.s32.totalorder %s14, 0
    %p88 = por %p86, %p87
    %p89 = scmp.le.s32.totalorder 1, %s8
    %p90 = scmp.lt.s32.totalorder %s8, 3
    %p91 = pnand %p89, %p90
    %p92 = pneg %p91
    // Predicated region
    $region9: #{_lambda_.22} parent=5 // pred_check
      _
    $region10: #{_lambda_.22} parent=5 // pred_check_branch
      %94 = sbr.rel (%p91) target = $region12
    $region11: #{_lambda_.22} parent=5 // pred_region
      %s95 = ssub.s32 %s8, 1
      // Predicated region
      $region13: #{_lambda_.22} parent=11 // pred_check
        %p96 = pneg %p55
      $region14: #{_lambda_.22} parent=11 // pred_check_branch
        %98 = sbr.rel (%p96) target = $region16
      $region15: #{_lambda_.22} parent=11 // pred_region
        _
      $region16: #{_lambda_.22} parent=11 // pred_fallthru
        _
    $region12: #{_lambda_.22} parent=5 // pred_fallthru
      _
    %p99 = scmp.lt.s32.totalorder %s8, 2
    // Predicated region
    $region17: #{_lambda_.22} parent=5 // pred_check
      %p100 = pneg %p99
    $region18: #{_lambda_.22} parent=5 // pred_check_branch
      %102 = sbr.rel (%p100) target = $region20
    $region19: #{_lambda_.22} parent=5 // pred_region
      // Predicated region
      $region21: #{_lambda_.22} parent=19 // pred_check
        %p103 = pneg %p28
      $region22: #{_lambda_.22} parent=19 // pred_check_branch
        %105 = sbr.rel (%p103) target = $region24
      $region23: #{_lambda_.22} parent=19 // pred_region
        %p106 = scmp.lt.s32.totalorder %s8, 1
        %s107 = scalar_select %p106, %s8, 1
        %s108 = smul.addr %s107, 2
        %s109 = smul.addr %s108, 4
        %s110 = scalar_lea.vmem %s0, %s109
      $region24: #{_lambda_.22} parent=19 // pred_fallthru
        _
    $region20: #{_lambda_.22} parent=5 // pred_fallthru
      _
    %p111 = scmp.le.s32.totalorder 1, %s8
    %p112 = scmp.lt.s32.totalorder %s8, 3
    %p113 = pnand %p111, %p112
    %p114 = pneg %p113
    // Predicated region
    $region25: #{_lambda_.22} parent=5 // pred_check
      _
    $region26: #{_lambda_.22} parent=5 // pred_check_branch
      %116 = sbr.rel (%p113) target = $region28
    $region27: #{_lambda_.22} parent=5 // pred_region
      %s117 = ssub.s32 %s8, 1
      %p118 = scmp.lt.s32.totalorder %s13, 1
      %s119 = scalar_select %p118, %s13, 1
      %s120 = smul.addr %s119, 2
      %s121 = smul.addr %s120, 4
      %s122 = scalar_lea.vmem %s0, %s121
      %p123 = pneg %p34
      %p124 = pneg %p31
      %p125 = pneg %p55
      %p126 = pneg %p52
      %p127 = pneg %p81
      %p128 = pneg %p78
      %p129 = scmp.lt.s32.totalorder %s13, 1
      %s130 = scalar_select %p129, %s13, 1
      %s131 = smul.addr %s130, 4
      %s132 = smul.addr %s131, 4
      %s133 = scalar_lea.vmem %s2, %s132
      %p134 = scmp.lt.s32.totalorder %s13, 1
      %s135 = scalar_select %p134, %s13, 1
      %s136 = smul.addr %s135, 2
      %s137 = smul.addr %s136, 4
      %s138 = scalar_lea.vmem %s0, %s137
      %p139 = scmp.lt.s32.totalorder %s13, 1
      %s140 = scalar_select %p139, %s13, 1
      %s141 = smul.addr %s140, 4
      %s142 = smul.addr %s141, 4
      %s143 = scalar_lea.vmem %s2, %s142
      %v145 = vld [vmem:[%s1] sm:$0xf]
      %v146 = vld [vmem:[%s1 + $0x4] sm:$0xf]
      %v147 = vld [vmem:[%s1 + $0x8] sm:$0xf]
      %v148 = vld [vmem:[%s1 + $0xc] sm:$0xf]
      %v149 = vld [vmem:[%s138] sm:$0xf]
      %v150 = vld [vmem:[%s138 + $0x4] sm:$0xf]
      %v155 = vunpack.c.l.b16 %v145
      %v156 = vunpack.c.l.b16 %v146
      %v157 = vunpack.c.l.b16 %v147
      %v158 = vunpack.c.l.b16 %v148
      %v159 = vpack.c.b16 %v156, %v155
      %v160 = vpack.c.b16 %v158, %v157
      %v163 = vunpack.c.l.b16 %v149
      %v164 = vunpack.c.l.b16 %v150
      %v165 = vpack.c.b16 %v164, %v163
      %vm167 = vcmask 130048
      %v169 = vsel %vm167, %v159, 0
      %v172 = vsel %vm167, %v160, 0
      %174 = vmatprep.subr.bf16.mxu0 0
      %175 = vmatpush1.bf16.msra.mxu0 %v165
      %176 = vmatprep.subr.bf16.mxu0 0
      %177 = vmatpush1.bf16.msra.mxu0 0
      %178 = vmatprep.subr.bf16.mxu0 0
      %179 = vmatpush1.bf16.msra.mxu0 0
      %180 = vmatprep.subr.bf16.mxu0 0
      %181 = vmatpush1.bf16.msra.mxu0 0
      %182 = vmatprep.subr.bf16.mxu0 0
      %183 = vmatpush1.bf16.msra.mxu0 0
      %184 = vmatprep.subr.bf16.mxu0 0
      %185 = vmatpush1.bf16.msra.mxu0 0
      %186 = vmatprep.subr.bf16.mxu0 0
      %187 = vmatpush1.bf16.msra.mxu0 0
      %188 = vmatprep.subr.bf16.mxu0 0
      %189 = vmatpush1.bf16.msra.mxu0 0
      %190 = vmatprep.subr.bf16.mxu0 0
      %191 = vmatpush1.bf16.msra.mxu0 0
      %192 = vmatprep.subr.bf16.mxu0 0
      %193 = vmatpush1.bf16.msra.mxu0 0
      %194 = vmatprep.subr.bf16.mxu0 0
      %195 = vmatpush1.bf16.msra.mxu0 0
      %196 = vmatprep.subr.bf16.mxu0 0
      %197 = vmatpush1.bf16.msra.mxu0 0
      %198 = vmatprep.subr.bf16.mxu0 0
      %199 = vmatpush1.bf16.msra.mxu0 0
      %200 = vmatprep.subr.bf16.mxu0 0
      %201 = vmatpush1.bf16.msra.mxu0 0
      %202 = vmatprep.subr.bf16.mxu0 0
      %203 = vmatpush1.bf16.msra.mxu0 0
      %204 = vmatprep.subr.bf16.mxu0 0
      %205 = vmatpush1.bf16.msra.mxu0 0
      %206 = vmatprep.mubr.bf16.mxu0 0
      %207 = vmatmul.mubr.bf16.gmra.mrb[0].mxu0 %v169
      %v208 = vpop.f32.mrb[0].mxu0
      %v209 = vadd.f32 0.0, %v208
      %v210 = vpop.f32.mrb[0].mxu0
      %v211 = vpop.f32.mrb[0].mxu0
      %v212 = vadd.f32 0.0, %v211
      %v213 = vpop.f32.mrb[0].mxu0
      %214 = vmatprep.mubr.bf16.mxu0 0
      %215 = vmatmul.mubr.bf16.gmra.mrb[0].mxu0 %v172
      %v216 = vpop.f32.mrb[0].mxu0
      %v217 = vadd.f32 0.0, %v216
      %v218 = vpop.f32.mrb[0].mxu0
      %v219 = vpop.f32.mrb[0].mxu0
      %v220 = vadd.f32 0.0, %v219
      %v221 = vpop.f32.mrb[0].mxu0
      %222 = vdwg.mxu0
      %v223 = vpack.c.bf16 %v212, %v209
      %v224 = vpack.c.bf16 %v220, %v217
      %v227 = vunpack.c.l.b16 %v223
      %v228 = vunpack.c.h.b16 %v223
      %v229 = vunpack.c.l.b16 %v224
      %v230 = vunpack.c.h.b16 %v224
      %v231 = vpack.c.b16 %v227, %v227
      %v232 = vpack.c.b16 %v228, %v228
      %v233 = vpack.c.b16 %v229, %v229
      %v234 = vpack.c.b16 %v230, %v230
      %vm239 = vcmask 519168
      %240 = vst.msk [vmem:[%s143] sm:$0xf] %vm239, %v231
      %241 = vst.msk [vmem:[%s143 + $0x4] sm:$0xf] %vm239, %v232
      %242 = vst.msk [vmem:[%s143 + $0x8] sm:$0xf] %vm239, %v233
      %243 = vst.msk [vmem:[%s143 + $0xc] sm:$0xf] %vm239, %v234
      %p244 = scmp.lt.s32.totalorder %s13, 1
      %s245 = scalar_select %p244, %s13, 1
      %s246 = smul.addr %s245, 4
      %s247 = smul.addr %s246, 4
      %s248 = scalar_lea.vmem %s2, %s247
      // Predicated region
      $region29: #{_lambda_.22} parent=27 // pred_check
        %p249 = pneg %p78
      $region30: #{_lambda_.22} parent=27 // pred_check_branch
        %251 = sbr.rel (%p249) target = $region32
      $region31: #{_lambda_.22} parent=27 // pred_region
        _
      $region32: #{_lambda_.22} parent=27 // pred_fallthru
        _
    $region28: #{_lambda_.22} parent=5 // pred_fallthru
      _
    %p252 = scmp.le.s32.totalorder 2, %s8
    // Predicated region
    $region33: #{_lambda_.22} parent=5 // pred_check
      %p253 = pneg %p252
    $region34: #{_lambda_.22} parent=5 // pred_check_branch
      %255 = sbr.rel (%p253) target = $region36
    $region35: #{_lambda_.22} parent=5 // pred_region
      %s256 = ssub.s32 %s8, 2
      // Predicated region
      $region37: #{_lambda_.22} parent=35 // pred_check
        %p257 = pneg %p84
      $region38: #{_lambda_.22} parent=35 // pred_check_branch
        %259 = sbr.rel (%p257) target = $region40
      $region39: #{_lambda_.22} parent=35 // pred_region
        %p260 = scmp.lt.s32.totalorder %s14, 1
        %s261 = scalar_select %p260, %s14, 1
        %s262 = smul.addr %s261, 4
        %s263 = smul.addr %s262, 4
        %s264 = scalar_lea.vmem %s2, %s263
      $region40: #{_lambda_.22} parent=35 // pred_fallthru
        _
    $region36: #{_lambda_.22} parent=5 // pred_fallthru
      _
  $region6: #{_lambda_.22} parent=0 // loop_footer
    %s12 = sadd.s32 1, %s8
  $region7: #{_lambda_.22} parent=0 // loop_footer_branch
    %7 = sbr.rel target = $region3
  $region8: #{_lambda_.22} parent=0 // loop_exit
    _

// kernel: _lambda_.20
$region0: #{_lambda_.20}
  #allocation0 [shape = 'u32[]', space=smem, size = 0x4, offset = 0x4, fixed_abs, tag = 'smem constant byte address 0x4 - core index']
  #allocation1 [shape = 'u32[144,128]{1,0:T(1,128)}', space=vmem, size = 0x12000, scoped, tag = 'internal scratch']
  %s0 = inlined_call_operand.vmem [shape: bf16[2,16,64], index: 0, kind: input, shape index: {}]
  %s1 = inlined_call_operand.vmem [shape: bf16[2,16,64], index: 1, kind: input, shape index: {}]
  %s2 = inlined_call_operand.vmem [shape: bf16[9,64], index: 2, kind: input, shape index: {}]
  %s3 = inlined_call_operand.vmem [shape: bf16[16,288], index: 3, kind: input, shape index: {}]
  %s4 = inlined_call_operand.vmem [shape: bf16[2,16,64], index: 4, kind: output, shape index: {}]
  %s5 = sld [smem:[#allocation0]]
  $region49: #{_lambda_.20} parent=0
    _
  %s7 = ssub.s32 1, %s5
  %s8 = scalar_select 0, %s7, %s5
  loop: start=0, step=1, limit=4
  $region2: #{_lambda_.20} parent=0 // loop_pre_header
    _
  $region3: #{_lambda_.20} parent=0 // loop_header
    %s10 = sphi 0, %s14
    %p11 = scmp.ge.s32.totalorder %s10, 4
    %s20 = sphi 0, %s22
    %s23 = sphi 0, %s20
    %s24 = sphi 0, %s23
    %s40 = sphi 0, %s24
    %s46 = sphi 0, %s48
    %s49 = sphi 0, %s46
    %s50 = sphi 0, %s49
    %s66 = sphi 0, %s50
    %s70 = sphi 0, %s70
    %s72 = sphi 0, %s70
    %s73 = sphi 0, %s72
    %s87 = sphi 0, %s73
    %s91 = sphi 0, %s91
    %s93 = sphi 0, %s91
    %s94 = sphi 0, %s93
    %s108 = sphi 0, %s94
    %s114 = sphi 0, %s116
    %s117 = sphi 0, %s114
    %s118 = sphi 0, %s117
    %s134 = sphi 0, %s118
  $region4: #{_lambda_.20} parent=0 // loop_header_branch
    %13 = sbr.rel (%p11) target = $region8
  $region5: #{_lambda_.20} parent=0 // loop_body
    %s15 = ssub.s32 %s10, 1
    %s16 = ssub.s32 %s10, 2
    %s17 = sadd.s32 %s10, 1
    %s18 = ssub.s32 %s10, %s17
    %p19 = scmp.eq.s32.totalorder %s18, 0
    %s21 = sadd.s32 %s20, 1
    %s22 = scalar_select %p19, %s20, %s21
    %p25 = pneg %p19
    %p26 = scmp.eq.s32.totalorder %s10, 1
    %p27 = por %p25, %p26
    %p28 = scmp.ne.s32.totalorder %s20, %s23
    %p29 = scmp.eq.s32.totalorder %s10, 0
    %p30 = por %p28, %p29
    %p31 = scmp.ne.s32.totalorder %s20, %s23
    %p32 = scmp.eq.s32.totalorder %s15, 1
    %p33 = por %p31, %p32
    %p34 = scmp.ne.s32.totalorder %s23, %s24
    %p35 = scmp.eq.s32.totalorder %s15, 0
    %p36 = por %p34, %p35
    %p37 = scmp.ne.s32.totalorder %s23, %s24
    %p38 = scmp.eq.s32.totalorder %s16, 1
    %p39 = por %p37, %p38
    %p41 = scmp.ne.s32.totalorder %s24, %s40
    %p42 = scmp.eq.s32.totalorder %s16, 0
    %p43 = por %p41, %p42
    %s44 = ssub.s32 %s10, %s17
    %p45 = scmp.eq.s32.totalorder %s44, 0
    %s47 = sadd.s32 %s46, 1
    %s48 = scalar_select %p45, %s46, %s47
    %p51 = pneg %p45
    %p52 = scmp.eq.s32.totalorder %s10, 1
    %p53 = por %p51, %p52
    %p54 = scmp.ne.s32.totalorder %s46, %s49
    %p55 = scmp.eq.s32.totalorder %s10, 0
    %p56 = por %p54, %p55
    %p57 = scmp.ne.s32.totalorder %s46, %s49
    %p58 = scmp.eq.s32.totalorder %s15, 1
    %p59 = por %p57, %p58
    %p60 = scmp.ne.s32.totalorder %s49, %s50
    %p61 = scmp.eq.s32.totalorder %s15, 0
    %p62 = por %p60, %p61
    %p63 = scmp.ne.s32.totalorder %s49, %s50
    %p64 = scmp.eq.s32.totalorder %s16, 1
    %p65 = por %p63, %p64
    %p67 = scmp.ne.s32.totalorder %s50, %s66
    %p68 = scmp.eq.s32.totalorder %s16, 0
    %p69 = por %p67, %p68
    %s71 = sadd.s32 %s70, 1
    %p74 = scmp.eq.s32.totalorder %s10, 1
    %p75 = scmp.ne.s32.totalorder %s70, %s72
    %p76 = scmp.eq.s32.totalorder %s10, 0
    %p77 = por %p75, %p76
    %p78 = scmp.ne.s32.totalorder %s70, %s72
    %p79 = scmp.eq.s32.totalorder %s15, 1
    %p80 = por %p78, %p79
    %p81 = scmp.ne.s32.totalorder %s72, %s73
    %p82 = scmp.eq.s32.totalorder %s15, 0
    %p83 = por %p81, %p82
    %p84 = scmp.ne.s32.totalorder %s72, %s73
    %p85 = scmp.eq.s32.totalorder %s16, 1
    %p86 = por %p84, %p85
    %p88 = scmp.ne.s32.totalorder %s73, %s87
    %p89 = scmp.eq.s32.totalorder %s16, 0
    %p90 = por %p88, %p89
    %s92 = sadd.s32 %s91, 1
    %p95 = scmp.eq.s32.totalorder %s10, 1
    %p96 = scmp.ne.s32.totalorder %s91, %s93
    %p97 = scmp.eq.s32.totalorder %s10, 0
    %p98 = por %p96, %p97
    %p99 = scmp.ne.s32.totalorder %s91, %s93
    %p100 = scmp.eq.s32.totalorder %s15, 1
    %p101 = por %p99, %p100
    %p102 = scmp.ne.s32.totalorder %s93, %s94
    %p103 = scmp.eq.s32.totalorder %s15, 0
    %p104 = por %p102, %p103
    %p105 = scmp.ne.s32.totalorder %s93, %s94
    %p106 = scmp.eq.s32.totalorder %s16, 1
    %p107 = por %p105, %p106
    %p109 = scmp.ne.s32.totalorder %s94, %s108
    %p110 = scmp.eq.s32.totalorder %s16, 0
    %p111 = por %p109, %p110
    %s112 = ssub.s32 %s10, %s17
    %p113 = scmp.eq.s32.totalorder %s112, 0
    %s115 = sadd.s32 %s114, 1
    %s116 = scalar_select %p113, %s114, %s115
    %p119 = pneg %p113
    %p120 = scmp.eq.s32.totalorder %s10, 1
    %p121 = por %p119, %p120
    %p122 = scmp.ne.s32.totalorder %s114, %s117
    %p123 = scmp.eq.s32.totalorder %s10, 0
    %p124 = por %p122, %p123
    %p125 = scmp.ne.s32.totalorder %s114, %s117
    %p126 = scmp.eq.s32.totalorder %s15, 1
    %p127 = por %p125, %p126
    %p128 = scmp.ne.s32.totalorder %s117, %s118
    %p129 = scmp.eq.s32.totalorder %s15, 0
    %p130 = por %p128, %p129
    %p131 = scmp.ne.s32.totalorder %s117, %s118
    %p132 = scmp.eq.s32.totalorder %s16, 1
    %p133 = por %p131, %p132
    %p135 = scmp.ne.s32.totalorder %s118, %s134
    %p136 = scmp.eq.s32.totalorder %s16, 0
    %p137 = por %p135, %p136
    %p138 = scmp.le.s32.totalorder 1, %s10
    %p139 = scmp.lt.s32.totalorder %s10, 3
    %p140 = pnand %p138, %p139
    %p141 = pneg %p140
    // Predicated region
    $region9: #{_lambda_.20} parent=5 // pred_check
      _
    $region10: #{_lambda_.20} parent=5 // pred_check_branch
      %143 = sbr.rel (%p140) target = $region12
    $region11: #{_lambda_.20} parent=5 // pred_region
      %s144 = ssub.s32 %s10, 1
      // Predicated region
      $region13: #{_lambda_.20} parent=11 // pred_check
        %p145 = pneg %p83
      $region14: #{_lambda_.20} parent=11 // pred_check_branch
        %147 = sbr.rel (%p145) target = $region16
      $region15: #{_lambda_.20} parent=11 // pred_region
        _
      $region16: #{_lambda_.20} parent=11 // pred_fallthru
        _
      // Predicated region
      $region17: #{_lambda_.20} parent=11 // pred_check
        %p148 = pneg %p104
      $region18: #{_lambda_.20} parent=11 // pred_check_branch
        %150 = sbr.rel (%p148) target = $region20
      $region19: #{_lambda_.20} parent=11 // pred_region
        _
      $region20: #{_lambda_.20} parent=11 // pred_fallthru
        _
    $region12: #{_lambda_.20} parent=5 // pred_fallthru
      _
    %p151 = scmp.lt.s32.totalorder %s10, 2
    // Predicated region
    $region21: #{_lambda_.20} parent=5 // pred_check
      %p152 = pneg %p151
    $region22: #{_lambda_.20} parent=5 // pred_check_branch
      %154 = sbr.rel (%p152) target = $region24
    $region23: #{_lambda_.20} parent=5 // pred_region
      // Predicated region
      $region25: #{_lambda_.20} parent=23 // pred_check
        %p155 = pneg %p30
      $region26: #{_lambda_.20} parent=23 // pred_check_branch
        %157 = sbr.rel (%p155) target = $region28
      $region27: #{_lambda_.20} parent=23 // pred_region
        %p158 = scmp.lt.s32.totalorder %s10, 1
        %s159 = scalar_select %p158, %s10, 1
        %s160 = smul.addr %s159, 2
        %s161 = smul.addr %s160, 4
        %s162 = scalar_lea.vmem %s0, %s161
      $region28: #{_lambda_.20} parent=23 // pred_fallthru
        _
      // Predicated region
      $region29: #{_lambda_.20} parent=23 // pred_check
        %p163 = pneg %p56
      $region30: #{_lambda_.20} parent=23 // pred_check_branch
        %165 = sbr.rel (%p163) target = $region32
      $region31: #{_lambda_.20} parent=23 // pred_region
        %p166 = scmp.lt.s32.totalorder %s10, 1
        %s167 = scalar_select %p166, %s10, 1
        %s168 = smul.addr %s167, 2
        %s169 = smul.addr %s168, 4
        %s170 = scalar_lea.vmem %s1, %s169
      $region32: #{_lambda_.20} parent=23 // pred_fallthru
        _
    $region24: #{_lambda_.20} parent=5 // pred_fallthru
      _
    %p171 = scmp.le.s32.totalorder 1, %s10
    %p172 = scmp.lt.s32.totalorder %s10, 3
    %p173 = pnand %p171, %p172
    %p174 = pneg %p173
    // Predicated region
    $region33: #{_lambda_.20} parent=5 // pred_check
      _
    $region34: #{_lambda_.20} parent=5 // pred_check_branch
      %176 = sbr.rel (%p173) target = $region36
    $region35: #{_lambda_.20} parent=5 // pred_region
      %s177 = ssub.s32 %s10, 1
      %p178 = scmp.lt.s32.totalorder %s15, 1
      %s179 = scalar_select %p178, %s15, 1
      %s180 = smul.addr %s179, 2
      %s181 = smul.addr %s180, 4
      %s182 = scalar_lea.vmem %s0, %s181
      %p183 = pneg %p36
      %p184 = pneg %p33
      %p185 = scmp.lt.s32.totalorder %s15, 1
      %s186 = scalar_select %p185, %s15, 1
      %s187 = smul.addr %s186, 2
      %s188 = smul.addr %s187, 4
      %s189 = scalar_lea.vmem %s1, %s188
      %p190 = pneg %p62
      %p191 = pneg %p59
      %p192 = pneg %p83
      %p193 = pneg %p80
      %p194 = pneg %p104
      %p195 = pneg %p101
      %p196 = pneg %p130
      %p197 = pneg %p127
      %p198 = scmp.lt.s32.totalorder %s15, 1
      %s199 = scalar_select %p198, %s15, 1
      %s200 = smul.addr %s199, 2
      %s201 = smul.addr %s200, 4
      %s202 = scalar_lea.vmem %s4, %s201
      %p203 = scmp.lt.s32.totalorder %s15, 1
      %s204 = scalar_select %p203, %s15, 1
      %s205 = smul.addr %s204, 2
      %s206 = smul.addr %s205, 4
      %s207 = scalar_lea.vmem %s0, %s206
      %p208 = scmp.lt.s32.totalorder %s15, 1
      %s209 = scalar_select %p208, %s15, 1
      %s210 = smul.addr %s209, 2
      %s211 = smul.addr %s210, 4
      %s212 = scalar_lea.vmem %s1, %s211
      %p213 = scmp.lt.s32.totalorder %s15, 1
      %s214 = scalar_select %p213, %s15, 1
      %s215 = smul.addr %s214, 2
      %s216 = smul.addr %s215, 4
      %s217 = scalar_lea.vmem %s4, %s216
      %v219 = vld [vmem:[%s2] sm:$0xf]
      %v220 = vld [vmem:[%s2 + $0x4] sm:$0x1]
      %v221 = vld [vmem:[%s207] sm:$0xf]
      %v222 = vld [vmem:[%s207 + $0x4] sm:$0xf]
      %v225 = vunpack.c.l.b16 %v221
      %v226 = vunpack.c.l.b16 %v222
      %v227 = vpack.c.b16 %v226, %v225
      %228 = vrot.lane.b32.xlu0 %v227, 9
      %v229 = vpop.permute.xlu0 %228
      %vm230 = vcmask 72704
      %v233 = vsel %vm230, 0, %v229
      %vm234 = vcmask 596992
      %v235 = vsel %vm234, %v233, 0
      %v238 = vpack.i.b16 %v219, %v219
      %v240 = vlaneseq
      %v241 = vshrl.u32 %v240, 7
      %v242 = vsub.s32 0, %v241
      %v243 = vrot.slane %v238, %v242
      %v244 = vmul.bf16 %v235, %v243
      %v245 = vshrl.u32 %v219, 16
      %v246 = vpack.i.b16 %v245, %v245
      %v248 = vlaneseq
      %v249 = vshrl.u32 %v248, 7
      %v250 = vsub.s32 0, %v249
      %v251 = vrot.slane %v246, %v250
      %253 = vrot.lane.b32.xlu0 %v251, 1
      %v254 = vpop.permute.xlu0 %253
      %v256 = vmul.bf16 %v235, %v254
      %v257 = vlaneseq
      %v258 = vshrl.u32 %v257, 7
      %v259 = vsub.s32 1, %v258
      %v260 = vrot.slane %v238, %v259
      %262 = vrot.lane.b32.xlu0 %v260, 2
      %v263 = vpop.permute.xlu0 %262
      %v265 = vmul.bf16 %v235, %v263
      %v266 = vlaneseq
      %v267 = vshrl.u32 %v266, 7
      %v268 = vsub.s32 1, %v267
      %v269 = vrot.slane %v246, %v268
      %271 = vrot.lane.b32.xlu0 %v269, 8
      %v272 = vpop.permute.xlu0 %271
      %v274 = vmul.bf16 %v235, %v272
      %v275 = vlaneseq
      %v276 = vshrl.u32 %v275, 7
      %v277 = vsub.s32 2, %v276
      %v278 = vrot.slane %v238, %v277
      %280 = vrot.lane.b32.xlu0 %v278, 9
      %v281 = vpop.permute.xlu0 %280
      %v283 = vmul.bf16 %v235, %v281
      %v284 = vlaneseq
      %v285 = vshrl.u32 %v284, 7
      %v286 = vsub.s32 2, %v285
      %v287 = vrot.slane %v246, %v286
      %289 = vrot.lane.b32.xlu0 %v287, 10
      %v290 = vpop.permute.xlu0 %289
      %v292 = vmul.bf16 %v235, %v290
      %v293 = vlaneseq
      %v294 = vshrl.u32 %v293, 7
      %v295 = vsub.s32 3, %v294
      %v296 = vrot.slane %v238, %v295
      %298 = vrot.lane.b32.xlu0 %v296, 16
      %v299 = vpop.permute.xlu0 %298
      %v301 = vmul.bf16 %v235, %v299
      %v302 = vlaneseq
      %v303 = vshrl.u32 %v302, 7
      %v304 = vsub.s32 3, %v303
      %v305 = vrot.slane %v246, %v304
      %307 = vrot.lane.b32.xlu0 %v305, 17
      %v308 = vpop.permute.xlu0 %307
      %v310 = vmul.bf16 %v235, %v308
      %v312 = vpack.i.b16 %v220, %v220
      %v314 = vlaneseq
      %v315 = vshrl.u32 %v314, 7
      %v316 = vsub.s32 0, %v315
      %v317 = vrot.slane %v312, %v316
      %319 = vrot.lane.b32.xlu0 %v317, 18
      %v320 = vpop.permute.xlu0 %319
      %v322 = vmul.bf16 %v235, %v320
      %v323 = vld [vmem:[%s212] sm:$0xf]
      %v324 = vld [vmem:[%s212 + $0x4] sm:$0xf]
      %v327 = vunpack.c.l.b16 %v323
      %v328 = vunpack.c.l.b16 %v324
      %v329 = vpack.c.b16 %v328, %v327
      %330 = vrot.lane.b32.xlu0 %v329, 9
      %v331 = vpop.permute.xlu0 %330
      %v333 = vsel %vm230, 0, %v331
      %v334 = vsel %vm234, %v333, 0
      %v336 = vmul.bf16 %v334, %v243
      %v337 = vmul.bf16 %v334, %v254
      %v338 = vmul.bf16 %v334, %v263
      %v339 = vmul.bf16 %v334, %v272
      %v340 = vmul.bf16 %v334, %v281
      %v341 = vmul.bf16 %v334, %v290
      %v342 = vmul.bf16 %v334, %v299
      %v343 = vmul.bf16 %v334, %v308
      %v344 = vmul.bf16 %v334, %v320
      %346 = vrot.lane.b32.xlu0 %v256, 127
      %v347 = vpop.permute.xlu0 %346
      %350 = vrot.lane.b32.xlu0 %v265, 126
      %v351 = vpop.permute.xlu0 %350
      %354 = vrot.lane.b32.xlu0 %v274, 120
      %v355 = vpop.permute.xlu0 %354
      %358 = vrot.lane.b32.xlu0 %v283, 119
      %v359 = vpop.permute.xlu0 %358
      %362 = vrot.lane.b32.xlu0 %v292, 118
      %v363 = vpop.permute.xlu0 %362
      %366 = vrot.lane.b32.xlu0 %v301, 112
      %v367 = vpop.permute.xlu0 %366
      %370 = vrot.lane.b32.xlu0 %v310, 111
      %v371 = vpop.permute.xlu0 %370
      %374 = vrot.lane.b32.xlu0 %v322, 110
      %v375 = vpop.permute.xlu0 %374
      %378 = vrot.lane.b32.xlu0 %v337, 127
      %v379 = vpop.permute.xlu0 %378
      %382 = vrot.lane.b32.xlu0 %v338, 126
      %v383 = vpop.permute.xlu0 %382
      %386 = vrot.lane.b32.xlu0 %v339, 120
      %v387 = vpop.permute.xlu0 %386
      %390 = vrot.lane.b32.xlu0 %v340, 119
      %v391 = vpop.permute.xlu0 %390
      %394 = vrot.lane.b32.xlu0 %v341, 118
      %v395 = vpop.permute.xlu0 %394
      %398 = vrot.lane.b32.xlu0 %v342, 112
      %v399 = vpop.permute.xlu0 %398
      %402 = vrot.lane.b32.xlu0 %v344, 127
      %v403 = vpop.permute.xlu0 %402
      %405 = vrot.lane.b32.xlu0 %v343, 111
      %v406 = vpop.permute.xlu0 %405
      %407 = vrot.lane.b32.xlu0 %v403, 111
      %v408 = vpop.permute.xlu0 %407
      %v411 = vld [vmem:[%s3] sm:$0xff]
      %v412 = vld [vmem:[%s3 + $0x8] sm:$0xf]
      %v413 = vld [vmem:[%s3 + $0xc] sm:$0xff]
      %v414 = vld [vmem:[%s3 + $0x14] sm:$0xf]
      %v419 = vunpack.c.l.b16 %v411
      %v420 = vunpack.c.h.b16 %v411
      %v421 = vunpack.c.l.b16 %v412
      %v422 = vunpack.c.l.b16 %v413
      %v423 = vunpack.c.h.b16 %v413
      %v424 = vunpack.c.l.b16 %v414
      %v425 = vpack.c.b16 %v422, %v419
      %v426 = vpack.c.b16 %v423, %v420
      %v427 = vpack.c.b16 %v424, %v421
      %vm430 = vcmask 261120
      %v432 = vsel %vm430, %v427, 0
      %434 = vmatprep.subr.bf16.mxu0 0
      %435 = vmatpush1.bf16.msra.mxu0 %v244
      %436 = vmatprep.subr.bf16.mxu0 0
      %437 = vmatpush1.bf16.msra.mxu0 %v347
      %438 = vmatprep.subr.bf16.mxu0 0
      %439 = vmatpush1.bf16.msra.mxu0 %v351
      %440 = vmatprep.subr.bf16.mxu0 0
      %441 = vmatpush1.bf16.msra.mxu0 %v355
      %442 = vmatprep.subr.bf16.mxu0 0
      %443 = vmatpush1.bf16.msra.mxu0 %v359
      %444 = vmatprep.subr.bf16.mxu0 0
      %445 = vmatpush1.bf16.msra.mxu0 %v363
      %446 = vmatprep.subr.bf16.mxu0 0
      %447 = vmatpush1.bf16.msra.mxu0 %v367
      %448 = vmatprep.subr.bf16.mxu0 0
      %449 = vmatpush1.bf16.msra.mxu0 %v371
      %450 = vmatprep.subr.bf16.mxu0 0
      %451 = vmatpush1.bf16.msra.mxu0 %v375
      %452 = vmatprep.subr.bf16.mxu0 0
      %453 = vmatpush1.bf16.msra.mxu0 %v336
      %454 = vmatprep.subr.bf16.mxu0 0
      %455 = vmatpush1.bf16.msra.mxu0 %v379
      %456 = vmatprep.subr.bf16.mxu0 0
      %457 = vmatpush1.bf16.msra.mxu0 %v383
      %458 = vmatprep.subr.bf16.mxu0 0
      %459 = vmatpush1.bf16.msra.mxu0 %v387
      %460 = vmatprep.subr.bf16.mxu0 0
      %461 = vmatpush1.bf16.msra.mxu0 %v391
      %462 = vmatprep.subr.bf16.mxu0 0
      %463 = vmatpush1.bf16.msra.mxu0 %v395
      %464 = vmatprep.subr.bf16.mxu0 0
      %465 = vmatpush1.bf16.msra.mxu0 %v399
      %466 = vmatprep.mubr.bf16.mxu0 %v426
      %467 = vmatmul.mubr.bf16.gmra.mrb[0].mxu0 %v425
      %v468 = vpop.f32.mrb[0].mxu0
      %v469 = vadd.f32 0.0, %v468
      %v470 = vpop.f32.mrb[0].mxu0
      %v471 = vpop.f32.mrb[0].mxu0
      %v472 = vadd.f32 0.0, %v471
      %v473 = vpop.f32.mrb[0].mxu0
      %474 = vdwg.mxu0
      %475 = vmatprep.subr.bf16.mxu0 0
      %476 = vmatpush1.bf16.msra.mxu0 %v406
      %477 = vmatprep.subr.bf16.mxu0 0
      %478 = vmatpush1.bf16.msra.mxu0 %v408
      %479 = vmatprep.subr.bf16.mxu0 0
      %480 = vmatpush1.bf16.msra.mxu0 0
      %481 = vmatprep.subr.bf16.mxu0 0
      %482 = vmatpush1.bf16.msra.mxu0 0
      %483 = vmatprep.subr.bf16.mxu0 0
      %484 = vmatpush1.bf16.msra.mxu0 0
      %485 = vmatprep.subr.bf16.mxu0 0
      %486 = vmatpush1.bf16.msra.mxu0 0
      %487 = vmatprep.subr.bf16.mxu0 0
      %488 = vmatpush1.bf16.msra.mxu0 0
      %489 = vmatprep.subr.bf16.mxu0 0
      %490 = vmatpush1.bf16.msra.mxu0 0
      %491 = vmatprep.subr.bf16.mxu0 0
      %492 = vmatpush1.bf16.msra.mxu0 0
      %493 = vmatprep.subr.bf16.mxu0 0
      %494 = vmatpush1.bf16.msra.mxu0 0
      %495 = vmatprep.subr.bf16.mxu0 0
      %496 = vmatpush1.bf16.msra.mxu0 0
      %497 = vmatprep.subr.bf16.mxu0 0
      %498 = vmatpush1.bf16.msra.mxu0 0
      %499 = vmatprep.subr.bf16.mxu0 0
      %500 = vmatpush1.bf16.msra.mxu0 0
      %501 = vmatprep.subr.bf16.mxu0 0
      %502 = vmatpush1.bf16.msra.mxu0 0
      %503 = vmatprep.subr.bf16.mxu0 0
      %504 = vmatpush1.bf16.msra.mxu0 0
      %505 = vmatprep.subr.bf16.mxu0 0
      %506 = vmatpush1.bf16.msra.mxu0 0
      %507 = vmatprep.mubr.bf16.mxu0 0
      %508 = vmatmul.mubr.bf16.gmra.mrb[0].mxu0 %v432
      %v509 = vpop.f32.mrb[0].mxu0
      %v510 = vadd.f32 %v469, %v509
      %v511 = vpop.f32.mrb[0].mxu0
      %v512 = vpop.f32.mrb[0].mxu0
      %v513 = vadd.f32 %v472, %v512
      %v514 = vpop.f32.mrb[0].mxu0
      %515 = vdwg.mxu0
      %vm516 = vcmask 523264
      %v517 = vsel %vm516, %v510, 0.0
      %518 = vadd.xlane.f32.xlu0 %v517
      %v519 = vpop.xlane.xlu0 %518
      %v520 = vsel %vm516, %v513, 0.0
      %521 = vadd.xlane.f32.xlu0 %v520
      %v522 = vpop.xlane.xlu0 %521
      %v523 = vrcp.pop 64.0
      %v524 = vmul.f32 %v519, %v523
      %v525 = vmul.f32 %v522, %v523
      %v526 = vsub.f32 %v510, %v524
      %v527 = vsub.f32 %v513, %v525
      %v528 = vmul.f32 %v526, %v526
      %v529 = vmul.f32 %v527, %v527
      %v530 = vsel %vm516, %v528, 0.0
      %531 = vadd.xlane.f32.xlu0 %v530
      %v532 = vpop.xlane.xlu0 %531
      %v533 = vsel %vm516, %v529, 0.0
      %534 = vadd.xlane.f32.xlu0 %v533
      %v535 = vpop.xlane.xlu0 %534
      %v536 = vmul.f32 %v532, %v523
      %v537 = vmul.f32 %v535, %v523
      %v538 = vadd.f32 %v536, 1e-05
      %v539 = vadd.f32 %v537, 1e-05
      %v540 = vrsqrt.pop %v538
      %v541 = vrsqrt.pop %v539
      %v542 = vmul.f32 %v526, %v540
      %v543 = vmul.f32 %v527, %v541
      %vm544 = vcmp.ge.f32.partialorder %v542, 0.0
      %vm545 = vcmp.ge.f32.partialorder %v543, 0.0
      %v546 = vmul.f32 %v542, 0.01
      %v547 = vmul.f32 %v543, 0.01
      %v548 = vsel %vm544, %v542, %v546
      %v549 = vsel %vm545, %v543, %v547
      %v550 = vpack.c.bf16 %v549, %v548
      %v552 = vunpack.c.l.b16 %v550
      %v553 = vunpack.c.h.b16 %v550
      %v554 = vpack.c.b16 %v552, %v552
      %v555 = vpack.c.b16 %v553, %v553
      %vm558 = vcmask 519168
      %559 = vst.msk [vmem:[%s217] sm:$0xf] %vm558, %v554
      %560 = vst.msk [vmem:[%s217 + $0x4] sm:$0xf] %vm558, %v555
      %p561 = scmp.lt.s32.totalorder %s15, 1
      %s562 = scalar_select %p561, %s15, 1
      %s563 = smul.addr %s562, 2
      %s564 = smul.addr %s563, 4
      %s565 = scalar_lea.vmem %s4, %s564
      // Predicated region
      $region37: #{_lambda_.20} parent=35 // pred_check
        %p566 = pneg %p127
      $region38: #{_lambda_.20} parent=35 // pred_check_branch
        %568 = sbr.rel (%p566) target = $region40
      $region39: #{_lambda_.20} parent=35 // pred_region
        _
      $region40: #{_lambda_.20} parent=35 // pred_fallthru
        _
    $region36: #{_lambda_.20} parent=5 // pred_fallthru
      _
    %p569 = scmp.le.s32.totalorder 2, %s10
    // Predicated region
    $region41: #{_lambda_.20} parent=5 // pred_check
      %p570 = pneg %p569
    $region42: #{_lambda_.20} parent=5 // pred_check_branch
      %572 = sbr.rel (%p570) target = $region44
    $region43: #{_lambda_.20} parent=5 // pred_region
      %s573 = ssub.s32 %s10, 2
      // Predicated region
      $region45: #{_lambda_.20} parent=43 // pred_check
        %p574 = pneg %p133
      $region46: #{_lambda_.20} parent=43 // pred_check_branch
        %576 = sbr.rel (%p574) target = $region48
      $region47: #{_lambda_.20} parent=43 // pred_region
        %p577 = scmp.lt.s32.totalorder %s16, 1
        %s578 = scalar_select %p577, %s16, 1
        %s579 = smul.addr %s578, 2
        %s580 = smul.addr %s579, 4
        %s581 = scalar_lea.vmem %s4, %s580
      $region48: #{_lambda_.20} parent=43 // pred_fallthru
        _
    $region44: #{_lambda_.20} parent=5 // pred_fallthru
      _
  $region6: #{_lambda_.20} parent=0 // loop_footer
    %s14 = sadd.s32 1, %s10
  $region7: #{_lambda_.20} parent=0 // loop_footer_branch
    %9 = sbr.rel target = $region3
  $region8: #{_lambda_.20} parent=0 // loop_exit
    _

// kernel: _lambda_.25
$region0: #{_lambda_.25}
  #allocation0 [shape = 'u32[]', space=smem, size = 0x4, offset = 0x4, fixed_abs, tag = 'smem constant byte address 0x4 - core index']
  #allocation1 [shape = 'u32[144,128]{1,0:T(1,128)}', space=vmem, size = 0x12000, scoped, tag = 'internal scratch']
  %s0 = inlined_call_operand.vmem [shape: bf16[2,8,256], index: 0, kind: input, shape index: {}]
  %s1 = inlined_call_operand.vmem [shape: bf16[3,8], index: 1, kind: input, shape index: {}]
  %s2 = inlined_call_operand.vmem [shape: f32[3,1], index: 2, kind: input, shape index: {}]
  %s3 = inlined_call_operand.vmem [shape: f32[2,3,256], index: 3, kind: output, shape index: {}]
  %s4 = sld [smem:[#allocation0]]
  $region45: #{_lambda_.25} parent=0
    _
  %s6 = ssub.s32 1, %s4
  %s7 = scalar_select 0, %s6, %s4
  loop: start=0, step=1, limit=4
  $region2: #{_lambda_.25} parent=0 // loop_pre_header
    _
  $region3: #{_lambda_.25} parent=0 // loop_header
    %s9 = sphi 0, %s13
    %p10 = scmp.ge.s32.totalorder %s9, 4
    %s19 = sphi 0, %s21
    %s22 = sphi 0, %s19
    %s23 = sphi 0, %s22
    %s39 = sphi 0, %s23
    %s43 = sphi 0, %s43
    %s45 = sphi 0, %s43
    %s46 = sphi 0, %s45
    %s60 = sphi 0, %s46
    %s64 = sphi 0, %s64
    %s66 = sphi 0, %s64
    %s67 = sphi 0, %s66
    %s81 = sphi 0, %s67
    %s87 = sphi 0, %s89
    %s90 = sphi 0, %s87
    %s91 = sphi 0, %s90
    %s107 = sphi 0, %s91
  $region4: #{_lambda_.25} parent=0 // loop_header_branch
    %12 = sbr.rel (%p10) target = $region8
  $region5: #{_lambda_.25} parent=0 // loop_body
    %s14 = ssub.s32 %s9, 1
    %s15 = ssub.s32 %s9, 2
    %s16 = sadd.s32 %s9, 1
    %s17 = ssub.s32 %s9, %s16
    %p18 = scmp.eq.s32.totalorder %s17, 0
    %s20 = sadd.s32 %s19, 1
    %s21 = scalar_select %p18, %s19, %s20
    %p24 = pneg %p18
    %p25 = scmp.eq.s32.totalorder %s9, 1
    %p26 = por %p24, %p25
    %p27 = scmp.ne.s32.totalorder %s19, %s22
    %p28 = scmp.eq.s32.totalorder %s9, 0
    %p29 = por %p27, %p28
    %p30 = scmp.ne.s32.totalorder %s19, %s22
    %p31 = scmp.eq.s32.totalorder %s14, 1
    %p32 = por %p30, %p31
    %p33 = scmp.ne.s32.totalorder %s22, %s23
    %p34 = scmp.eq.s32.totalorder %s14, 0
    %p35 = por %p33, %p34
    %p36 = scmp.ne.s32.totalorder %s22, %s23
    %p37 = scmp.eq.s32.totalorder %s15, 1
    %p38 = por %p36, %p37
    %p40 = scmp.ne.s32.totalorder %s23, %s39
    %p41 = scmp.eq.s32.totalorder %s15, 0
    %p42 = por %p40, %p41
    %s44 = sadd.s32 %s43, 1
    %p47 = scmp.eq.s32.totalorder %s9, 1
    %p48 = scmp.ne.s32.totalorder %s43, %s45
    %p49 = scmp.eq.s32.totalorder %s9, 0
    %p50 = por %p48, %p49
    %p51 = scmp.ne.s32.totalorder %s43, %s45
    %p52 = scmp.eq.s32.totalorder %s14, 1
    %p53 = por %p51, %p52
    %p54 = scmp.ne.s32.totalorder %s45, %s46
    %p55 = scmp.eq.s32.totalorder %s14, 0
    %p56 = por %p54, %p55
    %p57 = scmp.ne.s32.totalorder %s45, %s46
    %p58 = scmp.eq.s32.totalorder %s15, 1
    %p59 = por %p57, %p58
    %p61 = scmp.ne.s32.totalorder %s46, %s60
    %p62 = scmp.eq.s32.totalorder %s15, 0
    %p63 = por %p61, %p62
    %s65 = sadd.s32 %s64, 1
    %p68 = scmp.eq.s32.totalorder %s9, 1
    %p69 = scmp.ne.s32.totalorder %s64, %s66
    %p70 = scmp.eq.s32.totalorder %s9, 0
    %p71 = por %p69, %p70
    %p72 = scmp.ne.s32.totalorder %s64, %s66
    %p73 = scmp.eq.s32.totalorder %s14, 1
    %p74 = por %p72, %p73
    %p75 = scmp.ne.s32.totalorder %s66, %s67
    %p76 = scmp.eq.s32.totalorder %s14, 0
    %p77 = por %p75, %p76
    %p78 = scmp.ne.s32.totalorder %s66, %s67
    %p79 = scmp.eq.s32.totalorder %s15, 1
    %p80 = por %p78, %p79
    %p82 = scmp.ne.s32.totalorder %s67, %s81
    %p83 = scmp.eq.s32.totalorder %s15, 0
    %p84 = por %p82, %p83
    %s85 = ssub.s32 %s9, %s16
    %p86 = scmp.eq.s32.totalorder %s85, 0
    %s88 = sadd.s32 %s87, 1
    %s89 = scalar_select %p86, %s87, %s88
    %p92 = pneg %p86
    %p93 = scmp.eq.s32.totalorder %s9, 1
    %p94 = por %p92, %p93
    %p95 = scmp.ne.s32.totalorder %s87, %s90
    %p96 = scmp.eq.s32.totalorder %s9, 0
    %p97 = por %p95, %p96
    %p98 = scmp.ne.s32.totalorder %s87, %s90
    %p99 = scmp.eq.s32.totalorder %s14, 1
    %p100 = por %p98, %p99
    %p101 = scmp.ne.s32.totalorder %s90, %s91
    %p102 = scmp.eq.s32.totalorder %s14, 0
    %p103 = por %p101, %p102
    %p104 = scmp.ne.s32.totalorder %s90, %s91
    %p105 = scmp.eq.s32.totalorder %s15, 1
    %p106 = por %p104, %p105
    %p108 = scmp.ne.s32.totalorder %s91, %s107
    %p109 = scmp.eq.s32.totalorder %s15, 0
    %p110 = por %p108, %p109
    %p111 = scmp.le.s32.totalorder 1, %s9
    %p112 = scmp.lt.s32.totalorder %s9, 3
    %p113 = pnand %p111, %p112
    %p114 = pneg %p113
    // Predicated region
    $region9: #{_lambda_.25} parent=5 // pred_check
      _
    $region10: #{_lambda_.25} parent=5 // pred_check_branch
      %116 = sbr.rel (%p113) target = $region12
    $region11: #{_lambda_.25} parent=5 // pred_region
      %s117 = ssub.s32 %s9, 1
      // Predicated region
      $region13: #{_lambda_.25} parent=11 // pred_check
        %p118 = pneg %p56
      $region14: #{_lambda_.25} parent=11 // pred_check_branch
        %120 = sbr.rel (%p118) target = $region16
      $region15: #{_lambda_.25} parent=11 // pred_region
        _
      $region16: #{_lambda_.25} parent=11 // pred_fallthru
        _
      // Predicated region
      $region17: #{_lambda_.25} parent=11 // pred_check
        %p121 = pneg %p77
      $region18: #{_lambda_.25} parent=11 // pred_check_branch
        %123 = sbr.rel (%p121) target = $region20
      $region19: #{_lambda_.25} parent=11 // pred_region
        _
      $region20: #{_lambda_.25} parent=11 // pred_fallthru
        _
    $region12: #{_lambda_.25} parent=5 // pred_fallthru
      _
    %p124 = scmp.lt.s32.totalorder %s9, 2
    // Predicated region
    $region21: #{_lambda_.25} parent=5 // pred_check
      %p125 = pneg %p124
    $region22: #{_lambda_.25} parent=5 // pred_check_branch
      %127 = sbr.rel (%p125) target = $region24
    $region23: #{_lambda_.25} parent=5 // pred_region
      // Predicated region
      $region25: #{_lambda_.25} parent=23 // pred_check
        %p128 = pneg %p29
      $region26: #{_lambda_.25} parent=23 // pred_check_branch
        %130 = sbr.rel (%p128) target = $region28
      $region27: #{_lambda_.25} parent=23 // pred_region
        %p131 = scmp.lt.s32.totalorder %s9, 1
        %s132 = scalar_select %p131, %s9, 1
        %s133 = smul.addr %s132, 2
        %s134 = smul.addr %s133, 4
        %s135 = scalar_lea.vmem %s0, %s134
      $region28: #{_lambda_.25} parent=23 // pred_fallthru
        _
    $region24: #{_lambda_.25} parent=5 // pred_fallthru
      _
    %p136 = scmp.le.s32.totalorder 1, %s9
    %p137 = scmp.lt.s32.totalorder %s9, 3
    %p138 = pnand %p136, %p137
    %p139 = pneg %p138
    // Predicated region
    $region29: #{_lambda_.25} parent=5 // pred_check
      _
    $region30: #{_lambda_.25} parent=5 // pred_check_branch
      %141 = sbr.rel (%p138) target = $region32
    $region31: #{_lambda_.25} parent=5 // pred_region
      %s142 = ssub.s32 %s9, 1
      %p143 = scmp.lt.s32.totalorder %s14, 1
      %s144 = scalar_select %p143, %s14, 1
      %s145 = smul.addr %s144, 2
      %s146 = smul.addr %s145, 4
      %s147 = scalar_lea.vmem %s0, %s146
      %p148 = pneg %p35
      %p149 = pneg %p32
      %p150 = pneg %p56
      %p151 = pneg %p53
      %p152 = pneg %p77
      %p153 = pneg %p74
      %p154 = pneg %p103
      %p155 = pneg %p100
      %p156 = scmp.lt.s32.totalorder %s14, 1
      %s157 = scalar_select %p156, %s14, 1
      %s158 = smul.addr %s157, 2
      %s159 = smul.addr %s158, 4
      %s160 = scalar_lea.vmem %s3, %s159
      %p161 = scmp.lt.s32.totalorder %s14, 1
      %s162 = scalar_select %p161, %s14, 1
      %s163 = smul.addr %s162, 2
      %s164 = smul.addr %s163, 4
      %s165 = scalar_lea.vmem %s0, %s164
      %p166 = scmp.lt.s32.totalorder %s14, 1
      %s167 = scalar_select %p166, %s14, 1
      %s168 = smul.addr %s167, 2
      %s169 = smul.addr %s168, 4
      %s170 = scalar_lea.vmem %s3, %s169
      %v172 = vld [vmem:[%s1] sm:$0x3]
      %v173 = vld [vmem:[%s165] sm:$0xff]
      %v174 = vld [vmem:[%s2] sm:$0x7]
      %176 = vset.pattern.permute.xlu0 0
      %177 = vperm.xlu0 %176, %v174
      %v178 = vpop.permute.xlu0 %177
      %v181 = vunpack.c.l.b16 %v173
      %v182 = vunpack.c.h.b16 %v173
      %v183 = vpack.c.b16 %v181, %v181
      %v184 = vpack.c.b16 %v182, %v182
      %vm185 = vcmask 64512
      %v187 = vsel %vm185, %v172, 0
      %vm189 = vcmask 1043456
      %v191 = vsel %vm189, %v183, 0
      %v194 = vsel %vm189, %v184, 0
      %196 = vmatprep.subr.bf16.mxu0 %v194
      %197 = vmatpush1.bf16.msra.mxu0 %v191
      %198 = vmatprep.subr.bf16.mxu0 0
      %199 = vmatpush1.bf16.msra.mxu0 0
      %200 = vmatprep.subr.bf16.mxu0 0
      %201 = vmatpush1.bf16.msra.mxu0 0
      %202 = vmatprep.subr.bf16.mxu0 0
      %203 = vmatpush1.bf16.msra.mxu0 0
      %204 = vmatprep.subr.bf16.mxu0 0
      %205 = vmatpush1.bf16.msra.mxu0 0
      %206 = vmatprep.subr.bf16.mxu0 0
      %207 = vmatpush1.bf16.msra.mxu0 0
      %208 = vmatprep.subr.bf16.mxu0 0
      %209 = vmatpush1.bf16.msra.mxu0 0
      %210 = vmatprep.subr.bf16.mxu0 0
      %211 = vmatpush1.bf16.msra.mxu0 0
      %212 = vmatprep.subr.bf16.mxu0 0
      %213 = vmatpush1.bf16.msra.mxu0 0
      %214 = vmatprep.subr.bf16.mxu0 0
      %215 = vmatpush1.bf16.msra.mxu0 0
      %216 = vmatprep.subr.bf16.mxu0 0
      %217 = vmatpush1.bf16.msra.mxu0 0
      %218 = vmatprep.subr.bf16.mxu0 0
      %219 = vmatpush1.bf16.msra.mxu0 0
      %220 = vmatprep.subr.bf16.mxu0 0
      %221 = vmatpush1.bf16.msra.mxu0 0
      %222 = vmatprep.subr.bf16.mxu0 0
      %223 = vmatpush1.bf16.msra.mxu0 0
      %224 = vmatprep.subr.bf16.mxu0 0
      %225 = vmatpush1.bf16.msra.mxu0 0
      %226 = vmatprep.subr.bf16.mxu0 0
      %227 = vmatpush1.bf16.msra.mxu0 0
      %228 = vmatprep.mubr.bf16.mxu0 0
      %229 = vmatmul.mubr.bf16.gmra.mrb[0].mxu0 %v187
      %v230 = vpop.f32.mrb[0].mxu0
      %v231 = vadd.f32 %v178, %v230
      %v232 = vpop.f32.mrb[0].mxu0
      %v233 = vadd.f32 %v178, %v232
      %v234 = vpop.f32.mrb[0].mxu0
      %v235 = vpop.f32.mrb[0].mxu0
      %236 = vdwg.mxu0
      %v239 = vcombine.low %v231, %v233
      %241 = vst [vmem:[%s170] sm:$0x77] %v239
      %p242 = scmp.lt.s32.totalorder %s14, 1
      %s243 = scalar_select %p242, %s14, 1
      %s244 = smul.addr %s243, 2
      %s245 = smul.addr %s244, 4
      %s246 = scalar_lea.vmem %s3, %s245
      // Predicated region
      $region33: #{_lambda_.25} parent=31 // pred_check
        %p247 = pneg %p100
      $region34: #{_lambda_.25} parent=31 // pred_check_branch
        %249 = sbr.rel (%p247) target = $region36
      $region35: #{_lambda_.25} parent=31 // pred_region
        _
      $region36: #{_lambda_.25} parent=31 // pred_fallthru
        _
    $region32: #{_lambda_.25} parent=5 // pred_fallthru
      _
    %p250 = scmp.le.s32.totalorder 2, %s9
    // Predicated region
    $region37: #{_lambda_.25} parent=5 // pred_check
      %p251 = pneg %p250
    $region38: #{_lambda_.25} parent=5 // pred_check_branch
      %253 = sbr.rel (%p251) target = $region40
    $region39: #{_lambda_.25} parent=5 // pred_region
      %s254 = ssub.s32 %s9, 2
      // Predicated region
      $region41: #{_lambda_.25} parent=39 // pred_check
        %p255 = pneg %p106
      $region42: #{_lambda_.25} parent=39 // pred_check_branch
        %257 = sbr.rel (%p255) target = $region44
      $region43: #{_lambda_.25} parent=39 // pred_region
        %p258 = scmp.lt.s32.totalorder %s15, 1
        %s259 = scalar_select %p258, %s15, 1
        %s260 = smul.addr %s259, 2
        %s261 = smul.addr %s260, 4
        %s262 = scalar_lea.vmem %s3, %s261
      $region44: #{_lambda_.25} parent=39 // pred_fallthru
        _
    $region40: #{_lambda_.25} parent=5 // pred_fallthru
      _
  $region6: #{_lambda_.25} parent=0 // loop_footer
    %s13 = sadd.s32 1, %s9
  $region7: #{_lambda_.25} parent=0 // loop_footer_branch
    %8 = sbr.rel target = $region3
  $region8: #{_lambda_.25} parent=0 // loop_exit
    _

// kernel: _lambda_.23
$region0: #{_lambda_.23}
  #allocation0 [shape = 'u32[]', space=smem, size = 0x4, offset = 0x4, fixed_abs, tag = 'smem constant byte address 0x4 - core index']
  #allocation1 [shape = 'u32[144,128]{1,0:T(1,128)}', space=vmem, size = 0x12000, scoped, tag = 'internal scratch']
  %s0 = inlined_call_operand.vmem [shape: bf16[2,8,256], index: 0, kind: input, shape index: {}]
  %s1 = inlined_call_operand.vmem [shape: bf16[2,8,256], index: 1, kind: input, shape index: {}]
  %s2 = inlined_call_operand.vmem [shape: bf16[9,256], index: 2, kind: input, shape index: {}]
  %s3 = inlined_call_operand.vmem [shape: bf16[8,144], index: 3, kind: input, shape index: {}]
  %s4 = inlined_call_operand.vmem [shape: bf16[2,8,256], index: 4, kind: output, shape index: {}]
  %s5 = sld [smem:[#allocation0]]
  $region49: #{_lambda_.23} parent=0
    _
  %s7 = ssub.s32 1, %s5
  %s8 = scalar_select 0, %s7, %s5
  loop: start=0, step=1, limit=4
  $region2: #{_lambda_.23} parent=0 // loop_pre_header
    _
  $region3: #{_lambda_.23} parent=0 // loop_header
    %s10 = sphi 0, %s14
    %p11 = scmp.ge.s32.totalorder %s10, 4
    %s20 = sphi 0, %s22
    %s23 = sphi 0, %s20
    %s24 = sphi 0, %s23
    %s40 = sphi 0, %s24
    %s46 = sphi 0, %s48
    %s49 = sphi 0, %s46
    %s50 = sphi 0, %s49
    %s66 = sphi 0, %s50
    %s70 = sphi 0, %s70
    %s72 = sphi 0, %s70
    %s73 = sphi 0, %s72
    %s87 = sphi 0, %s73
    %s91 = sphi 0, %s91
    %s93 = sphi 0, %s91
    %s94 = sphi 0, %s93
    %s108 = sphi 0, %s94
    %s114 = sphi 0, %s116
    %s117 = sphi 0, %s114
    %s118 = sphi 0, %s117
    %s134 = sphi 0, %s118
  $region4: #{_lambda_.23} parent=0 // loop_header_branch
    %13 = sbr.rel (%p11) target = $region8
  $region5: #{_lambda_.23} parent=0 // loop_body
    %s15 = ssub.s32 %s10, 1
    %s16 = ssub.s32 %s10, 2
    %s17 = sadd.s32 %s10, 1
    %s18 = ssub.s32 %s10, %s17
    %p19 = scmp.eq.s32.totalorder %s18, 0
    %s21 = sadd.s32 %s20, 1
    %s22 = scalar_select %p19, %s20, %s21
    %p25 = pneg %p19
    %p26 = scmp.eq.s32.totalorder %s10, 1
    %p27 = por %p25, %p26
    %p28 = scmp.ne.s32.totalorder %s20, %s23
    %p29 = scmp.eq.s32.totalorder %s10, 0
    %p30 = por %p28, %p29
    %p31 = scmp.ne.s32.totalorder %s20, %s23
    %p32 = scmp.eq.s32.totalorder %s15, 1
    %p33 = por %p31, %p32
    %p34 = scmp.ne.s32.totalorder %s23, %s24
    %p35 = scmp.eq.s32.totalorder %s15, 0
    %p36 = por %p34, %p35
    %p37 = scmp.ne.s32.totalorder %s23, %s24
    %p38 = scmp.eq.s32.totalorder %s16, 1
    %p39 = por %p37, %p38
    %p41 = scmp.ne.s32.totalorder %s24, %s40
    %p42 = scmp.eq.s32.totalorder %s16, 0
    %p43 = por %p41, %p42
    %s44 = ssub.s32 %s10, %s17
    %p45 = scmp.eq.s32.totalorder %s44, 0
    %s47 = sadd.s32 %s46, 1
    %s48 = scalar_select %p45, %s46, %s47
    %p51 = pneg %p45
    %p52 = scmp.eq.s32.totalorder %s10, 1
    %p53 = por %p51, %p52
    %p54 = scmp.ne.s32.totalorder %s46, %s49
    %p55 = scmp.eq.s32.totalorder %s10, 0
    %p56 = por %p54, %p55
    %p57 = scmp.ne.s32.totalorder %s46, %s49
    %p58 = scmp.eq.s32.totalorder %s15, 1
    %p59 = por %p57, %p58
    %p60 = scmp.ne.s32.totalorder %s49, %s50
    %p61 = scmp.eq.s32.totalorder %s15, 0
    %p62 = por %p60, %p61
    %p63 = scmp.ne.s32.totalorder %s49, %s50
    %p64 = scmp.eq.s32.totalorder %s16, 1
    %p65 = por %p63, %p64
    %p67 = scmp.ne.s32.totalorder %s50, %s66
    %p68 = scmp.eq.s32.totalorder %s16, 0
    %p69 = por %p67, %p68
    %s71 = sadd.s32 %s70, 1
    %p74 = scmp.eq.s32.totalorder %s10, 1
    %p75 = scmp.ne.s32.totalorder %s70, %s72
    %p76 = scmp.eq.s32.totalorder %s10, 0
    %p77 = por %p75, %p76
    %p78 = scmp.ne.s32.totalorder %s70, %s72
    %p79 = scmp.eq.s32.totalorder %s15, 1
    %p80 = por %p78, %p79
    %p81 = scmp.ne.s32.totalorder %s72, %s73
    %p82 = scmp.eq.s32.totalorder %s15, 0
    %p83 = por %p81, %p82
    %p84 = scmp.ne.s32.totalorder %s72, %s73
    %p85 = scmp.eq.s32.totalorder %s16, 1
    %p86 = por %p84, %p85
    %p88 = scmp.ne.s32.totalorder %s73, %s87
    %p89 = scmp.eq.s32.totalorder %s16, 0
    %p90 = por %p88, %p89
    %s92 = sadd.s32 %s91, 1
    %p95 = scmp.eq.s32.totalorder %s10, 1
    %p96 = scmp.ne.s32.totalorder %s91, %s93
    %p97 = scmp.eq.s32.totalorder %s10, 0
    %p98 = por %p96, %p97
    %p99 = scmp.ne.s32.totalorder %s91, %s93
    %p100 = scmp.eq.s32.totalorder %s15, 1
    %p101 = por %p99, %p100
    %p102 = scmp.ne.s32.totalorder %s93, %s94
    %p103 = scmp.eq.s32.totalorder %s15, 0
    %p104 = por %p102, %p103
    %p105 = scmp.ne.s32.totalorder %s93, %s94
    %p106 = scmp.eq.s32.totalorder %s16, 1
    %p107 = por %p105, %p106
    %p109 = scmp.ne.s32.totalorder %s94, %s108
    %p110 = scmp.eq.s32.totalorder %s16, 0
    %p111 = por %p109, %p110
    %s112 = ssub.s32 %s10, %s17
    %p113 = scmp.eq.s32.totalorder %s112, 0
    %s115 = sadd.s32 %s114, 1
    %s116 = scalar_select %p113, %s114, %s115
    %p119 = pneg %p113
    %p120 = scmp.eq.s32.totalorder %s10, 1
    %p121 = por %p119, %p120
    %p122 = scmp.ne.s32.totalorder %s114, %s117
    %p123 = scmp.eq.s32.totalorder %s10, 0
    %p124 = por %p122, %p123
    %p125 = scmp.ne.s32.totalorder %s114, %s117
    %p126 = scmp.eq.s32.totalorder %s15, 1
    %p127 = por %p125, %p126
    %p128 = scmp.ne.s32.totalorder %s117, %s118
    %p129 = scmp.eq.s32.totalorder %s15, 0
    %p130 = por %p128, %p129
    %p131 = scmp.ne.s32.totalorder %s117, %s118
    %p132 = scmp.eq.s32.totalorder %s16, 1
    %p133 = por %p131, %p132
    %p135 = scmp.ne.s32.totalorder %s118, %s134
    %p136 = scmp.eq.s32.totalorder %s16, 0
    %p137 = por %p135, %p136
    %p138 = scmp.le.s32.totalorder 1, %s10
    %p139 = scmp.lt.s32.totalorder %s10, 3
    %p140 = pnand %p138, %p139
    %p141 = pneg %p140
    // Predicated region
    $region9: #{_lambda_.23} parent=5 // pred_check
      _
    $region10: #{_lambda_.23} parent=5 // pred_check_branch
      %143 = sbr.rel (%p140) target = $region12
    $region11: #{_lambda_.23} parent=5 // pred_region
      %s144 = ssub.s32 %s10, 1
      // Predicated region
      $region13: #{_lambda_.23} parent=11 // pred_check
        %p145 = pneg %p83
      $region14: #{_lambda_.23} parent=11 // pred_check_branch
        %147 = sbr.rel (%p145) target = $region16
      $region15: #{_lambda_.23} parent=11 // pred_region
        _
      $region16: #{_lambda_.23} parent=11 // pred_fallthru
        _
      // Predicated region
      $region17: #{_lambda_.23} parent=11 // pred_check
        %p148 = pneg %p104
      $region18: #{_lambda_.23} parent=11 // pred_check_branch
        %150 = sbr.rel (%p148) target = $region20
      $region19: #{_lambda_.23} parent=11 // pred_region
        _
      $region20: #{_lambda_.23} parent=11 // pred_fallthru
        _
    $region12: #{_lambda_.23} parent=5 // pred_fallthru
      _
    %p151 = scmp.lt.s32.totalorder %s10, 2
    // Predicated region
    $region21: #{_lambda_.23} parent=5 // pred_check
      %p152 = pneg %p151
    $region22: #{_lambda_.23} parent=5 // pred_check_branch
      %154 = sbr.rel (%p152) target = $region24
    $region23: #{_lambda_.23} parent=5 // pred_region
      // Predicated region
      $region25: #{_lambda_.23} parent=23 // pred_check
        %p155 = pneg %p30
      $region26: #{_lambda_.23} parent=23 // pred_check_branch
        %157 = sbr.rel (%p155) target = $region28
      $region27: #{_lambda_.23} parent=23 // pred_region
        %p158 = scmp.lt.s32.totalorder %s10, 1
        %s159 = scalar_select %p158, %s10, 1
        %s160 = smul.addr %s159, 2
        %s161 = smul.addr %s160, 4
        %s162 = scalar_lea.vmem %s0, %s161
      $region28: #{_lambda_.23} parent=23 // pred_fallthru
        _
      // Predicated region
      $region29: #{_lambda_.23} parent=23 // pred_check
        %p163 = pneg %p56
      $region30: #{_lambda_.23} parent=23 // pred_check_branch
        %165 = sbr.rel (%p163) target = $region32
      $region31: #{_lambda_.23} parent=23 // pred_region
        %p166 = scmp.lt.s32.totalorder %s10, 1
        %s167 = scalar_select %p166, %s10, 1
        %s168 = smul.addr %s167, 2
        %s169 = smul.addr %s168, 4
        %s170 = scalar_lea.vmem %s1, %s169
      $region32: #{_lambda_.23} parent=23 // pred_fallthru
        _
    $region24: #{_lambda_.23} parent=5 // pred_fallthru
      _
    %p171 = scmp.le.s32.totalorder 1, %s10
    %p172 = scmp.lt.s32.totalorder %s10, 3
    %p173 = pnand %p171, %p172
    %p174 = pneg %p173
    // Predicated region
    $region33: #{_lambda_.23} parent=5 // pred_check
      _
    $region34: #{_lambda_.23} parent=5 // pred_check_branch
      %176 = sbr.rel (%p173) target = $region36
    $region35: #{_lambda_.23} parent=5 // pred_region
      %s177 = ssub.s32 %s10, 1
      %p178 = scmp.lt.s32.totalorder %s15, 1
      %s179 = scalar_select %p178, %s15, 1
      %s180 = smul.addr %s179, 2
      %s181 = smul.addr %s180, 4
      %s182 = scalar_lea.vmem %s0, %s181
      %p183 = pneg %p36
      %p184 = pneg %p33
      %p185 = scmp.lt.s32.totalorder %s15, 1
      %s186 = scalar_select %p185, %s15, 1
      %s187 = smul.addr %s186, 2
      %s188 = smul.addr %s187, 4
      %s189 = scalar_lea.vmem %s1, %s188
      %p190 = pneg %p62
      %p191 = pneg %p59
      %p192 = pneg %p83
      %p193 = pneg %p80
      %p194 = pneg %p104
      %p195 = pneg %p101
      %p196 = pneg %p130
      %p197 = pneg %p127
      %p198 = scmp.lt.s32.totalorder %s15, 1
      %s199 = scalar_select %p198, %s15, 1
      %s200 = smul.addr %s199, 2
      %s201 = smul.addr %s200, 4
      %s202 = scalar_lea.vmem %s4, %s201
      %p203 = scmp.lt.s32.totalorder %s15, 1
      %s204 = scalar_select %p203, %s15, 1
      %s205 = smul.addr %s204, 2
      %s206 = smul.addr %s205, 4
      %s207 = scalar_lea.vmem %s0, %s206
      %p208 = scmp.lt.s32.totalorder %s15, 1
      %s209 = scalar_select %p208, %s15, 1
      %s210 = smul.addr %s209, 2
      %s211 = smul.addr %s210, 4
      %s212 = scalar_lea.vmem %s1, %s211
      %p213 = scmp.lt.s32.totalorder %s15, 1
      %s214 = scalar_select %p213, %s15, 1
      %s215 = smul.addr %s214, 2
      %s216 = smul.addr %s215, 4
      %s217 = scalar_lea.vmem %s4, %s216
      %v219 = vld [vmem:[%s2] sm:$0xff]
      %v220 = vld [vmem:[%s2 + $0x8] sm:$0x11]
      %v221 = vld [vmem:[%s207] sm:$0xff]
      %v223 = vunpack.c.l.b16 %v221
      %v224 = vunpack.c.h.b16 %v221
      %v225 = vpack.c.b16 %v223, %v223
      %v226 = vpack.c.b16 %v224, %v224
      %227 = vrot.lane.b32.xlu0 %v225, 17
      %v228 = vpop.permute.xlu0 %227
      %229 = vrot.lane.b32.xlu0 %v226, 17
      %v230 = vpop.permute.xlu0 %229
      %vm231 = vcmask 138240
      %v232 = vsel %vm231, %v228, %v230
      %vm234 = vcmask 138240
      %v237 = vsel %vm234, 0, %v228
      %v240 = vsel %vm234, %v230, 0
      %v243 = vunpack.c.l.b16 %v219
      %v244 = vunpack.c.h.b16 %v219
      %v245 = vpack.c.b16 %v243, %v243
      %v246 = vpack.c.b16 %v244, %v244
      %v248 = vpack.i.b16 %v245, %v245
      %v250 = vlaneseq
      %v251 = vshrl.u32 %v250, 7
      %v252 = vsub.s32 0, %v251
      %v253 = vrot.slane %v248, %v252
      %v255 = vpack.i.b16 %v246, %v246
      %v257 = vlaneseq
      %v258 = vshrl.u32 %v257, 7
      %v259 = vsub.s32 0, %v258
      %v260 = vrot.slane %v255, %v259
      %v261 = vmul.bf16 %v237, %v253
      %v262 = vmul.bf16 %v232, %v260
      %v263 = vshrl.u32 %v245, 16
      %v264 = vpack.i.b16 %v263, %v263
      %v266 = vlaneseq
      %v267 = vshrl.u32 %v266, 7
      %v268 = vsub.s32 0, %v267
      %v269 = vrot.slane %v264, %v268
      %v270 = vshrl.u32 %v246, 16
      %v271 = vpack.i.b16 %v270, %v270
      %v273 = vlaneseq
      %v274 = vshrl.u32 %v273, 7
      %v275 = vsub.s32 0, %v274
      %v276 = vrot.slane %v271, %v275
      %279 = vrot.lane.b32.xlu0 %v269, 1
      %v280 = vpop.permute.xlu0 %279
      %281 = vrot.lane.b32.xlu0 %v276, 1
      %v282 = vpop.permute.xlu0 %281
      %vm283 = vcmask 7168
      %v284 = vsel %vm283, %v280, %v282
      %v288 = vmul.bf16 %v237, %v280
      %v289 = vmul.bf16 %v232, %v284
      %v290 = vmul.bf16 %v240, %v282
      %v291 = vlaneseq
      %v292 = vshrl.u32 %v291, 7
      %v293 = vsub.s32 1, %v292
      %v294 = vrot.slane %v248, %v293
      %v295 = vlaneseq
      %v296 = vshrl.u32 %v295, 7
      %v297 = vsub.s32 1, %v296
      %v298 = vrot.slane %v255, %v297
      %301 = vrot.lane.b32.xlu0 %v294, 2
      %v302 = vpop.permute.xlu0 %301
      %303 = vrot.lane.b32.xlu0 %v298, 2
      %v304 = vpop.permute.xlu0 %303
      %vm305 = vcmask 15360
      %v306 = vsel %vm305, %v302, %v304
      %v310 = vmul.bf16 %v237, %v302
      %v311 = vmul.bf16 %v232, %v306
      %v312 = vmul.bf16 %v240, %v304
      %v313 = vlaneseq
      %v314 = vshrl.u32 %v313, 7
      %v315 = vsub.s32 1, %v314
      %v316 = vrot.slane %v264, %v315
      %v317 = vlaneseq
      %v318 = vshrl.u32 %v317, 7
      %v319 = vsub.s32 1, %v318
      %v320 = vrot.slane %v271, %v319
      %323 = vrot.lane.b32.xlu0 %v316, 16
      %v324 = vpop.permute.xlu0 %323
      %325 = vrot.lane.b32.xlu0 %v320, 16
      %v326 = vpop.permute.xlu0 %325
      %vm327 = vcmask 130048
      %v328 = vsel %vm327, %v324, %v326
      %v332 = vmul.bf16 %v237, %v324
      %v333 = vmul.bf16 %v232, %v328
      %v334 = vmul.bf16 %v240, %v326
      %v335 = vlaneseq
      %v336 = vshrl.u32 %v335, 7
      %v337 = vsub.s32 2, %v336
      %v338 = vrot.slane %v248, %v337
      %v339 = vlaneseq
      %v340 = vshrl.u32 %v339, 7
      %v341 = vsub.s32 2, %v340
      %v342 = vrot.slane %v255, %v341
      %345 = vrot.lane.b32.xlu0 %v338, 17
      %v346 = vpop.permute.xlu0 %345
      %347 = vrot.lane.b32.xlu0 %v342, 17
      %v348 = vpop.permute.xlu0 %347
      %v349 = vsel %vm231, %v346, %v348
      %v353 = vmul.bf16 %v237, %v346
      %v354 = vmul.bf16 %v232, %v349
      %v355 = vmul.bf16 %v240, %v348
      %v356 = vlaneseq
      %v357 = vshrl.u32 %v356, 7
      %v358 = vsub.s32 2, %v357
      %v359 = vrot.slane %v264, %v358
      %v360 = vlaneseq
      %v361 = vshrl.u32 %v360, 7
      %v362 = vsub.s32 2, %v361
      %v363 = vrot.slane %v271, %v362
      %366 = vrot.lane.b32.xlu0 %v359, 18
      %v367 = vpop.permute.xlu0 %366
      %368 = vrot.lane.b32.xlu0 %v363, 18
      %v369 = vpop.permute.xlu0 %368
      %vm370 = vcmask 146432
      %v371 = vsel %vm370, %v367, %v369
      %v375 = vmul.bf16 %v237, %v367
      %v376 = vmul.bf16 %v232, %v371
      %v377 = vmul.bf16 %v240, %v369
      %v378 = vlaneseq
      %v379 = vshrl.u32 %v378, 7
      %v380 = vsub.s32 3, %v379
      %v381 = vrot.slane %v248, %v380
      %v382 = vlaneseq
      %v383 = vshrl.u32 %v382, 7
      %v384 = vsub.s32 3, %v383
      %v385 = vrot.slane %v255, %v384
      %388 = vrot.lane.b32.xlu0 %v381, 32
      %v389 = vpop.permute.xlu0 %388
      %390 = vrot.lane.b32.xlu0 %v385, 32
      %v391 = vpop.permute.xlu0 %390
      %vm392 = vcmask 261120
      %v393 = vsel %vm392, %v389, %v391
      %v397 = vmul.bf16 %v237, %v389
      %v398 = vmul.bf16 %v232, %v393
      %v399 = vmul.bf16 %v240, %v391
      %v400 = vlaneseq
      %v401 = vshrl.u32 %v400, 7
      %v402 = vsub.s32 3, %v401
      %v403 = vrot.slane %v264, %v402
      %v404 = vlaneseq
      %v405 = vshrl.u32 %v404, 7
      %v406 = vsub.s32 3, %v405
      %v407 = vrot.slane %v271, %v406
      %410 = vrot.lane.b32.xlu0 %v403, 33
      %v411 = vpop.permute.xlu0 %410
      %412 = vrot.lane.b32.xlu0 %v407, 33
      %v413 = vpop.permute.xlu0 %412
      %vm414 = vcmask 269312
      %v415 = vsel %vm414, %v411, %v413
      %v419 = vmul.bf16 %v237, %v411
      %v420 = vmul.bf16 %v232, %v415
      %v421 = vmul.bf16 %v240, %v413
      %v423 = vunpack.c.l.b16 %v220
      %v424 = vunpack.c.h.b16 %v220
      %v425 = vpack.c.b16 %v423, %v423
      %v426 = vpack.c.b16 %v424, %v424
      %v428 = vpack.i.b16 %v425, %v425
      %v430 = vlaneseq
      %v431 = vshrl.u32 %v430, 7
      %v432 = vsub.s32 0, %v431
      %v433 = vrot.slane %v428, %v432
      %v435 = vpack.i.b16 %v426, %v426
      %v437 = vlaneseq
      %v438 = vshrl.u32 %v437, 7
      %v439 = vsub.s32 0, %v438
      %v440 = vrot.slane %v435, %v439
      %443 = vrot.lane.b32.xlu0 %v433, 34
      %v444 = vpop.permute.xlu0 %443
      %445 = vrot.lane.b32.xlu0 %v440, 34
      %v446 = vpop.permute.xlu0 %445
      %vm447 = vcmask 277504
      %v448 = vsel %vm447, %v444, %v446
      %v452 = vmul.bf16 %v237, %v444
      %v453 = vmul.bf16 %v232, %v448
      %v454 = vmul.bf16 %v240, %v446
      %v455 = vld [vmem:[%s212] sm:$0xff]
      %v457 = vunpack.c.l.b16 %v455
      %v458 = vunpack.c.h.b16 %v455
      %v459 = vpack.c.b16 %v457, %v457
      %v460 = vpack.c.b16 %v458, %v458
      %461 = vrot.lane.b32.xlu0 %v459, 17
      %v462 = vpop.permute.xlu0 %461
      %463 = vrot.lane.b32.xlu0 %v460, 17
      %v464 = vpop.permute.xlu0 %463
      %v465 = vsel %vm231, %v462, %v464
      %v468 = vsel %vm234, 0, %v462
      %v471 = vsel %vm234, %v464, 0
      %v473 = vmul.bf16 %v468, %v253
      %v474 = vmul.bf16 %v465, %v260
      %v475 = vmul.bf16 %v468, %v280
      %v476 = vmul.bf16 %v465, %v284
      %v477 = vmul.bf16 %v471, %v282
      %v478 = vmul.bf16 %v468, %v302
      %v479 = vmul.bf16 %v465, %v306
      %v480 = vmul.bf16 %v471, %v304
      %v481 = vmul.bf16 %v468, %v324
      %v482 = vmul.bf16 %v465, %v328
      %v483 = vmul.bf16 %v471, %v326
      %v484 = vmul.bf16 %v468, %v346
      %v485 = vmul.bf16 %v465, %v349
      %v486 = vmul.bf16 %v471, %v348
      %v487 = vmul.bf16 %v468, %v367
      %v488 = vmul.bf16 %v465, %v371
      %v489 = vmul.bf16 %v471, %v369
      %v490 = vmul.bf16 %v468, %v389
      %v491 = vmul.bf16 %v465, %v393
      %v492 = vmul.bf16 %v471, %v391
      %v493 = vmul.bf16 %v468, %v411
      %v494 = vmul.bf16 %v465, %v415
      %v495 = vmul.bf16 %v471, %v413
      %v496 = vmul.bf16 %v468, %v444
      %v497 = vmul.bf16 %v465, %v448
      %v498 = vmul.bf16 %v471, %v446
      %v502 = vrot.slane %v288, 4
      %v503 = vrot.slane %v289, 4
      %v504 = vrot.slane %v290, 4
      %505 = vrot.lane.b32.xlu0 %v502, 127
      %v506 = vpop.permute.xlu0 %505
      %507 = vrot.lane.b32.xlu0 %v503, 127
      %v508 = vpop.permute.xlu0 %507
      %509 = vrot.lane.b32.xlu0 %v504, 127
      %v510 = vpop.permute.xlu0 %509
      %vm511 = vcmask 1039360
      %v512 = vsel %vm511, %v506, %v508
      %v513 = vsel %vm511, %v508, %v510
      %517 = vrot.lane.b32.xlu0 %v310, 126
      %v518 = vpop.permute.xlu0 %517
      %519 = vrot.lane.b32.xlu0 %v311, 126
      %v520 = vpop.permute.xlu0 %519
      %521 = vrot.lane.b32.xlu0 %v312, 126
      %v522 = vpop.permute.xlu0 %521
      %vm523 = vcmask 1031168
      %v524 = vsel %vm523, %v518, %v520
      %v525 = vsel %vm523, %v520, %v522
      %v529 = vrot.slane %v332, 4
      %v530 = vrot.slane %v333, 4
      %v531 = vrot.slane %v334, 4
      %532 = vrot.lane.b32.xlu0 %v529, 112
      %v533 = vpop.permute.xlu0 %532
      %534 = vrot.lane.b32.xlu0 %v530, 112
      %v535 = vpop.permute.xlu0 %534
      %536 = vrot.lane.b32.xlu0 %v531, 112
      %v537 = vpop.permute.xlu0 %536
      %vm538 = vcmask 916480
      %v539 = vsel %vm538, %v533, %v535
      %v540 = vsel %vm538, %v535, %v537
      %544 = vrot.lane.b32.xlu0 %v353, 111
      %v545 = vpop.permute.xlu0 %544
      %546 = vrot.lane.b32.xlu0 %v354, 111
      %v547 = vpop.permute.xlu0 %546
      %548 = vrot.lane.b32.xlu0 %v355, 111
      %v549 = vpop.permute.xlu0 %548
      %vm550 = vcmask 908288
      %v551 = vsel %vm550, %v545, %v547
      %v552 = vsel %vm550, %v547, %v549
      %v556 = vrot.slane %v375, 4
      %v557 = vrot.slane %v376, 4
      %v558 = vrot.slane %v377, 4
      %559 = vrot.lane.b32.xlu0 %v556, 110
      %v560 = vpop.permute.xlu0 %559
      %561 = vrot.lane.b32.xlu0 %v557, 110
      %v562 = vpop.permute.xlu0 %561
      %563 = vrot.lane.b32.xlu0 %v558, 110
      %v564 = vpop.permute.xlu0 %563
      %vm565 = vcmask 900096
      %v566 = vsel %vm565, %v560, %v562
      %v567 = vsel %vm565, %v562, %v564
      %571 = vrot.lane.b32.xlu0 %v397, 96
      %v572 = vpop.permute.xlu0 %571
      %573 = vrot.lane.b32.xlu0 %v398, 96
      %v574 = vpop.permute.xlu0 %573
      %575 = vrot.lane.b32.xlu0 %v399, 96
      %v576 = vpop.permute.xlu0 %575
      %vm577 = vcmask 785408
      %v578 = vsel %vm577, %v572, %v574
      %v579 = vsel %vm577, %v574, %v576
      %v583 = vrot.slane %v419, 4
      %v584 = vrot.slane %v420, 4
      %v585 = vrot.slane %v421, 4
      %586 = vrot.lane.b32.xlu0 %v583, 95
      %v587 = vpop.permute.xlu0 %586
      %588 = vrot.lane.b32.xlu0 %v584, 95
      %v589 = vpop.permute.xlu0 %588
      %590 = vrot.lane.b32.xlu0 %v585, 95
      %v591 = vpop.permute.xlu0 %590
      %vm592 = vcmask 777216
      %v593 = vsel %vm592, %v587, %v589
      %v594 = vsel %vm592, %v589, %v591
      %598 = vrot.lane.b32.xlu0 %v452, 94
      %v599 = vpop.permute.xlu0 %598
      %600 = vrot.lane.b32.xlu0 %v453, 94
      %v601 = vpop.permute.xlu0 %600
      %602 = vrot.lane.b32.xlu0 %v454, 94
      %v603 = vpop.permute.xlu0 %602
      %vm604 = vcmask 769024
      %v605 = vsel %vm604, %v599, %v601
      %v606 = vsel %vm604, %v601, %v603
      %v609 = vrot.slane %v473, 4
      %v610 = vrot.slane %v474, 4
      %614 = vrot.lane.b32.xlu0 %v475, 127
      %v615 = vpop.permute.xlu0 %614
      %616 = vrot.lane.b32.xlu0 %v476, 127
      %v617 = vpop.permute.xlu0 %616
      %618 = vrot.lane.b32.xlu0 %v477, 127
      %v619 = vpop.permute.xlu0 %618
      %v620 = vsel %vm511, %v615, %v617
      %v621 = vsel %vm511, %v617, %v619
      %v625 = vrot.slane %v478, 4
      %v626 = vrot.slane %v479, 4
      %v627 = vrot.slane %v480, 4
      %628 = vrot.lane.b32.xlu0 %v625, 126
      %v629 = vpop.permute.xlu0 %628
      %630 = vrot.lane.b32.xlu0 %v626, 126
      %v631 = vpop.permute.xlu0 %630
      %632 = vrot.lane.b32.xlu0 %v627, 126
      %v633 = vpop.permute.xlu0 %632
      %v634 = vsel %vm523, %v629, %v631
      %v635 = vsel %vm523, %v631, %v633
      %639 = vrot.lane.b32.xlu0 %v481, 112
      %v640 = vpop.permute.xlu0 %639
      %641 = vrot.lane.b32.xlu0 %v482, 112
      %v642 = vpop.permute.xlu0 %641
      %643 = vrot.lane.b32.xlu0 %v483, 112
      %v644 = vpop.permute.xlu0 %643
      %v645 = vsel %vm538, %v640, %v642
      %v646 = vsel %vm538, %v642, %v644
      %v650 = vrot.slane %v484, 4
      %v651 = vrot.slane %v485, 4
      %v652 = vrot.slane %v486, 4
      %653 = vrot.lane.b32.xlu0 %v650, 111
      %v654 = vpop.permute.xlu0 %653
      %655 = vrot.lane.b32.xlu0 %v651, 111
      %v656 = vpop.permute.xlu0 %655
      %657 = vrot.lane.b32.xlu0 %v652, 111
      %v658 = vpop.permute.xlu0 %657
      %v659 = vsel %vm550, %v654, %v656
      %v660 = vsel %vm550, %v656, %v658
      %664 = vrot.lane.b32.xlu0 %v487, 110
      %v665 = vpop.permute.xlu0 %664
      %666 = vrot.lane.b32.xlu0 %v488, 110
      %v667 = vpop.permute.xlu0 %666
      %668 = vrot.lane.b32.xlu0 %v489, 110
      %v669 = vpop.permute.xlu0 %668
      %v670 = vsel %vm565, %v665, %v667
      %v671 = vsel %vm565, %v667, %v669
      %v675 = vrot.slane %v490, 4
      %v676 = vrot.slane %v491, 4
      %v677 = vrot.slane %v492, 4
      %678 = vrot.lane.b32.xlu0 %v675, 96
      %v679 = vpop.permute.xlu0 %678
      %680 = vrot.lane.b32.xlu0 %v676, 96
      %v681 = vpop.permute.xlu0 %680
      %682 = vrot.lane.b32.xlu0 %v677, 96
      %v683 = vpop.permute.xlu0 %682
      %v684 = vsel %vm577, %v679, %v681
      %v685 = vsel %vm577, %v681, %v683
      %vm686 = vcmask 1043456
      %v689 = vsel %vm686, %v261, %v512
      %v693 = vsel %vm686, %v262, %v513
      %v697 = vsel %vm686, %v524, %v539
      %v701 = vsel %vm686, %v525, %v540
      %v705 = vsel %vm686, %v551, %v566
      %v709 = vsel %vm686, %v552, %v567
      %v713 = vsel %vm686, %v578, %v593
      %v717 = vsel %vm686, %v579, %v594
      %v721 = vsel %vm686, %v605, %v609
      %v725 = vsel %vm686, %v606, %v610
      %v729 = vsel %vm686, %v620, %v634
      %v733 = vsel %vm686, %v621, %v635
      %v737 = vsel %vm686, %v645, %v659
      %v741 = vsel %vm686, %v646, %v660
      %v745 = vsel %vm686, %v670, %v684
      %v749 = vsel %vm686, %v671, %v685
      %v754 = vrot.slane %v496, 4
      %v755 = vrot.slane %v497, 4
      %v756 = vrot.slane %v498, 4
      %757 = vrot.lane.b32.xlu0 %v754, 127
      %v758 = vpop.permute.xlu0 %757
      %759 = vrot.lane.b32.xlu0 %v755, 127
      %v760 = vpop.permute.xlu0 %759
      %761 = vrot.lane.b32.xlu0 %v756, 127
      %v762 = vpop.permute.xlu0 %761
      %v763 = vsel %vm511, %v758, %v760
      %v764 = vsel %vm511, %v760, %v762
      %v767 = vsel %vm686, %v493, %v763
      %v770 = vsel %vm686, %v494, %v764
      %v773 = vsel %vm686, %v495, %v762
      %777 = vrot.lane.b32.xlu0 %v767, 95
      %v778 = vpop.permute.xlu0 %777
      %779 = vrot.lane.b32.xlu0 %v770, 95
      %v780 = vpop.permute.xlu0 %779
      %781 = vrot.lane.b32.xlu0 %v773, 95
      %v782 = vpop.permute.xlu0 %781
      %v783 = vsel %vm592, %v778, %v780
      %v784 = vsel %vm592, %v780, %v782
      %v787 = vld [vmem:[%s3] sm:$0xff]
      %v789 = vunpack.c.l.b16 %v787
      %v790 = vunpack.c.h.b16 %v787
      %v791 = vpack.c.b16 %v789, %v789
      %v792 = vpack.c.b16 %v790, %v790
      %vm794 = vcmask 130048
      %v796 = vsel %vm794, %v792, 0
      %798 = vmatprep.subr.bf16.mxu0 %v693
      %799 = vmatpush1.bf16.msra.mxu0 %v689
      %800 = vmatprep.subr.bf16.mxu0 %v701
      %801 = vmatpush1.bf16.msra.mxu0 %v697
      %802 = vmatprep.subr.bf16.mxu0 %v709
      %803 = vmatpush1.bf16.msra.mxu0 %v705
      %804 = vmatprep.subr.bf16.mxu0 %v717
      %805 = vmatpush1.bf16.msra.mxu0 %v713
      %806 = vmatprep.subr.bf16.mxu0 %v725
      %807 = vmatpush1.bf16.msra.mxu0 %v721
      %808 = vmatprep.subr.bf16.mxu0 %v733
      %809 = vmatpush1.bf16.msra.mxu0 %v729
      %810 = vmatprep.subr.bf16.mxu0 %v741
      %811 = vmatpush1.bf16.msra.mxu0 %v737
      %812 = vmatprep.subr.bf16.mxu0 %v749
      %813 = vmatpush1.bf16.msra.mxu0 %v745
      %814 = vmatprep.subr.bf16.mxu0 %v784
      %815 = vmatpush1.bf16.msra.mxu0 %v783
      %816 = vmatprep.subr.bf16.mxu0 0
      %817 = vmatpush1.bf16.msra.mxu0 0
      %818 = vmatprep.subr.bf16.mxu0 0
      %819 = vmatpush1.bf16.msra.mxu0 0
      %820 = vmatprep.subr.bf16.mxu0 0
      %821 = vmatpush1.bf16.msra.mxu0 0
      %822 = vmatprep.subr.bf16.mxu0 0
      %823 = vmatpush1.bf16.msra.mxu0 0
      %824 = vmatprep.subr.bf16.mxu0 0
      %825 = vmatpush1.bf16.msra.mxu0 0
      %826 = vmatprep.subr.bf16.mxu0 0
      %827 = vmatpush1.bf16.msra.mxu0 0
      %828 = vmatprep.subr.bf16.mxu0 0
      %829 = vmatpush1.bf16.msra.mxu0 0
      %830 = vmatprep.mubr.bf16.mxu0 %v796
      %831 = vmatmul.mubr.bf16.gmra.mrb[0].mxu0 %v791
      %v832 = vpop.f32.mrb[0].mxu0
      %v833 = vadd.f32 0.0, %v832
      %v834 = vpop.f32.mrb[0].mxu0
      %v835 = vadd.f32 0.0, %v834
      %v836 = vpop.f32.mrb[0].mxu0
      %v837 = vpop.f32.mrb[0].mxu0
      %838 = vdwg.mxu0
      %v839 = vadd.f32 %v833, %v835
      %840 = vadd.xlane.f32.xlu0 %v839
      %v841 = vpop.xlane.xlu0 %840
      %v842 = vrcp.pop 256.0
      %v843 = vmul.f32 %v841, %v842
      %v844 = vsub.f32 %v833, %v843
      %v845 = vsub.f32 %v835, %v843
      %v846 = vmul.f32 %v844, %v844
      %v847 = vmul.f32 %v845, %v845
      %v848 = vadd.f32 %v846, %v847
      %849 = vadd.xlane.f32.xlu0 %v848
      %v850 = vpop.xlane.xlu0 %849
      %v851 = vmul.f32 %v850, %v842
      %v852 = vadd.f32 %v851, 1e-05
      %v853 = vrsqrt.pop %v852
      %v854 = vmul.f32 %v844, %v853
      %v855 = vmul.f32 %v845, %v853
      %vm856 = vcmp.ge.f32.partialorder %v854, 0.0
      %vm857 = vcmp.ge.f32.partialorder %v855, 0.0
      %v858 = vmul.f32 %v854, 0.01
      %v859 = vmul.f32 %v855, 0.01
      %v860 = vsel %vm856, %v854, %v858
      %v861 = vsel %vm857, %v855, %v859
      %v862 = vpack.c.bf16 %v860, %v860
      %v863 = vpack.c.bf16 %v861, %v861
      %v866 = vunpack.c.l.b16 %v862
      %v867 = vunpack.c.l.b16 %v863
      %v868 = vpack.c.b16 %v867, %v866
      %870 = vst [vmem:[%s217] sm:$0xff] %v868
      %p871 = scmp.lt.s32.totalorder %s15, 1
      %s872 = scalar_select %p871, %s15, 1
      %s873 = smul.addr %s872, 2
      %s874 = smul.addr %s873, 4
      %s875 = scalar_lea.vmem %s4, %s874
      // Predicated region
      $region37: #{_lambda_.23} parent=35 // pred_check
        %p876 = pneg %p127
      $region38: #{_lambda_.23} parent=35 // pred_check_branch
        %878 = sbr.rel (%p876) target = $region40
      $region39: #{_lambda_.23} parent=35 // pred_region
        _
      $region40: #{_lambda_.23} parent=35 // pred_fallthru
        _
    $region36: #{_lambda_.23} parent=5 // pred_fallthru
      _
    %p879 = scmp.le.s32.totalorder 2, %s10
    // Predicated region
    $region41: #{_lambda_.23} parent=5 // pred_check
      %p880 = pneg %p879
    $region42: #{_lambda_.23} parent=5 // pred_check_branch
      %882 = sbr.rel (%p880) target = $region44
    $region43: #{_lambda_.23} parent=5 // pred_region
      %s883 = ssub.s32 %s10, 2
      // Predicated region
      $region45: #{_lambda_.23} parent=43 // pred_check
        %p884 = pneg %p133
      $region46: #{_lambda_.23} parent=43 // pred_check_branch
        %886 = sbr.rel (%p884) target = $region48
      $region47: #{_lambda_.23} parent=43 // pred_region
        %p887 = scmp.lt.s32.totalorder %s16, 1
        %s888 = scalar_select %p887, %s16, 1
        %s889 = smul.addr %s888, 2
        %s890 = smul.addr %s889, 4
        %s891 = scalar_lea.vmem %s4, %s890
      $region48: #{_lambda_.23} parent=43 // pred_fallthru
        _
    $region44: #{_lambda_.23} parent=5 // pred_fallthru
      _
  $region6: #{_lambda_.23} parent=0 // loop_footer
    %s14 = sadd.s32 1, %s10
  $region7: #{_lambda_.23} parent=0 // loop_footer_branch
    %9 = sbr.rel target = $region3
  $region8: #{_lambda_.23} parent=0 // loop_exit
    _

</llo_original>
